<compile_context>
chip_gen: v7x
topology: tpu7x:2x2x1
jax: 0.10.0
libtpu: 0.0.40
codegen_flags: <defaults>
</compile_context>

<pallas_src>
import jax
import jax.numpy as jnp
from jax.experimental import pallas as pl
from jax.experimental.pallas import tpu as pltpu


# ----------------------------- Pallas kernel -------------------------------
def bilstm_kernel(x_ref, wih_ref, whhf_ref, whhr_ref, b_ref,
                  outf_ref, outb_ref, gxf_scr, gxb_scr):
    """Fused bidirectional LSTM over the full (padded) sequence.

    x_ref:    (T*Bp, Ep)   bf16 embedded inputs (time-major, batch flattened in)
    wih_ref:  (Ep, 8*Hp)   bf16 [W_ih_fwd^T | W_ih_bwd^T], gate cols (i,f,o,g)
    whhf_ref: (Hp, 4*Hp)   bf16 W_hh_fwd^T, gate cols (i,f,o,g)
    whhr_ref: (Hp, 4*Hp)   bf16 W_hh_bwd^T
    b_ref:    (1, 8*Hp)    f32  [b_fwd | b_bwd] (b_ih + b_hh)
    outf_ref: (T, Bp, Hp)  f32  forward hidden states
    outb_ref: (T, Bp, Hp)  f32  backward hidden states (natural time order)
    gxf_scr:  (T*Bp, 4*Hp) f32  precomputed forward input gates
    gxb_scr:  (T*Bp, 4*Hp) f32  precomputed backward input gates
    """
    T, Bp, Hp = outf_ref.shape
    G = 4 * Hp

    # ---- Hoisted input projection: one bf16 MXU matmul (f32 accumulate) for
    # both directions and all timesteps, off the serial critical path.
    gx = jnp.dot(x_ref[...], wih_ref[...], preferred_element_type=jnp.float32)
    gx = gx + b_ref[...]                       # (T*Bp, 8*Hp)
    gxf_scr[...] = gx[:, :G]
    gxb_scr[...] = gx[:, G:]

    whh_f = whhf_ref[...]                      # hoisted out of the loop
    whh_r = whhr_ref[...]

    def cell(gates, c):
        s = jax.nn.sigmoid(gates[:, :3 * Hp])  # (i, f, o) in one EUP pass
        i_g = s[:, 0 * Hp:1 * Hp]
        f_g = s[:, 1 * Hp:2 * Hp]
        o_g = s[:, 2 * Hp:3 * Hp]
        g_g = jnp.tanh(gates[:, 3 * Hp:])
        c_new = f_g * c + i_g * g_g
        h_new = o_g * jnp.tanh(c_new)
        return h_new, c_new

    def step(k, carry):
        hf, cf, hb, cb = carry
        tf = k                                 # forward walks 0..T-1
        tb = T - 1 - k                         # backward walks T-1..0
        rowf = pl.multiple_of(tf * Bp, Bp)
        rowb = pl.multiple_of(tb * Bp, Bp)
        g_f = gxf_scr[pl.ds(rowf, Bp), :] + jnp.dot(
            hf.astype(jnp.bfloat16), whh_f, preferred_element_type=jnp.float32)
        g_b = gxb_scr[pl.ds(rowb, Bp), :] + jnp.dot(
            hb.astype(jnp.bfloat16), whh_r, preferred_element_type=jnp.float32)
        hf, cf = cell(g_f, cf)
        hb, cb = cell(g_b, cb)
        outf_ref[tf] = hf                      # dense (Bp, Hp) vreg-tile store
        outb_ref[tb] = hb
        return hf, cf, hb, cb

    z = jnp.zeros((Bp, Hp), jnp.float32)
    jax.lax.fori_loop(0, T, step, (z, z, z, z), unroll=min(T, 8))


def bidirectional_lstm(x2d, wih_big, whh_f, whh_r, bias_big, T, Bp):
    """x2d: (T*Bp, Ep) bf16.  Returns (out_fwd, out_bwd), each (T, Bp, Hp) f32."""
    Hp = whh_f.shape[0]
    G = 4 * Hp

    def nbytes(a):
        return a.size * a.dtype.itemsize

    resident = (nbytes(x2d) + nbytes(wih_big) + nbytes(whh_f) + nbytes(whh_r)
                + nbytes(bias_big)
                + 2 * T * Bp * G * 4           # gate scratch (f32)
                + 2 * T * Bp * Hp * 4)         # outputs (f32)
    vmem_limit = int(min(max(2 * resident + (8 << 20), 32 << 20), 100 << 20))

    # TODO(synk): for long sequences add an "arbitrary" time-chunk grid axis
    # (persistent h/c scratch, pl.when(chunk == 0) init, per-chunk projection)
    # so the gate slab + x stay within v7x's 64 MiB VMEM, and shard work across
    # the two v7x TensorCores (core_map / CORE_PARALLEL).  Demo shapes fit
    # resident in a single invocation.
    return pl.pallas_call(
        bilstm_kernel,
        out_shape=(jax.ShapeDtypeStruct((T, Bp, Hp), jnp.float32),
                   jax.ShapeDtypeStruct((T, Bp, Hp), jnp.float32)),
        scratch_shapes=[pltpu.VMEM((T * Bp, G), jnp.float32),
                        pltpu.VMEM((T * Bp, G), jnp.float32)],
        compiler_params=pltpu.CompilerParams(vmem_limit_bytes=vmem_limit),
    )(x2d, wih_big, whh_f, whh_r, bias_big)


# ----------------------------- weight preparation ---------------------------
def _prep_direction(w_ih, w_hh, b_ih, b_hh, Ep, Hp):
    """Torch gate rows (i,f,g,o) -> transposed weights with gate cols (i,f,o,g),
    zero-padded to lane-dense (Kp, 4*Hp) blocks.  Zero padding is exact."""
    Hr = w_hh.shape[1]

    def pad_wt(w, Kp):                         # w: (4Hr, K) -> (Kp, 4Hp) f32
        wi, wf, wg, wo = jnp.split(jnp.asarray(w, jnp.float32), 4, axis=0)
        cols = []
        for blk in (wi, wf, wo, wg):           # reorder to (i, f, o, g)
            K = blk.shape[1]
            cols.append(jnp.zeros((Kp, Hp), jnp.float32).at[:K, :Hr].set(blk.T))
        return jnp.concatenate(cols, axis=1)

    def pad_bias(b):                           # (4Hr,) -> (4Hp,) f32
        bi, bf, bg, bo = jnp.split(jnp.asarray(b, jnp.float32), 4)
        parts = []
        for blk in (bi, bf, bo, bg):
            parts.append(jnp.zeros((Hp,), jnp.float32).at[:Hr].set(blk))
        return jnp.concatenate(parts)

    return pad_wt(w_ih, Ep), pad_wt(w_hh, Hp), pad_bias(b_ih + b_hh)


# ----------------------------- Module wrapper -------------------------------
def init_params(key, ntoken, n_embedding, n_hidden):
    assert n_hidden % 2 == 0
    H = n_hidden // 2
    k = 1.0 / (H ** 0.5)
    keys = jax.random.split(key, 9)

    def u(kk, shape):
        return jax.random.uniform(kk, shape, jnp.float32, -k, k)

    return {
        # nn.Embedding default init: N(0, 1)
        "embedding": jax.random.normal(keys[0], (ntoken, n_embedding),
                                       jnp.float32),
        # nn.LSTM default init: U(-1/sqrt(H), 1/sqrt(H)); torch row order i,f,g,o
        "w_ih_f": u(keys[1], (4 * H, n_embedding)),
        "w_hh_f": u(keys[2], (4 * H, H)),
        "b_ih_f": u(keys[3], (4 * H,)),
        "b_hh_f": u(keys[4], (4 * H,)),
        "w_ih_r": u(keys[5], (4 * H, n_embedding)),
        "w_hh_r": u(keys[6], (4 * H, H)),
        "b_ih_r": u(keys[7], (4 * H,)),
        "b_hh_r": u(keys[8], (4 * H,)),
    }


def embedding_encoder_forward(params, tokens):
    T, B = tokens.shape
    E = params["embedding"].shape[1]
    Hr = params["w_hh_f"].shape[1]             # real per-direction hidden

    # Lane/sublane-dense padded sizes (exact zero padding).
    Bp = max(8, ((B + 7) // 8) * 8)
    Hp = ((Hr + 127) // 128) * 128
    Ep = ((E + 127) // 128) * 128

    # Embedding lookup (row gather) stays as plain-JAX glue.
    # TODO(synk): fuse the gather into the kernel via scalar-prefetched token
    # ids + manual DMA from an HBM-resident embedding table.
    x_emb = jnp.take(params["embedding"], tokens, axis=0)      # (T, B, E) f32
    x_emb = jnp.pad(x_emb, ((0, 0), (0, Bp - B), (0, Ep - E)))
    x2d = x_emb.reshape(T * Bp, Ep).astype(jnp.bfloat16)       # bf16 MXU feed

    wihf_t, whhf_t, b_f = _prep_direction(params["w_ih_f"], params["w_hh_f"],
                                          params["b_ih_f"], params["b_hh_f"],
                                          Ep, Hp)
    wihr_t, whhr_t, b_r = _prep_direction(params["w_ih_r"], params["w_hh_r"],
                                          params["b_ih_r"], params["b_hh_r"],
                                          Ep, Hp)

    wih_big = jnp.concatenate([wihf_t, wihr_t], axis=1).astype(jnp.bfloat16)
    bias_big = jnp.concatenate([b_f, b_r]).reshape(1, 8 * Hp)  # f32
    whh_f = whhf_t.astype(jnp.bfloat16)
    whh_r = whhr_t.astype(jnp.bfloat16)

    out_f, out_b = bidirectional_lstm(x2d, wih_big, whh_f, whh_r, bias_big,
                                      T, Bp)
    # (T, Bp, Hp) x2 -> (T, B, 2*Hr): [fwd_h, bwd_h], matching torch convention.
    # (When Hr % 128 == 0 this slice/concat becomes the identity layout and the
    #  kernel could write a single (T, Bp, 2*Hr) output directly.)
    return jnp.concatenate([out_f[:, :B, :Hr], out_b[:, :B, :Hr]], axis=-1)


# ----------------------------- Pure-JAX reference ---------------------------
def _lstm_ref(x_emb, w_ih, w_hh, b_ih, b_hh):
    H = w_hh.shape[1]

    def step(carry, x_t):
        h, c = carry
        gates = x_t @ w_ih.T + b_ih + h @ w_hh.T + b_hh
        i = jax.nn.sigmoid(gates[:, :H])
        f = jax.nn.sigmoid(gates[:, H:2 * H])
        g = jnp.tanh(gates[:, 2 * H:3 * H])
        o = jax.nn.sigmoid(gates[:, 3 * H:])
        c = f * c + i * g
        h = o * jnp.tanh(c)
        return (h, c), h

    B = x_emb.shape[1]
    init = (jnp.zeros((B, H), jnp.float32), jnp.zeros((B, H), jnp.float32))
    _, hs = jax.lax.scan(step, init, x_emb)
    return hs


def _forward_ref(params, tokens):
    x_emb = jnp.take(params["embedding"], tokens, axis=0)
    out_f = _lstm_ref(x_emb, params["w_ih_f"], params["w_hh_f"],
                      params["b_ih_f"], params["b_hh_f"])
    out_r = _lstm_ref(x_emb[::-1], params["w_ih_r"], params["w_hh_r"],
                      params["b_ih_r"], params["b_hh_r"])[::-1]
    return jnp.concatenate([out_f, out_r], axis=-1)


# --------------------------------- main --------------------------------------
if __name__ == "__main__":
    NTOKEN, N_EMBEDDING, N_HIDDEN = 50, 32, 32   # per-direction hidden = 16
    T, B = 8, 4

    root = jax.random.PRNGKey(0)
    k_params, k_tokens = jax.random.split(root)
    params = init_params(k_params, NTOKEN, N_EMBEDDING, N_HIDDEN)
    tokens = jax.random.randint(k_tokens, (T, B), 0, NTOKEN, dtype=jnp.int32)

    out = jax.block_until_ready(embedding_encoder_forward(params, tokens))
    assert out.shape == (T, B, N_HIDDEN), out.shape
    assert out.dtype == jnp.float32

    ref = jax.block_until_ready(_forward_ref(params, tokens))
    # Tolerance loosened vs. the pure-f32 version because the kernel feeds the
    # MXU bf16 inputs (f32 accumulation); structural errors would be O(0.1+).
    assert jnp.allclose(out, ref, atol=3e-2, rtol=3e-2), \
        float(jnp.max(jnp.abs(out - ref)))

    print("KERNEL_OK")
</pallas_src>

<mosaic_0001>
module attributes {stable_mosaic.version = 11 : i64} {
  func.func @bilstm_kernel(%arg0: memref<64x128xbf16, #tpu.memory_space<vmem>>, %arg1: memref<128x1024xbf16, #tpu.memory_space<vmem>>, %arg2: memref<128x512xbf16, #tpu.memory_space<vmem>>, %arg3: memref<128x512xbf16, #tpu.memory_space<vmem>>, %arg4: memref<1x1024xf32, #tpu.memory_space<vmem>>, %arg5: memref<8x8x128xf32, #tpu.memory_space<vmem>>, %arg6: memref<8x8x128xf32, #tpu.memory_space<vmem>>, %arg7: memref<64x512xf32, #tpu.memory_space<vmem>>, %arg8: memref<64x512xf32, #tpu.memory_space<vmem>>) attributes {dimension_semantics = [], scalar_prefetch = 0 : i64, scratch_operands = 2 : i64, tpu.core_type = #tpu.core_type<tc>} {
    %c0 = arith.constant 0 : index
    %c0_0 = arith.constant 0 : index
    %0 = vector.load %arg0[%c0, %c0_0] : memref<64x128xbf16, #tpu.memory_space<vmem>>, vector<64x128xbf16>
    %c0_1 = arith.constant 0 : index
    %c0_2 = arith.constant 0 : index
    %1 = vector.load %arg1[%c0_1, %c0_2] : memref<128x1024xbf16, #tpu.memory_space<vmem>>, vector<128x1024xbf16>
    %cst = arith.constant dense<0.000000e+00> : vector<64x1024xf32>
    %2 = tpu.matmul %0, %1, %cst {dimension_numbers = #tpu.dot_dimension_numbers<[1], [0], [0], [1], [0, 0, 1, 1], [], []>} : vector<64x128xbf16>, vector<128x1024xbf16>, vector<64x1024xf32> -> vector<64x1024xf32>
    %c0_3 = arith.constant 0 : index
    %c0_4 = arith.constant 0 : index
    %3 = vector.load %arg4[%c0_3, %c0_4] : memref<1x1024xf32, #tpu.memory_space<vmem>>, vector<1x1024xf32>
    %4 = vector.broadcast %3 : vector<1x1024xf32> to vector<64x1024xf32>
    %5 = arith.addf %2, %4 : vector<64x1024xf32>
    %6 = vector.extract_strided_slice %5 {offsets = [0, 0], sizes = [64, 512], strides = [1, 1]} : vector<64x1024xf32> to vector<64x512xf32>
    %c0_5 = arith.constant 0 : index
    %c0_6 = arith.constant 0 : index
    %7 = vector.load %arg7[%c0_5, %c0_6] : memref<64x512xf32, #tpu.memory_space<vmem>>, vector<64x512xf32>
    tpu.vector_store %arg7[%c0_5, %c0_6], %6 {strides = array<i32>} : memref<64x512xf32, #tpu.memory_space<vmem>>, vector<64x512xf32>,
    %8 = vector.extract_strided_slice %5 {offsets = [0, 512], sizes = [64, 512], strides = [1, 1]} : vector<64x1024xf32> to vector<64x512xf32>
    %c0_7 = arith.constant 0 : index
    %c0_8 = arith.constant 0 : index
    %9 = vector.load %arg8[%c0_7, %c0_8] : memref<64x512xf32, #tpu.memory_space<vmem>>, vector<64x512xf32>
    tpu.vector_store %arg8[%c0_7, %c0_8], %8 {strides = array<i32>} : memref<64x512xf32, #tpu.memory_space<vmem>>, vector<64x512xf32>,
    %c0_9 = arith.constant 0 : index
    %c0_10 = arith.constant 0 : index
    %10 = vector.load %arg2[%c0_9, %c0_10] : memref<128x512xbf16, #tpu.memory_space<vmem>>, vector<128x512xbf16>
    %c0_11 = arith.constant 0 : index
    %c0_12 = arith.constant 0 : index
    %11 = vector.load %arg3[%c0_11, %c0_12] : memref<128x512xbf16, #tpu.memory_space<vmem>>, vector<128x512xbf16>
    %cst_13 = arith.constant 0.000000e+00 : f32
    %12 = vector.broadcast %cst_13 : f32 to vector<8x128xf32>
    %c0_i32 = arith.constant 0 : i32
    %c7_i32 = arith.constant 7 : i32
    %13 = arith.subi %c7_i32, %c0_i32 : i32
    %c8_i32 = arith.constant 8 : i32
    %14 = arith.muli %c0_i32, %c8_i32 : i32
    %15 = tpu.assume_multiple %14, 8 : i32
    %c8_i32_14 = arith.constant 8 : i32
    %16 = arith.muli %13, %c8_i32_14 : i32
    %17 = tpu.assume_multiple %16, 8 : i32
    %18 = arith.index_cast %15 : i32 to index
    %c0_15 = arith.constant 0 : index
    %19 = vector.load %arg7[%18, %c0_15] : memref<64x512xf32, #tpu.memory_space<vmem>>, vector<8x512xf32>
    %20 = arith.truncf %12 : vector<8x128xf32> to vector<8x128xbf16>
    %cst_16 = arith.constant dense<0.000000e+00> : vector<8x512xf32>
    %21 = tpu.matmul %20, %10, %cst_16 {dimension_numbers = #tpu.dot_dimension_numbers<[1], [0], [0], [1], [0, 0, 1, 1], [], []>} : vector<8x128xbf16>, vector<128x512xbf16>, vector<8x512xf32> -> vector<8x512xf32>
    %22 = arith.addf %19, %21 : vector<8x512xf32>
    %23 = arith.index_cast %17 : i32 to index
    %c0_17 = arith.constant 0 : index
    %24 = vector.load %arg8[%23, %c0_17] : memref<64x512xf32, #tpu.memory_space<vmem>>, vector<8x512xf32>
    %25 = arith.truncf %12 : vector<8x128xf32> to vector<8x128xbf16>
    %cst_18 = arith.constant dense<0.000000e+00> : vector<8x512xf32>
    %26 = tpu.matmul %25, %11, %cst_18 {dimension_numbers = #tpu.dot_dimension_numbers<[1], [0], [0], [1], [0, 0, 1, 1], [], []>} : vector<8x128xbf16>, vector<128x512xbf16>, vector<8x512xf32> -> vector<8x512xf32>
    %27 = arith.addf %24, %26 : vector<8x512xf32>
    %28 = vector.extract_strided_slice %22 {offsets = [0, 0], sizes = [8, 384], strides = [1, 1]} : vector<8x512xf32> to vector<8x384xf32>
    %29 = arith.negf %28 : vector<8x384xf32>
    %30 = math.exp %29 : vector<8x384xf32>
    %cst_19 = arith.constant 1.000000e+00 : f32
    %31 = vector.broadcast %cst_19 : f32 to vector<8x384xf32>
    %32 = arith.addf %31, %30 : vector<8x384xf32>
    %33 = arith.divf %31, %32 : vector<8x384xf32>
    %34 = vector.extract_strided_slice %33 {offsets = [0, 0], sizes = [8, 128], strides = [1, 1]} : vector<8x384xf32> to vector<8x128xf32>
    %35 = vector.extract_strided_slice %33 {offsets = [0, 128], sizes = [8, 128], strides = [1, 1]} : vector<8x384xf32> to vector<8x128xf32>
    %36 = vector.extract_strided_slice %33 {offsets = [0, 256], sizes = [8, 128], strides = [1, 1]} : vector<8x384xf32> to vector<8x128xf32>
    %37 = vector.extract_strided_slice %22 {offsets = [0, 384], sizes = [8, 128], strides = [1, 1]} : vector<8x512xf32> to vector<8x128xf32>
    %38 = math.tanh %37 : vector<8x128xf32>
    %39 = arith.mulf %35, %12 : vector<8x128xf32>
    %40 = arith.mulf %34, %38 : vector<8x128xf32>
    %41 = arith.addf %39, %40 : vector<8x128xf32>
    %42 = math.tanh %41 : vector<8x128xf32>
    %43 = arith.mulf %36, %42 : vector<8x128xf32>
    %44 = vector.extract_strided_slice %27 {offsets = [0, 0], sizes = [8, 384], strides = [1, 1]} : vector<8x512xf32> to vector<8x384xf32>
    %45 = arith.negf %44 : vector<8x384xf32>
    %46 = math.exp %45 : vector<8x384xf32>
    %cst_20 = arith.constant 1.000000e+00 : f32
    %47 = vector.broadcast %cst_20 : f32 to vector<8x384xf32>
    %48 = arith.addf %47, %46 : vector<8x384xf32>
    %49 = arith.divf %47, %48 : vector<8x384xf32>
    %50 = vector.extract_strided_slice %49 {offsets = [0, 0], sizes = [8, 128], strides = [1, 1]} : vector<8x384xf32> to vector<8x128xf32>
    %51 = vector.extract_strided_slice %49 {offsets = [0, 128], sizes = [8, 128], strides = [1, 1]} : vector<8x384xf32> to vector<8x128xf32>
    %52 = vector.extract_strided_slice %49 {offsets = [0, 256], sizes = [8, 128], strides = [1, 1]} : vector<8x384xf32> to vector<8x128xf32>
    %53 = vector.extract_strided_slice %27 {offsets = [0, 384], sizes = [8, 128], strides = [1, 1]} : vector<8x512xf32> to vector<8x128xf32>
    %54 = math.tanh %53 : vector<8x128xf32>
    %55 = arith.mulf %51, %12 : vector<8x128xf32>
    %56 = arith.mulf %50, %54 : vector<8x128xf32>
    %57 = arith.addf %55, %56 : vector<8x128xf32>
    %58 = math.tanh %57 : vector<8x128xf32>
    %59 = arith.mulf %52, %58 : vector<8x128xf32>
    %60 = arith.index_cast %c0_i32 : i32 to index
    %c0_21 = arith.constant 0 : index
    %c0_22 = arith.constant 0 : index
    %61 = vector.load %arg5[%60, %c0_21, %c0_22] : memref<8x8x128xf32, #tpu.memory_space<vmem>>, vector<1x8x128xf32>
    %62 = vector.shape_cast %61 : vector<1x8x128xf32> to vector<8x128xf32>
    %63 = vector.shape_cast %43 : vector<8x128xf32> to vector<1x8x128xf32>
    tpu.vector_store %arg5[%60, %c0_21, %c0_22], %63 {strides = array<i32>} : memref<8x8x128xf32, #tpu.memory_space<vmem>>, vector<1x8x128xf32>,
    %64 = arith.index_cast %13 : i32 to index
    %c0_23 = arith.constant 0 : index
    %c0_24 = arith.constant 0 : index
    %65 = vector.load %arg6[%64, %c0_23, %c0_24] : memref<8x8x128xf32, #tpu.memory_space<vmem>>, vector<1x8x128xf32>
    %66 = vector.shape_cast %65 : vector<1x8x128xf32> to vector<8x128xf32>
    %67 = vector.shape_cast %59 : vector<8x128xf32> to vector<1x8x128xf32>
    tpu.vector_store %arg6[%64, %c0_23, %c0_24], %67 {strides = array<i32>} : memref<8x8x128xf32, #tpu.memory_space<vmem>>, vector<1x8x128xf32>,
    %c1_i32 = arith.constant 1 : i32
    %c7_i32_25 = arith.constant 7 : i32
    %68 = arith.subi %c7_i32_25, %c1_i32 : i32
    %c8_i32_26 = arith.constant 8 : i32
    %69 = arith.muli %c1_i32, %c8_i32_26 : i32
    %70 = tpu.assume_multiple %69, 8 : i32
    %c8_i32_27 = arith.constant 8 : i32
    %71 = arith.muli %68, %c8_i32_27 : i32
    %72 = tpu.assume_multiple %71, 8 : i32
    %73 = arith.index_cast %70 : i32 to index
    %c0_28 = arith.constant 0 : index
    %74 = vector.load %arg7[%73, %c0_28] : memref<64x512xf32, #tpu.memory_space<vmem>>, vector<8x512xf32>
    %75 = arith.truncf %43 : vector<8x128xf32> to vector<8x128xbf16>
    %cst_29 = arith.constant dense<0.000000e+00> : vector<8x512xf32>
    %76 = tpu.matmul %75, %10, %cst_29 {dimension_numbers = #tpu.dot_dimension_numbers<[1], [0], [0], [1], [0, 0, 1, 1], [], []>} : vector<8x128xbf16>, vector<128x512xbf16>, vector<8x512xf32> -> vector<8x512xf32>
    %77 = arith.addf %74, %76 : vector<8x512xf32>
    %78 = arith.index_cast %72 : i32 to index
    %c0_30 = arith.constant 0 : index
    %79 = vector.load %arg8[%78, %c0_30] : memref<64x512xf32, #tpu.memory_space<vmem>>, vector<8x512xf32>
    %80 = arith.truncf %59 : vector<8x128xf32> to vector<8x128xbf16>
    %cst_31 = arith.constant dense<0.000000e+00> : vector<8x512xf32>
    %81 = tpu.matmul %80, %11, %cst_31 {dimension_numbers = #tpu.dot_dimension_numbers<[1], [0], [0], [1], [0, 0, 1, 1], [], []>} : vector<8x128xbf16>, vector<128x512xbf16>, vector<8x512xf32> -> vector<8x512xf32>
    %82 = arith.addf %79, %81 : vector<8x512xf32>
    %83 = vector.extract_strided_slice %77 {offsets = [0, 0], sizes = [8, 384], strides = [1, 1]} : vector<8x512xf32> to vector<8x384xf32>
    %84 = arith.negf %83 : vector<8x384xf32>
    %85 = math.exp %84 : vector<8x384xf32>
    %cst_32 = arith.constant 1.000000e+00 : f32
    %86 = vector.broadcast %cst_32 : f32 to vector<8x384xf32>
    %87 = arith.addf %86, %85 : vector<8x384xf32>
    %88 = arith.divf %86, %87 : vector<8x384xf32>
    %89 = vector.extract_strided_slice %88 {offsets = [0, 0], sizes = [8, 128], strides = [1, 1]} : vector<8x384xf32> to vector<8x128xf32>
    %90 = vector.extract_strided_slice %88 {offsets = [0, 128], sizes = [8, 128], strides = [1, 1]} : vector<8x384xf32> to vector<8x128xf32>
    %91 = vector.extract_strided_slice %88 {offsets = [0, 256], sizes = [8, 128], strides = [1, 1]} : vector<8x384xf32> to vector<8x128xf32>
    %92 = vector.extract_strided_slice %77 {offsets = [0, 384], sizes = [8, 128], strides = [1, 1]} : vector<8x512xf32> to vector<8x128xf32>
    %93 = math.tanh %92 : vector<8x128xf32>
    %94 = arith.mulf %90, %41 : vector<8x128xf32>
    %95 = arith.mulf %89, %93 : vector<8x128xf32>
    %96 = arith.addf %94, %95 : vector<8x128xf32>
    %97 = math.tanh %96 : vector<8x128xf32>
    %98 = arith.mulf %91, %97 : vector<8x128xf32>
    %99 = vector.extract_strided_slice %82 {offsets = [0, 0], sizes = [8, 384], strides = [1, 1]} : vector<8x512xf32> to vector<8x384xf32>
    %100 = arith.negf %99 : vector<8x384xf32>
    %101 = math.exp %100 : vector<8x384xf32>
    %cst_33 = arith.constant 1.000000e+00 : f32
    %102 = vector.broadcast %cst_33 : f32 to vector<8x384xf32>
    %103 = arith.addf %102, %101 : vector<8x384xf32>
    %104 = arith.divf %102, %103 : vector<8x384xf32>
    %105 = vector.extract_strided_slice %104 {offsets = [0, 0], sizes = [8, 128], strides = [1, 1]} : vector<8x384xf32> to vector<8x128xf32>
    %106 = vector.extract_strided_slice %104 {offsets = [0, 128], sizes = [8, 128], strides = [1, 1]} : vector<8x384xf32> to vector<8x128xf32>
    %107 = vector.extract_strided_slice %104 {offsets = [0, 256], sizes = [8, 128], strides = [1, 1]} : vector<8x384xf32> to vector<8x128xf32>
    %108 = vector.extract_strided_slice %82 {offsets = [0, 384], sizes = [8, 128], strides = [1, 1]} : vector<8x512xf32> to vector<8x128xf32>
    %109 = math.tanh %108 : vector<8x128xf32>
    %110 = arith.mulf %106, %57 : vector<8x128xf32>
    %111 = arith.mulf %105, %109 : vector<8x128xf32>
    %112 = arith.addf %110, %111 : vector<8x128xf32>
    %113 = math.tanh %112 : vector<8x128xf32>
    %114 = arith.mulf %107, %113 : vector<8x128xf32>
    %115 = arith.index_cast %c1_i32 : i32 to index
    %c0_34 = arith.constant 0 : index
    %c0_35 = arith.constant 0 : index
    %116 = vector.load %arg5[%115, %c0_34, %c0_35] : memref<8x8x128xf32, #tpu.memory_space<vmem>>, vector<1x8x128xf32>
    %117 = vector.shape_cast %116 : vector<1x8x128xf32> to vector<8x128xf32>
    %118 = vector.shape_cast %98 : vector<8x128xf32> to vector<1x8x128xf32>
    tpu.vector_store %arg5[%115, %c0_34, %c0_35], %118 {strides = array<i32>} : memref<8x8x128xf32, #tpu.memory_space<vmem>>, vector<1x8x128xf32>,
    %119 = arith.index_cast %68 : i32 to index
    %c0_36 = arith.constant 0 : index
    %c0_37 = arith.constant 0 : index
    %120 = vector.load %arg6[%119, %c0_36, %c0_37] : memref<8x8x128xf32, #tpu.memory_space<vmem>>, vector<1x8x128xf32>
    %121 = vector.shape_cast %120 : vector<1x8x128xf32> to vector<8x128xf32>
    %122 = vector.shape_cast %114 : vector<8x128xf32> to vector<1x8x128xf32>
    tpu.vector_store %arg6[%119, %c0_36, %c0_37], %122 {strides = array<i32>} : memref<8x8x128xf32, #tpu.memory_space<vmem>>, vector<1x8x128xf32>,
    %c2_i32 = arith.constant 2 : i32
    %c7_i32_38 = arith.constant 7 : i32
    %123 = arith.subi %c7_i32_38, %c2_i32 : i32
    %c8_i32_39 = arith.constant 8 : i32
    %124 = arith.muli %c2_i32, %c8_i32_39 : i32
    %125 = tpu.assume_multiple %124, 8 : i32
    %c8_i32_40 = arith.constant 8 : i32
    %126 = arith.muli %123, %c8_i32_40 : i32
    %127 = tpu.assume_multiple %126, 8 : i32
    %128 = arith.index_cast %125 : i32 to index
    %c0_41 = arith.constant 0 : index
    %129 = vector.load %arg7[%128, %c0_41] : memref<64x512xf32, #tpu.memory_space<vmem>>, vector<8x512xf32>
    %130 = arith.truncf %98 : vector<8x128xf32> to vector<8x128xbf16>
    %cst_42 = arith.constant dense<0.000000e+00> : vector<8x512xf32>
    %131 = tpu.matmul %130, %10, %cst_42 {dimension_numbers = #tpu.dot_dimension_numbers<[1], [0], [0], [1], [0, 0, 1, 1], [], []>} : vector<8x128xbf16>, vector<128x512xbf16>, vector<8x512xf32> -> vector<8x512xf32>
    %132 = arith.addf %129, %131 : vector<8x512xf32>
    %133 = arith.index_cast %127 : i32 to index
    %c0_43 = arith.constant 0 : index
    %134 = vector.load %arg8[%133, %c0_43] : memref<64x512xf32, #tpu.memory_space<vmem>>, vector<8x512xf32>
    %135 = arith.truncf %114 : vector<8x128xf32> to vector<8x128xbf16>
    %cst_44 = arith.constant dense<0.000000e+00> : vector<8x512xf32>
    %136 = tpu.matmul %135, %11, %cst_44 {dimension_numbers = #tpu.dot_dimension_numbers<[1], [0], [0], [1], [0, 0, 1, 1], [], []>} : vector<8x128xbf16>, vector<128x512xbf16>, vector<8x512xf32> -> vector<8x512xf32>
    %137 = arith.addf %134, %136 : vector<8x512xf32>
    %138 = vector.extract_strided_slice %132 {offsets = [0, 0], sizes = [8, 384], strides = [1, 1]} : vector<8x512xf32> to vector<8x384xf32>
    %139 = arith.negf %138 : vector<8x384xf32>
    %140 = math.exp %139 : vector<8x384xf32>
    %cst_45 = arith.constant 1.000000e+00 : f32
    %141 = vector.broadcast %cst_45 : f32 to vector<8x384xf32>
    %142 = arith.addf %141, %140 : vector<8x384xf32>
    %143 = arith.divf %141, %142 : vector<8x384xf32>
    %144 = vector.extract_strided_slice %143 {offsets = [0, 0], sizes = [8, 128], strides = [1, 1]} : vector<8x384xf32> to vector<8x128xf32>
    %145 = vector.extract_strided_slice %143 {offsets = [0, 128], sizes = [8, 128], strides = [1, 1]} : vector<8x384xf32> to vector<8x128xf32>
    %146 = vector.extract_strided_slice %143 {offsets = [0, 256], sizes = [8, 128], strides = [1, 1]} : vector<8x384xf32> to vector<8x128xf32>
    %147 = vector.extract_strided_slice %132 {offsets = [0, 384], sizes = [8, 128], strides = [1, 1]} : vector<8x512xf32> to vector<8x128xf32>
    %148 = math.tanh %147 : vector<8x128xf32>
    %149 = arith.mulf %145, %96 : vector<8x128xf32>
    %150 = arith.mulf %144, %148 : vector<8x128xf32>
    %151 = arith.addf %149, %150 : vector<8x128xf32>
    %152 = math.tanh %151 : vector<8x128xf32>
    %153 = arith.mulf %146, %152 : vector<8x128xf32>
    %154 = vector.extract_strided_slice %137 {offsets = [0, 0], sizes = [8, 384], strides = [1, 1]} : vector<8x512xf32> to vector<8x384xf32>
    %155 = arith.negf %154 : vector<8x384xf32>
    %156 = math.exp %155 : vector<8x384xf32>
    %cst_46 = arith.constant 1.000000e+00 : f32
    %157 = vector.broadcast %cst_46 : f32 to vector<8x384xf32>
    %158 = arith.addf %157, %156 : vector<8x384xf32>
    %159 = arith.divf %157, %158 : vector<8x384xf32>
    %160 = vector.extract_strided_slice %159 {offsets = [0, 0], sizes = [8, 128], strides = [1, 1]} : vector<8x384xf32> to vector<8x128xf32>
    %161 = vector.extract_strided_slice %159 {offsets = [0, 128], sizes = [8, 128], strides = [1, 1]} : vector<8x384xf32> to vector<8x128xf32>
    %162 = vector.extract_strided_slice %159 {offsets = [0, 256], sizes = [8, 128], strides = [1, 1]} : vector<8x384xf32> to vector<8x128xf32>
    %163 = vector.extract_strided_slice %137 {offsets = [0, 384], sizes = [8, 128], strides = [1, 1]} : vector<8x512xf32> to vector<8x128xf32>
    %164 = math.tanh %163 : vector<8x128xf32>
    %165 = arith.mulf %161, %112 : vector<8x128xf32>
    %166 = arith.mulf %160, %164 : vector<8x128xf32>
    %167 = arith.addf %165, %166 : vector<8x128xf32>
    %168 = math.tanh %167 : vector<8x128xf32>
    %169 = arith.mulf %162, %168 : vector<8x128xf32>
    %170 = arith.index_cast %c2_i32 : i32 to index
    %c0_47 = arith.constant 0 : index
    %c0_48 = arith.constant 0 : index
    %171 = vector.load %arg5[%170, %c0_47, %c0_48] : memref<8x8x128xf32, #tpu.memory_space<vmem>>, vector<1x8x128xf32>
    %172 = vector.shape_cast %171 : vector<1x8x128xf32> to vector<8x128xf32>
    %173 = vector.shape_cast %153 : vector<8x128xf32> to vector<1x8x128xf32>
    tpu.vector_store %arg5[%170, %c0_47, %c0_48], %173 {strides = array<i32>} : memref<8x8x128xf32, #tpu.memory_space<vmem>>, vector<1x8x128xf32>,
    %174 = arith.index_cast %123 : i32 to index
    %c0_49 = arith.constant 0 : index
    %c0_50 = arith.constant 0 : index
    %175 = vector.load %arg6[%174, %c0_49, %c0_50] : memref<8x8x128xf32, #tpu.memory_space<vmem>>, vector<1x8x128xf32>
    %176 = vector.shape_cast %175 : vector<1x8x128xf32> to vector<8x128xf32>
    %177 = vector.shape_cast %169 : vector<8x128xf32> to vector<1x8x128xf32>
    tpu.vector_store %arg6[%174, %c0_49, %c0_50], %177 {strides = array<i32>} : memref<8x8x128xf32, #tpu.memory_space<vmem>>, vector<1x8x128xf32>,
    %c3_i32 = arith.constant 3 : i32
    %c7_i32_51 = arith.constant 7 : i32
    %178 = arith.subi %c7_i32_51, %c3_i32 : i32
    %c8_i32_52 = arith.constant 8 : i32
    %179 = arith.muli %c3_i32, %c8_i32_52 : i32
    %180 = tpu.assume_multiple %179, 8 : i32
    %c8_i32_53 = arith.constant 8 : i32
    %181 = arith.muli %178, %c8_i32_53 : i32
    %182 = tpu.assume_multiple %181, 8 : i32
    %183 = arith.index_cast %180 : i32 to index
    %c0_54 = arith.constant 0 : index
    %184 = vector.load %arg7[%183, %c0_54] : memref<64x512xf32, #tpu.memory_space<vmem>>, vector<8x512xf32>
    %185 = arith.truncf %153 : vector<8x128xf32> to vector<8x128xbf16>
    %cst_55 = arith.constant dense<0.000000e+00> : vector<8x512xf32>
    %186 = tpu.matmul %185, %10, %cst_55 {dimension_numbers = #tpu.dot_dimension_numbers<[1], [0], [0], [1], [0, 0, 1, 1], [], []>} : vector<8x128xbf16>, vector<128x512xbf16>, vector<8x512xf32> -> vector<8x512xf32>
    %187 = arith.addf %184, %186 : vector<8x512xf32>
    %188 = arith.index_cast %182 : i32 to index
    %c0_56 = arith.constant 0 : index
    %189 = vector.load %arg8[%188, %c0_56] : memref<64x512xf32, #tpu.memory_space<vmem>>, vector<8x512xf32>
    %190 = arith.truncf %169 : vector<8x128xf32> to vector<8x128xbf16>
    %cst_57 = arith.constant dense<0.000000e+00> : vector<8x512xf32>
    %191 = tpu.matmul %190, %11, %cst_57 {dimension_numbers = #tpu.dot_dimension_numbers<[1], [0], [0], [1], [0, 0, 1, 1], [], []>} : vector<8x128xbf16>, vector<128x512xbf16>, vector<8x512xf32> -> vector<8x512xf32>
    %192 = arith.addf %189, %191 : vector<8x512xf32>
    %193 = vector.extract_strided_slice %187 {offsets = [0, 0], sizes = [8, 384], strides = [1, 1]} : vector<8x512xf32> to vector<8x384xf32>
    %194 = arith.negf %193 : vector<8x384xf32>
    %195 = math.exp %194 : vector<8x384xf32>
    %cst_58 = arith.constant 1.000000e+00 : f32
    %196 = vector.broadcast %cst_58 : f32 to vector<8x384xf32>
    %197 = arith.addf %196, %195 : vector<8x384xf32>
    %198 = arith.divf %196, %197 : vector<8x384xf32>
    %199 = vector.extract_strided_slice %198 {offsets = [0, 0], sizes = [8, 128], strides = [1, 1]} : vector<8x384xf32> to vector<8x128xf32>
    %200 = vector.extract_strided_slice %198 {offsets = [0, 128], sizes = [8, 128], strides = [1, 1]} : vector<8x384xf32> to vector<8x128xf32>
    %201 = vector.extract_strided_slice %198 {offsets = [0, 256], sizes = [8, 128], strides = [1, 1]} : vector<8x384xf32> to vector<8x128xf32>
    %202 = vector.extract_strided_slice %187 {offsets = [0, 384], sizes = [8, 128], strides = [1, 1]} : vector<8x512xf32> to vector<8x128xf32>
    %203 = math.tanh %202 : vector<8x128xf32>
    %204 = arith.mulf %200, %151 : vector<8x128xf32>
    %205 = arith.mulf %199, %203 : vector<8x128xf32>
    %206 = arith.addf %204, %205 : vector<8x128xf32>
    %207 = math.tanh %206 : vector<8x128xf32>
    %208 = arith.mulf %201, %207 : vector<8x128xf32>
    %209 = vector.extract_strided_slice %192 {offsets = [0, 0], sizes = [8, 384], strides = [1, 1]} : vector<8x512xf32> to vector<8x384xf32>
    %210 = arith.negf %209 : vector<8x384xf32>
    %211 = math.exp %210 : vector<8x384xf32>
    %cst_59 = arith.constant 1.000000e+00 : f32
    %212 = vector.broadcast %cst_59 : f32 to vector<8x384xf32>
    %213 = arith.addf %212, %211 : vector<8x384xf32>
    %214 = arith.divf %212, %213 : vector<8x384xf32>
    %215 = vector.extract_strided_slice %214 {offsets = [0, 0], sizes = [8, 128], strides = [1, 1]} : vector<8x384xf32> to vector<8x128xf32>
    %216 = vector.extract_strided_slice %214 {offsets = [0, 128], sizes = [8, 128], strides = [1, 1]} : vector<8x384xf32> to vector<8x128xf32>
    %217 = vector.extract_strided_slice %214 {offsets = [0, 256], sizes = [8, 128], strides = [1, 1]} : vector<8x384xf32> to vector<8x128xf32>
    %218 = vector.extract_strided_slice %192 {offsets = [0, 384], sizes = [8, 128], strides = [1, 1]} : vector<8x512xf32> to vector<8x128xf32>
    %219 = math.tanh %218 : vector<8x128xf32>
    %220 = arith.mulf %216, %167 : vector<8x128xf32>
    %221 = arith.mulf %215, %219 : vector<8x128xf32>
    %222 = arith.addf %220, %221 : vector<8x128xf32>
    %223 = math.tanh %222 : vector<8x128xf32>
    %224 = arith.mulf %217, %223 : vector<8x128xf32>
    %225 = arith.index_cast %c3_i32 : i32 to index
    %c0_60 = arith.constant 0 : index
    %c0_61 = arith.constant 0 : index
    %226 = vector.load %arg5[%225, %c0_60, %c0_61] : memref<8x8x128xf32, #tpu.memory_space<vmem>>, vector<1x8x128xf32>
    %227 = vector.shape_cast %226 : vector<1x8x128xf32> to vector<8x128xf32>
    %228 = vector.shape_cast %208 : vector<8x128xf32> to vector<1x8x128xf32>
    tpu.vector_store %arg5[%225, %c0_60, %c0_61], %228 {strides = array<i32>} : memref<8x8x128xf32, #tpu.memory_space<vmem>>, vector<1x8x128xf32>,
    %229 = arith.index_cast %178 : i32 to index
    %c0_62 = arith.constant 0 : index
    %c0_63 = arith.constant 0 : index
    %230 = vector.load %arg6[%229, %c0_62, %c0_63] : memref<8x8x128xf32, #tpu.memory_space<vmem>>, vector<1x8x128xf32>
    %231 = vector.shape_cast %230 : vector<1x8x128xf32> to vector<8x128xf32>
    %232 = vector.shape_cast %224 : vector<8x128xf32> to vector<1x8x128xf32>
    tpu.vector_store %arg6[%229, %c0_62, %c0_63], %232 {strides = array<i32>} : memref<8x8x128xf32, #tpu.memory_space<vmem>>, vector<1x8x128xf32>,
    %c4_i32 = arith.constant 4 : i32
    %c7_i32_64 = arith.constant 7 : i32
    %233 = arith.subi %c7_i32_64, %c4_i32 : i32
    %c8_i32_65 = arith.constant 8 : i32
    %234 = arith.muli %c4_i32, %c8_i32_65 : i32
    %235 = tpu.assume_multiple %234, 8 : i32
    %c8_i32_66 = arith.constant 8 : i32
    %236 = arith.muli %233, %c8_i32_66 : i32
    %237 = tpu.assume_multiple %236, 8 : i32
    %238 = arith.index_cast %235 : i32 to index
    %c0_67 = arith.constant 0 : index
    %239 = vector.load %arg7[%238, %c0_67] : memref<64x512xf32, #tpu.memory_space<vmem>>, vector<8x512xf32>
    %240 = arith.truncf %208 : vector<8x128xf32> to vector<8x128xbf16>
    %cst_68 = arith.constant dense<0.000000e+00> : vector<8x512xf32>
    %241 = tpu.matmul %240, %10, %cst_68 {dimension_numbers = #tpu.dot_dimension_numbers<[1], [0], [0], [1], [0, 0, 1, 1], [], []>} : vector<8x128xbf16>, vector<128x512xbf16>, vector<8x512xf32> -> vector<8x512xf32>
    %242 = arith.addf %239, %241 : vector<8x512xf32>
    %243 = arith.index_cast %237 : i32 to index
    %c0_69 = arith.constant 0 : index
    %244 = vector.load %arg8[%243, %c0_69] : memref<64x512xf32, #tpu.memory_space<vmem>>, vector<8x512xf32>
    %245 = arith.truncf %224 : vector<8x128xf32> to vector<8x128xbf16>
    %cst_70 = arith.constant dense<0.000000e+00> : vector<8x512xf32>
    %246 = tpu.matmul %245, %11, %cst_70 {dimension_numbers = #tpu.dot_dimension_numbers<[1], [0], [0], [1], [0, 0, 1, 1], [], []>} : vector<8x128xbf16>, vector<128x512xbf16>, vector<8x512xf32> -> vector<8x512xf32>
    %247 = arith.addf %244, %246 : vector<8x512xf32>
    %248 = vector.extract_strided_slice %242 {offsets = [0, 0], sizes = [8, 384], strides = [1, 1]} : vector<8x512xf32> to vector<8x384xf32>
    %249 = arith.negf %248 : vector<8x384xf32>
    %250 = math.exp %249 : vector<8x384xf32>
    %cst_71 = arith.constant 1.000000e+00 : f32
    %251 = vector.broadcast %cst_71 : f32 to vector<8x384xf32>
    %252 = arith.addf %251, %250 : vector<8x384xf32>
    %253 = arith.divf %251, %252 : vector<8x384xf32>
    %254 = vector.extract_strided_slice %253 {offsets = [0, 0], sizes = [8, 128], strides = [1, 1]} : vector<8x384xf32> to vector<8x128xf32>
    %255 = vector.extract_strided_slice %253 {offsets = [0, 128], sizes = [8, 128], strides = [1, 1]} : vector<8x384xf32> to vector<8x128xf32>
    %256 = vector.extract_strided_slice %253 {offsets = [0, 256], sizes = [8, 128], strides = [1, 1]} : vector<8x384xf32> to vector<8x128xf32>
    %257 = vector.extract_strided_slice %242 {offsets = [0, 384], sizes = [8, 128], strides = [1, 1]} : vector<8x512xf32> to vector<8x128xf32>
    %258 = math.tanh %257 : vector<8x128xf32>
    %259 = arith.mulf %255, %206 : vector<8x128xf32>
    %260 = arith.mulf %254, %258 : vector<8x128xf32>
    %261 = arith.addf %259, %260 : vector<8x128xf32>
    %262 = math.tanh %261 : vector<8x128xf32>
    %263 = arith.mulf %256, %262 : vector<8x128xf32>
    %264 = vector.extract_strided_slice %247 {offsets = [0, 0], sizes = [8, 384], strides = [1, 1]} : vector<8x512xf32> to vector<8x384xf32>
    %265 = arith.negf %264 : vector<8x384xf32>
    %266 = math.exp %265 : vector<8x384xf32>
    %cst_72 = arith.constant 1.000000e+00 : f32
    %267 = vector.broadcast %cst_72 : f32 to vector<8x384xf32>
    %268 = arith.addf %267, %266 : vector<8x384xf32>
    %269 = arith.divf %267, %268 : vector<8x384xf32>
    %270 = vector.extract_strided_slice %269 {offsets = [0, 0], sizes = [8, 128], strides = [1, 1]} : vector<8x384xf32> to vector<8x128xf32>
    %271 = vector.extract_strided_slice %269 {offsets = [0, 128], sizes = [8, 128], strides = [1, 1]} : vector<8x384xf32> to vector<8x128xf32>
    %272 = vector.extract_strided_slice %269 {offsets = [0, 256], sizes = [8, 128], strides = [1, 1]} : vector<8x384xf32> to vector<8x128xf32>
    %273 = vector.extract_strided_slice %247 {offsets = [0, 384], sizes = [8, 128], strides = [1, 1]} : vector<8x512xf32> to vector<8x128xf32>
    %274 = math.tanh %273 : vector<8x128xf32>
    %275 = arith.mulf %271, %222 : vector<8x128xf32>
    %276 = arith.mulf %270, %274 : vector<8x128xf32>
    %277 = arith.addf %275, %276 : vector<8x128xf32>
    %278 = math.tanh %277 : vector<8x128xf32>
    %279 = arith.mulf %272, %278 : vector<8x128xf32>
    %280 = arith.index_cast %c4_i32 : i32 to index
    %c0_73 = arith.constant 0 : index
    %c0_74 = arith.constant 0 : index
    %281 = vector.load %arg5[%280, %c0_73, %c0_74] : memref<8x8x128xf32, #tpu.memory_space<vmem>>, vector<1x8x128xf32>
    %282 = vector.shape_cast %281 : vector<1x8x128xf32> to vector<8x128xf32>
    %283 = vector.shape_cast %263 : vector<8x128xf32> to vector<1x8x128xf32>
    tpu.vector_store %arg5[%280, %c0_73, %c0_74], %283 {strides = array<i32>} : memref<8x8x128xf32, #tpu.memory_space<vmem>>, vector<1x8x128xf32>,
    %284 = arith.index_cast %233 : i32 to index
    %c0_75 = arith.constant 0 : index
    %c0_76 = arith.constant 0 : index
    %285 = vector.load %arg6[%284, %c0_75, %c0_76] : memref<8x8x128xf32, #tpu.memory_space<vmem>>, vector<1x8x128xf32>
    %286 = vector.shape_cast %285 : vector<1x8x128xf32> to vector<8x128xf32>
    %287 = vector.shape_cast %279 : vector<8x128xf32> to vector<1x8x128xf32>
    tpu.vector_store %arg6[%284, %c0_75, %c0_76], %287 {strides = array<i32>} : memref<8x8x128xf32, #tpu.memory_space<vmem>>, vector<1x8x128xf32>,
    %c5_i32 = arith.constant 5 : i32
    %c7_i32_77 = arith.constant 7 : i32
    %288 = arith.subi %c7_i32_77, %c5_i32 : i32
    %c8_i32_78 = arith.constant 8 : i32
    %289 = arith.muli %c5_i32, %c8_i32_78 : i32
    %290 = tpu.assume_multiple %289, 8 : i32
    %c8_i32_79 = arith.constant 8 : i32
    %291 = arith.muli %288, %c8_i32_79 : i32
    %292 = tpu.assume_multiple %291, 8 : i32
    %293 = arith.index_cast %290 : i32 to index
    %c0_80 = arith.constant 0 : index
    %294 = vector.load %arg7[%293, %c0_80] : memref<64x512xf32, #tpu.memory_space<vmem>>, vector<8x512xf32>
    %295 = arith.truncf %263 : vector<8x128xf32> to vector<8x128xbf16>
    %cst_81 = arith.constant dense<0.000000e+00> : vector<8x512xf32>
    %296 = tpu.matmul %295, %10, %cst_81 {dimension_numbers = #tpu.dot_dimension_numbers<[1], [0], [0], [1], [0, 0, 1, 1], [], []>} : vector<8x128xbf16>, vector<128x512xbf16>, vector<8x512xf32> -> vector<8x512xf32>
    %297 = arith.addf %294, %296 : vector<8x512xf32>
    %298 = arith.index_cast %292 : i32 to index
    %c0_82 = arith.constant 0 : index
    %299 = vector.load %arg8[%298, %c0_82] : memref<64x512xf32, #tpu.memory_space<vmem>>, vector<8x512xf32>
    %300 = arith.truncf %279 : vector<8x128xf32> to vector<8x128xbf16>
    %cst_83 = arith.constant dense<0.000000e+00> : vector<8x512xf32>
    %301 = tpu.matmul %300, %11, %cst_83 {dimension_numbers = #tpu.dot_dimension_numbers<[1], [0], [0], [1], [0, 0, 1, 1], [], []>} : vector<8x128xbf16>, vector<128x512xbf16>, vector<8x512xf32> -> vector<8x512xf32>
    %302 = arith.addf %299, %301 : vector<8x512xf32>
    %303 = vector.extract_strided_slice %297 {offsets = [0, 0], sizes = [8, 384], strides = [1, 1]} : vector<8x512xf32> to vector<8x384xf32>
    %304 = arith.negf %303 : vector<8x384xf32>
    %305 = math.exp %304 : vector<8x384xf32>
    %cst_84 = arith.constant 1.000000e+00 : f32
    %306 = vector.broadcast %cst_84 : f32 to vector<8x384xf32>
    %307 = arith.addf %306, %305 : vector<8x384xf32>
    %308 = arith.divf %306, %307 : vector<8x384xf32>
    %309 = vector.extract_strided_slice %308 {offsets = [0, 0], sizes = [8, 128], strides = [1, 1]} : vector<8x384xf32> to vector<8x128xf32>
    %310 = vector.extract_strided_slice %308 {offsets = [0, 128], sizes = [8, 128], strides = [1, 1]} : vector<8x384xf32> to vector<8x128xf32>
    %311 = vector.extract_strided_slice %308 {offsets = [0, 256], sizes = [8, 128], strides = [1, 1]} : vector<8x384xf32> to vector<8x128xf32>
    %312 = vector.extract_strided_slice %297 {offsets = [0, 384], sizes = [8, 128], strides = [1, 1]} : vector<8x512xf32> to vector<8x128xf32>
    %313 = math.tanh %312 : vector<8x128xf32>
    %314 = arith.mulf %310, %261 : vector<8x128xf32>
    %315 = arith.mulf %309, %313 : vector<8x128xf32>
    %316 = arith.addf %314, %315 : vector<8x128xf32>
    %317 = math.tanh %316 : vector<8x128xf32>
    %318 = arith.mulf %311, %317 : vector<8x128xf32>
    %319 = vector.extract_strided_slice %302 {offsets = [0, 0], sizes = [8, 384], strides = [1, 1]} : vector<8x512xf32> to vector<8x384xf32>
    %320 = arith.negf %319 : vector<8x384xf32>
    %321 = math.exp %320 : vector<8x384xf32>
    %cst_85 = arith.constant 1.000000e+00 : f32
    %322 = vector.broadcast %cst_85 : f32 to vector<8x384xf32>
    %323 = arith.addf %322, %321 : vector<8x384xf32>
    %324 = arith.divf %322, %323 : vector<8x384xf32>
    %325 = vector.extract_strided_slice %324 {offsets = [0, 0], sizes = [8, 128], strides = [1, 1]} : vector<8x384xf32> to vector<8x128xf32>
    %326 = vector.extract_strided_slice %324 {offsets = [0, 128], sizes = [8, 128], strides = [1, 1]} : vector<8x384xf32> to vector<8x128xf32>
    %327 = vector.extract_strided_slice %324 {offsets = [0, 256], sizes = [8, 128], strides = [1, 1]} : vector<8x384xf32> to vector<8x128xf32>
    %328 = vector.extract_strided_slice %302 {offsets = [0, 384], sizes = [8, 128], strides = [1, 1]} : vector<8x512xf32> to vector<8x128xf32>
    %329 = math.tanh %328 : vector<8x128xf32>
    %330 = arith.mulf %326, %277 : vector<8x128xf32>
    %331 = arith.mulf %325, %329 : vector<8x128xf32>
    %332 = arith.addf %330, %331 : vector<8x128xf32>
    %333 = math.tanh %332 : vector<8x128xf32>
    %334 = arith.mulf %327, %333 : vector<8x128xf32>
    %335 = arith.index_cast %c5_i32 : i32 to index
    %c0_86 = arith.constant 0 : index
    %c0_87 = arith.constant 0 : index
    %336 = vector.load %arg5[%335, %c0_86, %c0_87] : memref<8x8x128xf32, #tpu.memory_space<vmem>>, vector<1x8x128xf32>
    %337 = vector.shape_cast %336 : vector<1x8x128xf32> to vector<8x128xf32>
    %338 = vector.shape_cast %318 : vector<8x128xf32> to vector<1x8x128xf32>
    tpu.vector_store %arg5[%335, %c0_86, %c0_87], %338 {strides = array<i32>} : memref<8x8x128xf32, #tpu.memory_space<vmem>>, vector<1x8x128xf32>,
    %339 = arith.index_cast %288 : i32 to index
    %c0_88 = arith.constant 0 : index
    %c0_89 = arith.constant 0 : index
    %340 = vector.load %arg6[%339, %c0_88, %c0_89] : memref<8x8x128xf32, #tpu.memory_space<vmem>>, vector<1x8x128xf32>
    %341 = vector.shape_cast %340 : vector<1x8x128xf32> to vector<8x128xf32>
    %342 = vector.shape_cast %334 : vector<8x128xf32> to vector<1x8x128xf32>
    tpu.vector_store %arg6[%339, %c0_88, %c0_89], %342 {strides = array<i32>} : memref<8x8x128xf32, #tpu.memory_space<vmem>>, vector<1x8x128xf32>,
    %c6_i32 = arith.constant 6 : i32
    %c7_i32_90 = arith.constant 7 : i32
    %343 = arith.subi %c7_i32_90, %c6_i32 : i32
    %c8_i32_91 = arith.constant 8 : i32
    %344 = arith.muli %c6_i32, %c8_i32_91 : i32
    %345 = tpu.assume_multiple %344, 8 : i32
    %c8_i32_92 = arith.constant 8 : i32
    %346 = arith.muli %343, %c8_i32_92 : i32
    %347 = tpu.assume_multiple %346, 8 : i32
    %348 = arith.index_cast %345 : i32 to index
    %c0_93 = arith.constant 0 : index
    %349 = vector.load %arg7[%348, %c0_93] : memref<64x512xf32, #tpu.memory_space<vmem>>, vector<8x512xf32>
    %350 = arith.truncf %318 : vector<8x128xf32> to vector<8x128xbf16>
    %cst_94 = arith.constant dense<0.000000e+00> : vector<8x512xf32>
    %351 = tpu.matmul %350, %10, %cst_94 {dimension_numbers = #tpu.dot_dimension_numbers<[1], [0], [0], [1], [0, 0, 1, 1], [], []>} : vector<8x128xbf16>, vector<128x512xbf16>, vector<8x512xf32> -> vector<8x512xf32>
    %352 = arith.addf %349, %351 : vector<8x512xf32>
    %353 = arith.index_cast %347 : i32 to index
    %c0_95 = arith.constant 0 : index
    %354 = vector.load %arg8[%353, %c0_95] : memref<64x512xf32, #tpu.memory_space<vmem>>, vector<8x512xf32>
    %355 = arith.truncf %334 : vector<8x128xf32> to vector<8x128xbf16>
    %cst_96 = arith.constant dense<0.000000e+00> : vector<8x512xf32>
    %356 = tpu.matmul %355, %11, %cst_96 {dimension_numbers = #tpu.dot_dimension_numbers<[1], [0], [0], [1], [0, 0, 1, 1], [], []>} : vector<8x128xbf16>, vector<128x512xbf16>, vector<8x512xf32> -> vector<8x512xf32>
    %357 = arith.addf %354, %356 : vector<8x512xf32>
    %358 = vector.extract_strided_slice %352 {offsets = [0, 0], sizes = [8, 384], strides = [1, 1]} : vector<8x512xf32> to vector<8x384xf32>
    %359 = arith.negf %358 : vector<8x384xf32>
    %360 = math.exp %359 : vector<8x384xf32>
    %cst_97 = arith.constant 1.000000e+00 : f32
    %361 = vector.broadcast %cst_97 : f32 to vector<8x384xf32>
    %362 = arith.addf %361, %360 : vector<8x384xf32>
    %363 = arith.divf %361, %362 : vector<8x384xf32>
    %364 = vector.extract_strided_slice %363 {offsets = [0, 0], sizes = [8, 128], strides = [1, 1]} : vector<8x384xf32> to vector<8x128xf32>
    %365 = vector.extract_strided_slice %363 {offsets = [0, 128], sizes = [8, 128], strides = [1, 1]} : vector<8x384xf32> to vector<8x128xf32>
    %366 = vector.extract_strided_slice %363 {offsets = [0, 256], sizes = [8, 128], strides = [1, 1]} : vector<8x384xf32> to vector<8x128xf32>
    %367 = vector.extract_strided_slice %352 {offsets = [0, 384], sizes = [8, 128], strides = [1, 1]} : vector<8x512xf32> to vector<8x128xf32>
    %368 = math.tanh %367 : vector<8x128xf32>
    %369 = arith.mulf %365, %316 : vector<8x128xf32>
    %370 = arith.mulf %364, %368 : vector<8x128xf32>
    %371 = arith.addf %369, %370 : vector<8x128xf32>
    %372 = math.tanh %371 : vector<8x128xf32>
    %373 = arith.mulf %366, %372 : vector<8x128xf32>
    %374 = vector.extract_strided_slice %357 {offsets = [0, 0], sizes = [8, 384], strides = [1, 1]} : vector<8x512xf32> to vector<8x384xf32>
    %375 = arith.negf %374 : vector<8x384xf32>
    %376 = math.exp %375 : vector<8x384xf32>
    %cst_98 = arith.constant 1.000000e+00 : f32
    %377 = vector.broadcast %cst_98 : f32 to vector<8x384xf32>
    %378 = arith.addf %377, %376 : vector<8x384xf32>
    %379 = arith.divf %377, %378 : vector<8x384xf32>
    %380 = vector.extract_strided_slice %379 {offsets = [0, 0], sizes = [8, 128], strides = [1, 1]} : vector<8x384xf32> to vector<8x128xf32>
    %381 = vector.extract_strided_slice %379 {offsets = [0, 128], sizes = [8, 128], strides = [1, 1]} : vector<8x384xf32> to vector<8x128xf32>
    %382 = vector.extract_strided_slice %379 {offsets = [0, 256], sizes = [8, 128], strides = [1, 1]} : vector<8x384xf32> to vector<8x128xf32>
    %383 = vector.extract_strided_slice %357 {offsets = [0, 384], sizes = [8, 128], strides = [1, 1]} : vector<8x512xf32> to vector<8x128xf32>
    %384 = math.tanh %383 : vector<8x128xf32>
    %385 = arith.mulf %381, %332 : vector<8x128xf32>
    %386 = arith.mulf %380, %384 : vector<8x128xf32>
    %387 = arith.addf %385, %386 : vector<8x128xf32>
    %388 = math.tanh %387 : vector<8x128xf32>
    %389 = arith.mulf %382, %388 : vector<8x128xf32>
    %390 = arith.index_cast %c6_i32 : i32 to index
    %c0_99 = arith.constant 0 : index
    %c0_100 = arith.constant 0 : index
    %391 = vector.load %arg5[%390, %c0_99, %c0_100] : memref<8x8x128xf32, #tpu.memory_space<vmem>>, vector<1x8x128xf32>
    %392 = vector.shape_cast %391 : vector<1x8x128xf32> to vector<8x128xf32>
    %393 = vector.shape_cast %373 : vector<8x128xf32> to vector<1x8x128xf32>
    tpu.vector_store %arg5[%390, %c0_99, %c0_100], %393 {strides = array<i32>} : memref<8x8x128xf32, #tpu.memory_space<vmem>>, vector<1x8x128xf32>,
    %394 = arith.index_cast %343 : i32 to index
    %c0_101 = arith.constant 0 : index
    %c0_102 = arith.constant 0 : index
    %395 = vector.load %arg6[%394, %c0_101, %c0_102] : memref<8x8x128xf32, #tpu.memory_space<vmem>>, vector<1x8x128xf32>
    %396 = vector.shape_cast %395 : vector<1x8x128xf32> to vector<8x128xf32>
    %397 = vector.shape_cast %389 : vector<8x128xf32> to vector<1x8x128xf32>
    tpu.vector_store %arg6[%394, %c0_101, %c0_102], %397 {strides = array<i32>} : memref<8x8x128xf32, #tpu.memory_space<vmem>>, vector<1x8x128xf32>,
    %c7_i32_103 = arith.constant 7 : i32
    %c7_i32_104 = arith.constant 7 : i32
    %398 = arith.subi %c7_i32_104, %c7_i32_103 : i32
    %c8_i32_105 = arith.constant 8 : i32
    %399 = arith.muli %c7_i32_103, %c8_i32_105 : i32
    %400 = tpu.assume_multiple %399, 8 : i32
    %c8_i32_106 = arith.constant 8 : i32
    %401 = arith.muli %398, %c8_i32_106 : i32
    %402 = tpu.assume_multiple %401, 8 : i32
    %403 = arith.index_cast %400 : i32 to index
    %c0_107 = arith.constant 0 : index
    %404 = vector.load %arg7[%403, %c0_107] : memref<64x512xf32, #tpu.memory_space<vmem>>, vector<8x512xf32>
    %405 = arith.truncf %373 : vector<8x128xf32> to vector<8x128xbf16>
    %cst_108 = arith.constant dense<0.000000e+00> : vector<8x512xf32>
    %406 = tpu.matmul %405, %10, %cst_108 {dimension_numbers = #tpu.dot_dimension_numbers<[1], [0], [0], [1], [0, 0, 1, 1], [], []>} : vector<8x128xbf16>, vector<128x512xbf16>, vector<8x512xf32> -> vector<8x512xf32>
    %407 = arith.addf %404, %406 : vector<8x512xf32>
    %408 = arith.index_cast %402 : i32 to index
    %c0_109 = arith.constant 0 : index
    %409 = vector.load %arg8[%408, %c0_109] : memref<64x512xf32, #tpu.memory_space<vmem>>, vector<8x512xf32>
    %410 = arith.truncf %389 : vector<8x128xf32> to vector<8x128xbf16>
    %cst_110 = arith.constant dense<0.000000e+00> : vector<8x512xf32>
    %411 = tpu.matmul %410, %11, %cst_110 {dimension_numbers = #tpu.dot_dimension_numbers<[1], [0], [0], [1], [0, 0, 1, 1], [], []>} : vector<8x128xbf16>, vector<128x512xbf16>, vector<8x512xf32> -> vector<8x512xf32>
    %412 = arith.addf %409, %411 : vector<8x512xf32>
    %413 = vector.extract_strided_slice %407 {offsets = [0, 0], sizes = [8, 384], strides = [1, 1]} : vector<8x512xf32> to vector<8x384xf32>
    %414 = arith.negf %413 : vector<8x384xf32>
    %415 = math.exp %414 : vector<8x384xf32>
    %cst_111 = arith.constant 1.000000e+00 : f32
    %416 = vector.broadcast %cst_111 : f32 to vector<8x384xf32>
    %417 = arith.addf %416, %415 : vector<8x384xf32>
    %418 = arith.divf %416, %417 : vector<8x384xf32>
    %419 = vector.extract_strided_slice %418 {offsets = [0, 0], sizes = [8, 128], strides = [1, 1]} : vector<8x384xf32> to vector<8x128xf32>
    %420 = vector.extract_strided_slice %418 {offsets = [0, 128], sizes = [8, 128], strides = [1, 1]} : vector<8x384xf32> to vector<8x128xf32>
    %421 = vector.extract_strided_slice %418 {offsets = [0, 256], sizes = [8, 128], strides = [1, 1]} : vector<8x384xf32> to vector<8x128xf32>
    %422 = vector.extract_strided_slice %407 {offsets = [0, 384], sizes = [8, 128], strides = [1, 1]} : vector<8x512xf32> to vector<8x128xf32>
    %423 = math.tanh %422 : vector<8x128xf32>
    %424 = arith.mulf %420, %371 : vector<8x128xf32>
    %425 = arith.mulf %419, %423 : vector<8x128xf32>
    %426 = arith.addf %424, %425 : vector<8x128xf32>
    %427 = math.tanh %426 : vector<8x128xf32>
    %428 = arith.mulf %421, %427 : vector<8x128xf32>
    %429 = vector.extract_strided_slice %412 {offsets = [0, 0], sizes = [8, 384], strides = [1, 1]} : vector<8x512xf32> to vector<8x384xf32>
    %430 = arith.negf %429 : vector<8x384xf32>
    %431 = math.exp %430 : vector<8x384xf32>
    %cst_112 = arith.constant 1.000000e+00 : f32
    %432 = vector.broadcast %cst_112 : f32 to vector<8x384xf32>
    %433 = arith.addf %432, %431 : vector<8x384xf32>
    %434 = arith.divf %432, %433 : vector<8x384xf32>
    %435 = vector.extract_strided_slice %434 {offsets = [0, 0], sizes = [8, 128], strides = [1, 1]} : vector<8x384xf32> to vector<8x128xf32>
    %436 = vector.extract_strided_slice %434 {offsets = [0, 128], sizes = [8, 128], strides = [1, 1]} : vector<8x384xf32> to vector<8x128xf32>
    %437 = vector.extract_strided_slice %434 {offsets = [0, 256], sizes = [8, 128], strides = [1, 1]} : vector<8x384xf32> to vector<8x128xf32>
    %438 = vector.extract_strided_slice %412 {offsets = [0, 384], sizes = [8, 128], strides = [1, 1]} : vector<8x512xf32> to vector<8x128xf32>
    %439 = math.tanh %438 : vector<8x128xf32>
    %440 = arith.mulf %436, %387 : vector<8x128xf32>
    %441 = arith.mulf %435, %439 : vector<8x128xf32>
    %442 = arith.addf %440, %441 : vector<8x128xf32>
    %443 = math.tanh %442 : vector<8x128xf32>
    %444 = arith.mulf %437, %443 : vector<8x128xf32>
    %445 = arith.index_cast %c7_i32_103 : i32 to index
    %c0_113 = arith.constant 0 : index
    %c0_114 = arith.constant 0 : index
    %446 = vector.load %arg5[%445, %c0_113, %c0_114] : memref<8x8x128xf32, #tpu.memory_space<vmem>>, vector<1x8x128xf32>
    %447 = vector.shape_cast %446 : vector<1x8x128xf32> to vector<8x128xf32>
    %448 = vector.shape_cast %428 : vector<8x128xf32> to vector<1x8x128xf32>
    tpu.vector_store %arg5[%445, %c0_113, %c0_114], %448 {strides = array<i32>} : memref<8x8x128xf32, #tpu.memory_space<vmem>>, vector<1x8x128xf32>,
    %449 = arith.index_cast %398 : i32 to index
    %c0_115 = arith.constant 0 : index
    %c0_116 = arith.constant 0 : index
    %450 = vector.load %arg6[%449, %c0_115, %c0_116] : memref<8x8x128xf32, #tpu.memory_space<vmem>>, vector<1x8x128xf32>
    %451 = vector.shape_cast %450 : vector<1x8x128xf32> to vector<8x128xf32>
    %452 = vector.shape_cast %444 : vector<8x128xf32> to vector<1x8x128xf32>
    tpu.vector_store %arg6[%449, %c0_115, %c0_116], %452 {strides = array<i32>} : memref<8x8x128xf32, #tpu.memory_space<vmem>>, vector<1x8x128xf32>,
    %c8_i32_117 = arith.constant 8 : i32
    return
  }
}

</mosaic_0001>

<llo_original>
// kernel: tpu_custom_call.1
$region0: #{tpu_custom_call.1}
  #allocation0 [shape = 'u32[]', space=smem, size = 0x4, offset = 0x4, fixed_abs, tag = 'smem constant byte address 0x4 - core index']
  #allocation1 [shape = 'u32[144,128]{1,0:T(1,128)}', space=vmem, size = 0x12000, scoped, tag = 'internal scratch']
  #allocation2 [shape = 'f32[64,512]{1,0:T(8,128)}', space=vmem, size = 0x20000, scoped, tag = 'scratch operand']
  #allocation3 [shape = 'f32[64,512]{1,0:T(8,128)}', space=vmem, size = 0x20000, scoped, tag = 'scratch operand']
  %s0 = inlined_call_operand.hbm [shape: bf16[64,128], index: 0, kind: input, shape index: {}]
  %s1 = inlined_call_operand.hbm [shape: bf16[128,1024], index: 1, kind: input, shape index: {}]
  %s2 = inlined_call_operand.hbm [shape: bf16[128,512], index: 2, kind: input, shape index: {}]
  %s3 = inlined_call_operand.hbm [shape: bf16[128,512], index: 3, kind: input, shape index: {}]
  %s4 = inlined_call_operand.vmem [shape: f32[1,1024], index: 4, kind: input, shape index: {}]
  %s5 = inlined_call_operand.hbm [shape: f32[8,8,128], index: 5, kind: output, shape index: {0}]
  %s6 = inlined_call_operand.hbm [shape: f32[8,8,128], index: 6, kind: output, shape index: {1}]
  %7 = xla_tuple %s5, %s6
  %s8 = sld [smem:[#allocation0]]
  $region54: #{tpu_custom_call.1} parent=0
    _
  %s10 = ssub.s32 1, %s8
  %s11 = scalar_select 0, %s10, %s8
  $region1: #{tpu_custom_call.1} parent=0
    #allocation4 [shape = 'u8[16384]{0}', space=vmem, size = 0x4000, scoped, tag = 'input window, operand 0, single buffered']
    #allocation5 [shape = 's32[1]{0}', space=sflag, size = 0x4, scoped, tag = 'scoped memory for tpu_custom_call.1']
    #allocation6 [shape = 's32[1]{0}', space=sflag, size = 0x4, scoped, tag = 'scoped memory for tpu_custom_call.1']
    #allocation7 [shape = 'u8[262144]{0}', space=vmem, size = 0x40000, scoped, tag = 'input window, operand 1, single buffered']
    #allocation8 [shape = 's32[1]{0}', space=sflag, size = 0x4, scoped, tag = 'scoped memory for tpu_custom_call.1']
    #allocation9 [shape = 'u8[131072]{0}', space=vmem, size = 0x20000, scoped, tag = 'input window, operand 2, single buffered']
    #allocation10 [shape = 'u8[131072]{0}', space=vmem, size = 0x20000, scoped, tag = 'input window, operand 3, single buffered']
    #allocation11 [shape = 's32[1]{0}', space=sflag, size = 0x4, scoped, tag = 'scoped memory for tpu_custom_call.1']
    #allocation12 [shape = 'u8[32768]{0}', space=vmem, size = 0x8000, scoped, tag = 'output window, operand 0, single buffered']
    #allocation13 [shape = 'u8[32768]{0}', space=vmem, size = 0x8000, scoped, tag = 'output window, operand 1, single buffered']
    #allocation14 [shape = 's32[1]{0}', space=sflag, size = 0x4, scoped, tag = 'scoped memory for tpu_custom_call.1']
    %12 = vsyncpa [#allocation5], 0
    %13 = vsyncpa [#allocation8], 0
    %14 = vsyncpa [#allocation11], 0
    %15 = vsyncpa [#allocation6], 0
    %16 = vsyncpa [#allocation14], 0
    // Predicated region
    $region2: #{tpu_custom_call.1} parent=1 // pred_check
      _
    $region3: #{tpu_custom_call.1} parent=1 // pred_check_branch
      %18 = sbr.rel (0) target = $region5
    $region4: #{tpu_custom_call.1} parent=1 // pred_region
      %s20 = ssub.s32 512, 512
      %21 = vsyncadd [#allocation5], %s20
      %s22 = sshll.u32 [#allocation4], 4
      %s23 = int_to_ptr.vmem [resolvable:$true] %s22
      %28 = dma.hbm_to_vmem [thread:$0]  %s0, 512, %s23, [#allocation5], 64, 64, 4
    $region5: #{tpu_custom_call.1} parent=1 // pred_fallthru
      _
    // Predicated region
    $region6: #{tpu_custom_call.1} parent=1 // pred_check
      _
    $region7: #{tpu_custom_call.1} parent=1 // pred_check_branch
      %30 = sbr.rel (0) target = $region9
    $region8: #{tpu_custom_call.1} parent=1 // pred_region
      %s32 = ssub.s32 8192, 8192
      %33 = vsyncadd [#allocation8], %s32
      %s34 = sshll.u32 [#allocation7], 4
      %s35 = int_to_ptr.vmem [resolvable:$true] %s34
      %40 = dma.hbm_to_vmem [thread:$0]  %s1, 8192, %s35, [#allocation8], 512, 512, 32
    $region9: #{tpu_custom_call.1} parent=1 // pred_fallthru
      _
    // Predicated region
    $region10: #{tpu_custom_call.1} parent=1 // pred_check
      _
    $region11: #{tpu_custom_call.1} parent=1 // pred_check_branch
      %42 = sbr.rel (0) target = $region13
    $region12: #{tpu_custom_call.1} parent=1 // pred_region
      %s44 = ssub.s32 4096, 4096
      %45 = vsyncadd [#allocation8], %s44
      %s46 = sshll.u32 [#allocation9], 4
      %s47 = int_to_ptr.vmem [resolvable:$true] %s46
      %52 = dma.hbm_to_vmem [thread:$0]  %s2, 4096, %s47, [#allocation8], 256, 256, 16
    $region13: #{tpu_custom_call.1} parent=1 // pred_fallthru
      _
    // Predicated region
    $region14: #{tpu_custom_call.1} parent=1 // pred_check
      _
    $region15: #{tpu_custom_call.1} parent=1 // pred_check_branch
      %54 = sbr.rel (0) target = $region17
    $region16: #{tpu_custom_call.1} parent=1 // pred_region
      %s56 = ssub.s32 4096, 4096
      %57 = vsyncadd [#allocation11], %s56
      %s58 = sshll.u32 [#allocation10], 4
      %s59 = int_to_ptr.vmem [resolvable:$true] %s58
      %64 = dma.hbm_to_vmem [thread:$0]  %s3, 4096, %s59, [#allocation11], 256, 256, 16
    $region17: #{tpu_custom_call.1} parent=1 // pred_fallthru
      _
    // Predicated region
    $region18: #{tpu_custom_call.1} parent=1 // pred_check
      _
    $region19: #{tpu_custom_call.1} parent=1 // pred_check_branch
      %66 = sbr.rel (0) target = $region21
    $region20: #{tpu_custom_call.1} parent=1 // pred_region
      _
    $region21: #{tpu_custom_call.1} parent=1 // pred_fallthru
      _
    // Predicated region
    $region22: #{tpu_custom_call.1} parent=1 // pred_check
      _
    $region23: #{tpu_custom_call.1} parent=1 // pred_check_branch
      %68 = sbr.rel (0) target = $region25
    $region24: #{tpu_custom_call.1} parent=1 // pred_region
      %69 = dma.done [#allocation5], 512
    $region25: #{tpu_custom_call.1} parent=1 // pred_fallthru
      _
    // Predicated region
    $region26: #{tpu_custom_call.1} parent=1 // pred_check
      _
    $region27: #{tpu_custom_call.1} parent=1 // pred_check_branch
      %71 = sbr.rel (0) target = $region29
    $region28: #{tpu_custom_call.1} parent=1 // pred_region
      %72 = dma.done [#allocation8], 8192
    $region29: #{tpu_custom_call.1} parent=1 // pred_fallthru
      _
    // Predicated region
    $region30: #{tpu_custom_call.1} parent=1 // pred_check
      _
    $region31: #{tpu_custom_call.1} parent=1 // pred_check_branch
      %74 = sbr.rel (0) target = $region33
    $region32: #{tpu_custom_call.1} parent=1 // pred_region
      %75 = dma.done [#allocation8], 4096
    $region33: #{tpu_custom_call.1} parent=1 // pred_fallthru
      _
    // Predicated region
    $region34: #{tpu_custom_call.1} parent=1 // pred_check
      _
    $region35: #{tpu_custom_call.1} parent=1 // pred_check_branch
      %77 = sbr.rel (0) target = $region37
    $region36: #{tpu_custom_call.1} parent=1 // pred_region
      %78 = dma.done [#allocation11], 4096
    $region37: #{tpu_custom_call.1} parent=1 // pred_fallthru
      _
    %v80 = vld [vmem:[#allocation4] sm:$0xf]
    %v81 = vld [vmem:[#allocation4 + $0x4] sm:$0xf]
    %v82 = vld [vmem:[#allocation4 + $0x8] sm:$0xf]
    %v83 = vld [vmem:[#allocation4 + $0xc] sm:$0xf]
    %v84 = vld [vmem:[#allocation4 + $0x10] sm:$0xf]
    %v85 = vld [vmem:[#allocation4 + $0x14] sm:$0xf]
    %v86 = vld [vmem:[#allocation4 + $0x18] sm:$0xf]
    %v87 = vld [vmem:[#allocation4 + $0x1c] sm:$0xf]
    %v88 = vld [vmem:[#allocation7] sm:$0xff]
    %v89 = vld [vmem:[#allocation7 + $0x8] sm:$0xff]
    %v90 = vld [vmem:[#allocation7 + $0x10] sm:$0xff]
    %v91 = vld [vmem:[#allocation7 + $0x18] sm:$0xff]
    %v92 = vld [vmem:[#allocation7 + $0x20] sm:$0xff]
    %v93 = vld [vmem:[#allocation7 + $0x28] sm:$0xff]
    %v94 = vld [vmem:[#allocation7 + $0x30] sm:$0xff]
    %v95 = vld [vmem:[#allocation7 + $0x38] sm:$0xff]
    %v96 = vld [vmem:[#allocation7 + $0x40] sm:$0xff]
    %v97 = vld [vmem:[#allocation7 + $0x48] sm:$0xff]
    %v98 = vld [vmem:[#allocation7 + $0x50] sm:$0xff]
    %v99 = vld [vmem:[#allocation7 + $0x58] sm:$0xff]
    %v100 = vld [vmem:[#allocation7 + $0x60] sm:$0xff]
    %v101 = vld [vmem:[#allocation7 + $0x68] sm:$0xff]
    %v102 = vld [vmem:[#allocation7 + $0x70] sm:$0xff]
    %v103 = vld [vmem:[#allocation7 + $0x78] sm:$0xff]
    %v104 = vld [vmem:[#allocation7 + $0x80] sm:$0xff]
    %v105 = vld [vmem:[#allocation7 + $0x88] sm:$0xff]
    %v106 = vld [vmem:[#allocation7 + $0x90] sm:$0xff]
    %v107 = vld [vmem:[#allocation7 + $0x98] sm:$0xff]
    %v108 = vld [vmem:[#allocation7 + $0xa0] sm:$0xff]
    %v109 = vld [vmem:[#allocation7 + $0xa8] sm:$0xff]
    %v110 = vld [vmem:[#allocation7 + $0xb0] sm:$0xff]
    %v111 = vld [vmem:[#allocation7 + $0xb8] sm:$0xff]
    %v112 = vld [vmem:[#allocation7 + $0xc0] sm:$0xff]
    %v113 = vld [vmem:[#allocation7 + $0xc8] sm:$0xff]
    %v114 = vld [vmem:[#allocation7 + $0xd0] sm:$0xff]
    %v115 = vld [vmem:[#allocation7 + $0xd8] sm:$0xff]
    %v116 = vld [vmem:[#allocation7 + $0xe0] sm:$0xff]
    %v117 = vld [vmem:[#allocation7 + $0xe8] sm:$0xff]
    %v118 = vld [vmem:[#allocation7 + $0xf0] sm:$0xff]
    %v119 = vld [vmem:[#allocation7 + $0xf8] sm:$0xff]
    %v120 = vld [vmem:[#allocation7 + $0x100] sm:$0xff]
    %v121 = vld [vmem:[#allocation7 + $0x108] sm:$0xff]
    %v122 = vld [vmem:[#allocation7 + $0x110] sm:$0xff]
    %v123 = vld [vmem:[#allocation7 + $0x118] sm:$0xff]
    %v124 = vld [vmem:[#allocation7 + $0x120] sm:$0xff]
    %v125 = vld [vmem:[#allocation7 + $0x128] sm:$0xff]
    %v126 = vld [vmem:[#allocation7 + $0x130] sm:$0xff]
    %v127 = vld [vmem:[#allocation7 + $0x138] sm:$0xff]
    %v128 = vld [vmem:[#allocation7 + $0x140] sm:$0xff]
    %v129 = vld [vmem:[#allocation7 + $0x148] sm:$0xff]
    %v130 = vld [vmem:[#allocation7 + $0x150] sm:$0xff]
    %v131 = vld [vmem:[#allocation7 + $0x158] sm:$0xff]
    %v132 = vld [vmem:[#allocation7 + $0x160] sm:$0xff]
    %v133 = vld [vmem:[#allocation7 + $0x168] sm:$0xff]
    %v134 = vld [vmem:[#allocation7 + $0x170] sm:$0xff]
    %v135 = vld [vmem:[#allocation7 + $0x178] sm:$0xff]
    %v136 = vld [vmem:[#allocation7 + $0x180] sm:$0xff]
    %v137 = vld [vmem:[#allocation7 + $0x188] sm:$0xff]
    %v138 = vld [vmem:[#allocation7 + $0x190] sm:$0xff]
    %v139 = vld [vmem:[#allocation7 + $0x198] sm:$0xff]
    %v140 = vld [vmem:[#allocation7 + $0x1a0] sm:$0xff]
    %v141 = vld [vmem:[#allocation7 + $0x1a8] sm:$0xff]
    %v142 = vld [vmem:[#allocation7 + $0x1b0] sm:$0xff]
    %v143 = vld [vmem:[#allocation7 + $0x1b8] sm:$0xff]
    %v144 = vld [vmem:[#allocation7 + $0x1c0] sm:$0xff]
    %v145 = vld [vmem:[#allocation7 + $0x1c8] sm:$0xff]
    %v146 = vld [vmem:[#allocation7 + $0x1d0] sm:$0xff]
    %v147 = vld [vmem:[#allocation7 + $0x1d8] sm:$0xff]
    %v148 = vld [vmem:[#allocation7 + $0x1e0] sm:$0xff]
    %v149 = vld [vmem:[#allocation7 + $0x1e8] sm:$0xff]
    %v150 = vld [vmem:[#allocation7 + $0x1f0] sm:$0xff]
    %v151 = vld [vmem:[#allocation7 + $0x1f8] sm:$0xff]
    %v152 = vld [vmem:[%s4] sm:$0xff]
    %v154 = vlaneseq
    %v155 = vshrl.u32 %v154, 7
    %v156 = vsub.s32 0, %v155
    %v157 = vrot.slane %v152, %v156
    %v158 = vlaneseq
    %v159 = vshrl.u32 %v158, 7
    %v160 = vsub.s32 1, %v159
    %v161 = vrot.slane %v152, %v160
    %v162 = vlaneseq
    %v163 = vshrl.u32 %v162, 7
    %v164 = vsub.s32 2, %v163
    %v165 = vrot.slane %v152, %v164
    %v166 = vlaneseq
    %v167 = vshrl.u32 %v166, 7
    %v168 = vsub.s32 3, %v167
    %v169 = vrot.slane %v152, %v168
    %v170 = vlaneseq
    %v171 = vshrl.u32 %v170, 7
    %v172 = vsub.s32 4, %v171
    %v173 = vrot.slane %v152, %v172
    %v174 = vlaneseq
    %v175 = vshrl.u32 %v174, 7
    %v176 = vsub.s32 5, %v175
    %v177 = vrot.slane %v152, %v176
    %v178 = vlaneseq
    %v179 = vshrl.u32 %v178, 7
    %v180 = vsub.s32 6, %v179
    %v181 = vrot.slane %v152, %v180
    %v182 = vlaneseq
    %v183 = vshrl.u32 %v182, 7
    %v184 = vsub.s32 7, %v183
    %v185 = vrot.slane %v152, %v184
    %v202 = vunpack.c.l.b16 %v80
    %v203 = vunpack.c.l.b16 %v81
    %v204 = vunpack.c.l.b16 %v82
    %v205 = vunpack.c.l.b16 %v83
    %v206 = vunpack.c.l.b16 %v84
    %v207 = vunpack.c.l.b16 %v85
    %v208 = vunpack.c.l.b16 %v86
    %v209 = vunpack.c.l.b16 %v87
    %v210 = vpack.c.b16 %v203, %v202
    %v211 = vpack.c.b16 %v205, %v204
    %v212 = vpack.c.b16 %v207, %v206
    %v213 = vpack.c.b16 %v209, %v208
    %v282 = vunpack.c.l.b16 %v88
    %v283 = vunpack.c.h.b16 %v88
    %v284 = vunpack.c.l.b16 %v89
    %v285 = vunpack.c.h.b16 %v89
    %v286 = vunpack.c.l.b16 %v90
    %v287 = vunpack.c.h.b16 %v90
    %v288 = vunpack.c.l.b16 %v91
    %v289 = vunpack.c.h.b16 %v91
    %v290 = vunpack.c.l.b16 %v92
    %v291 = vunpack.c.h.b16 %v92
    %v292 = vunpack.c.l.b16 %v93
    %v293 = vunpack.c.h.b16 %v93
    %v294 = vunpack.c.l.b16 %v94
    %v295 = vunpack.c.h.b16 %v94
    %v296 = vunpack.c.l.b16 %v95
    %v297 = vunpack.c.h.b16 %v95
    %v298 = vunpack.c.l.b16 %v96
    %v299 = vunpack.c.h.b16 %v96
    %v300 = vunpack.c.l.b16 %v97
    %v301 = vunpack.c.h.b16 %v97
    %v302 = vunpack.c.l.b16 %v98
    %v303 = vunpack.c.h.b16 %v98
    %v304 = vunpack.c.l.b16 %v99
    %v305 = vunpack.c.h.b16 %v99
    %v306 = vunpack.c.l.b16 %v100
    %v307 = vunpack.c.h.b16 %v100
    %v308 = vunpack.c.l.b16 %v101
    %v309 = vunpack.c.h.b16 %v101
    %v310 = vunpack.c.l.b16 %v102
    %v311 = vunpack.c.h.b16 %v102
    %v312 = vunpack.c.l.b16 %v103
    %v313 = vunpack.c.h.b16 %v103
    %v314 = vunpack.c.l.b16 %v104
    %v315 = vunpack.c.h.b16 %v104
    %v316 = vunpack.c.l.b16 %v105
    %v317 = vunpack.c.h.b16 %v105
    %v318 = vunpack.c.l.b16 %v106
    %v319 = vunpack.c.h.b16 %v106
    %v320 = vunpack.c.l.b16 %v107
    %v321 = vunpack.c.h.b16 %v107
    %v322 = vunpack.c.l.b16 %v108
    %v323 = vunpack.c.h.b16 %v108
    %v324 = vunpack.c.l.b16 %v109
    %v325 = vunpack.c.h.b16 %v109
    %v326 = vunpack.c.l.b16 %v110
    %v327 = vunpack.c.h.b16 %v110
    %v328 = vunpack.c.l.b16 %v111
    %v329 = vunpack.c.h.b16 %v111
    %v330 = vunpack.c.l.b16 %v112
    %v331 = vunpack.c.h.b16 %v112
    %v332 = vunpack.c.l.b16 %v113
    %v333 = vunpack.c.h.b16 %v113
    %v334 = vunpack.c.l.b16 %v114
    %v335 = vunpack.c.h.b16 %v114
    %v336 = vunpack.c.l.b16 %v115
    %v337 = vunpack.c.h.b16 %v115
    %v338 = vunpack.c.l.b16 %v116
    %v339 = vunpack.c.h.b16 %v116
    %v340 = vunpack.c.l.b16 %v117
    %v341 = vunpack.c.h.b16 %v117
    %v342 = vunpack.c.l.b16 %v118
    %v343 = vunpack.c.h.b16 %v118
    %v344 = vunpack.c.l.b16 %v119
    %v345 = vunpack.c.h.b16 %v119
    %v346 = vunpack.c.l.b16 %v120
    %v347 = vunpack.c.h.b16 %v120
    %v348 = vunpack.c.l.b16 %v121
    %v349 = vunpack.c.h.b16 %v121
    %v350 = vunpack.c.l.b16 %v122
    %v351 = vunpack.c.h.b16 %v122
    %v352 = vunpack.c.l.b16 %v123
    %v353 = vunpack.c.h.b16 %v123
    %v354 = vunpack.c.l.b16 %v124
    %v355 = vunpack.c.h.b16 %v124
    %v356 = vunpack.c.l.b16 %v125
    %v357 = vunpack.c.h.b16 %v125
    %v358 = vunpack.c.l.b16 %v126
    %v359 = vunpack.c.h.b16 %v126
    %v360 = vunpack.c.l.b16 %v127
    %v361 = vunpack.c.h.b16 %v127
    %v362 = vunpack.c.l.b16 %v128
    %v363 = vunpack.c.h.b16 %v128
    %v364 = vunpack.c.l.b16 %v129
    %v365 = vunpack.c.h.b16 %v129
    %v366 = vunpack.c.l.b16 %v130
    %v367 = vunpack.c.h.b16 %v130
    %v368 = vunpack.c.l.b16 %v131
    %v369 = vunpack.c.h.b16 %v131
    %v370 = vunpack.c.l.b16 %v132
    %v371 = vunpack.c.h.b16 %v132
    %v372 = vunpack.c.l.b16 %v133
    %v373 = vunpack.c.h.b16 %v133
    %v374 = vunpack.c.l.b16 %v134
    %v375 = vunpack.c.h.b16 %v134
    %v376 = vunpack.c.l.b16 %v135
    %v377 = vunpack.c.h.b16 %v135
    %v378 = vunpack.c.l.b16 %v136
    %v379 = vunpack.c.h.b16 %v136
    %v380 = vunpack.c.l.b16 %v137
    %v381 = vunpack.c.h.b16 %v137
    %v382 = vunpack.c.l.b16 %v138
    %v383 = vunpack.c.h.b16 %v138
    %v384 = vunpack.c.l.b16 %v139
    %v385 = vunpack.c.h.b16 %v139
    %v386 = vunpack.c.l.b16 %v140
    %v387 = vunpack.c.h.b16 %v140
    %v388 = vunpack.c.l.b16 %v141
    %v389 = vunpack.c.h.b16 %v141
    %v390 = vunpack.c.l.b16 %v142
    %v391 = vunpack.c.h.b16 %v142
    %v392 = vunpack.c.l.b16 %v143
    %v393 = vunpack.c.h.b16 %v143
    %v394 = vunpack.c.l.b16 %v144
    %v395 = vunpack.c.h.b16 %v144
    %v396 = vunpack.c.l.b16 %v145
    %v397 = vunpack.c.h.b16 %v145
    %v398 = vunpack.c.l.b16 %v146
    %v399 = vunpack.c.h.b16 %v146
    %v400 = vunpack.c.l.b16 %v147
    %v401 = vunpack.c.h.b16 %v147
    %v402 = vunpack.c.l.b16 %v148
    %v403 = vunpack.c.h.b16 %v148
    %v404 = vunpack.c.l.b16 %v149
    %v405 = vunpack.c.h.b16 %v149
    %v406 = vunpack.c.l.b16 %v150
    %v407 = vunpack.c.h.b16 %v150
    %v408 = vunpack.c.l.b16 %v151
    %v409 = vunpack.c.h.b16 %v151
    %v410 = vpack.c.b16 %v290, %v282
    %v411 = vpack.c.b16 %v291, %v283
    %v412 = vpack.c.b16 %v292, %v284
    %v413 = vpack.c.b16 %v293, %v285
    %v414 = vpack.c.b16 %v294, %v286
    %v415 = vpack.c.b16 %v295, %v287
    %v416 = vpack.c.b16 %v296, %v288
    %v417 = vpack.c.b16 %v297, %v289
    %v418 = vpack.c.b16 %v306, %v298
    %v419 = vpack.c.b16 %v307, %v299
    %v420 = vpack.c.b16 %v308, %v300
    %v421 = vpack.c.b16 %v309, %v301
    %v422 = vpack.c.b16 %v310, %v302
    %v423 = vpack.c.b16 %v311, %v303
    %v424 = vpack.c.b16 %v312, %v304
    %v425 = vpack.c.b16 %v313, %v305
    %v426 = vpack.c.b16 %v322, %v314
    %v427 = vpack.c.b16 %v323, %v315
    %v428 = vpack.c.b16 %v324, %v316
    %v429 = vpack.c.b16 %v325, %v317
    %v430 = vpack.c.b16 %v326, %v318
    %v431 = vpack.c.b16 %v327, %v319
    %v432 = vpack.c.b16 %v328, %v320
    %v433 = vpack.c.b16 %v329, %v321
    %v434 = vpack.c.b16 %v338, %v330
    %v435 = vpack.c.b16 %v339, %v331
    %v436 = vpack.c.b16 %v340, %v332
    %v437 = vpack.c.b16 %v341, %v333
    %v438 = vpack.c.b16 %v342, %v334
    %v439 = vpack.c.b16 %v343, %v335
    %v440 = vpack.c.b16 %v344, %v336
    %v441 = vpack.c.b16 %v345, %v337
    %v442 = vpack.c.b16 %v354, %v346
    %v443 = vpack.c.b16 %v355, %v347
    %v444 = vpack.c.b16 %v356, %v348
    %v445 = vpack.c.b16 %v357, %v349
    %v446 = vpack.c.b16 %v358, %v350
    %v447 = vpack.c.b16 %v359, %v351
    %v448 = vpack.c.b16 %v360, %v352
    %v449 = vpack.c.b16 %v361, %v353
    %v450 = vpack.c.b16 %v370, %v362
    %v451 = vpack.c.b16 %v371, %v363
    %v452 = vpack.c.b16 %v372, %v364
    %v453 = vpack.c.b16 %v373, %v365
    %v454 = vpack.c.b16 %v374, %v366
    %v455 = vpack.c.b16 %v375, %v367
    %v456 = vpack.c.b16 %v376, %v368
    %v457 = vpack.c.b16 %v377, %v369
    %v458 = vpack.c.b16 %v386, %v378
    %v459 = vpack.c.b16 %v387, %v379
    %v460 = vpack.c.b16 %v388, %v380
    %v461 = vpack.c.b16 %v389, %v381
    %v462 = vpack.c.b16 %v390, %v382
    %v463 = vpack.c.b16 %v391, %v383
    %v464 = vpack.c.b16 %v392, %v384
    %v465 = vpack.c.b16 %v393, %v385
    %v466 = vpack.c.b16 %v402, %v394
    %v467 = vpack.c.b16 %v403, %v395
    %v468 = vpack.c.b16 %v404, %v396
    %v469 = vpack.c.b16 %v405, %v397
    %v470 = vpack.c.b16 %v406, %v398
    %v471 = vpack.c.b16 %v407, %v399
    %v472 = vpack.c.b16 %v408, %v400
    %v473 = vpack.c.b16 %v409, %v401
    %538 = vmatprep.subr.bf16.mxu0 %v411
    %539 = vmatpush1.bf16.msra.mxu0 %v410
    %540 = vmatprep.subr.bf16.mxu0 %v419
    %541 = vmatpush1.bf16.msra.mxu0 %v418
    %542 = vmatprep.subr.bf16.mxu0 %v427
    %543 = vmatpush1.bf16.msra.mxu0 %v426
    %544 = vmatprep.subr.bf16.mxu0 %v435
    %545 = vmatpush1.bf16.msra.mxu0 %v434
    %546 = vmatprep.subr.bf16.mxu0 %v443
    %547 = vmatpush1.bf16.msra.mxu0 %v442
    %548 = vmatprep.subr.bf16.mxu0 %v451
    %549 = vmatpush1.bf16.msra.mxu0 %v450
    %550 = vmatprep.subr.bf16.mxu0 %v459
    %551 = vmatpush1.bf16.msra.mxu0 %v458
    %552 = vmatprep.subr.bf16.mxu0 %v467
    %553 = vmatpush1.bf16.msra.mxu0 %v466
    %554 = vmatprep.subr.bf16.mxu0 0
    %555 = vmatpush1.bf16.msra.mxu0 0
    %556 = vmatprep.subr.bf16.mxu0 0
    %557 = vmatpush1.bf16.msra.mxu0 0
    %558 = vmatprep.subr.bf16.mxu0 0
    %559 = vmatpush1.bf16.msra.mxu0 0
    %560 = vmatprep.subr.bf16.mxu0 0
    %561 = vmatpush1.bf16.msra.mxu0 0
    %562 = vmatprep.subr.bf16.mxu0 0
    %563 = vmatpush1.bf16.msra.mxu0 0
    %564 = vmatprep.subr.bf16.mxu0 0
    %565 = vmatpush1.bf16.msra.mxu0 0
    %566 = vmatprep.subr.bf16.mxu0 0
    %567 = vmatpush1.bf16.msra.mxu0 0
    %568 = vmatprep.subr.bf16.mxu0 0
    %569 = vmatpush1.bf16.msra.mxu0 0
    %570 = vmatprep.mubr.bf16.mxu0 0
    %571 = vmatmul.mubr.bf16.gmra.mrb[0].mxu0 %v210
    %v572 = vpop.f32.mrb[0].mxu0
    %v573 = vadd.f32 %v157, %v572
    %v574 = vpop.f32.mrb[0].mxu0
    %v575 = vadd.f32 %v161, %v574
    %v576 = vpop.f32.mrb[0].mxu0
    %v577 = vadd.f32 %v157, %v576
    %v578 = vpop.f32.mrb[0].mxu0
    %v579 = vadd.f32 %v161, %v578
    %580 = vmatprep.mubr.bf16.mxu0 0
    %581 = vmatmul.mubr.bf16.gmra.mrb[0].mxu0 %v211
    %v582 = vpop.f32.mrb[0].mxu0
    %v583 = vadd.f32 %v157, %v582
    %v584 = vpop.f32.mrb[0].mxu0
    %v585 = vadd.f32 %v161, %v584
    %v586 = vpop.f32.mrb[0].mxu0
    %v587 = vadd.f32 %v157, %v586
    %v588 = vpop.f32.mrb[0].mxu0
    %v589 = vadd.f32 %v161, %v588
    %590 = vmatprep.mubr.bf16.mxu0 0
    %591 = vmatmul.mubr.bf16.gmra.mrb[0].mxu0 %v212
    %v592 = vpop.f32.mrb[0].mxu0
    %v593 = vadd.f32 %v157, %v592
    %v594 = vpop.f32.mrb[0].mxu0
    %v595 = vadd.f32 %v161, %v594
    %v596 = vpop.f32.mrb[0].mxu0
    %v597 = vadd.f32 %v157, %v596
    %v598 = vpop.f32.mrb[0].mxu0
    %v599 = vadd.f32 %v161, %v598
    %600 = vmatprep.mubr.bf16.mxu0 0
    %601 = vmatmul.mubr.bf16.gmra.mrb[0].mxu0 %v213
    %v602 = vpop.f32.mrb[0].mxu0
    %v603 = vadd.f32 %v157, %v602
    %v604 = vpop.f32.mrb[0].mxu0
    %v605 = vadd.f32 %v161, %v604
    %v606 = vpop.f32.mrb[0].mxu0
    %v607 = vadd.f32 %v157, %v606
    %v608 = vpop.f32.mrb[0].mxu0
    %v609 = vadd.f32 %v161, %v608
    %610 = vdwg.mxu0
    %611 = vmatprep.subr.bf16.mxu0 %v413
    %612 = vmatpush1.bf16.msra.mxu0 %v412
    %613 = vmatprep.subr.bf16.mxu0 %v421
    %614 = vmatpush1.bf16.msra.mxu0 %v420
    %615 = vmatprep.subr.bf16.mxu0 %v429
    %616 = vmatpush1.bf16.msra.mxu0 %v428
    %617 = vmatprep.subr.bf16.mxu0 %v437
    %618 = vmatpush1.bf16.msra.mxu0 %v436
    %619 = vmatprep.subr.bf16.mxu0 %v445
    %620 = vmatpush1.bf16.msra.mxu0 %v444
    %621 = vmatprep.subr.bf16.mxu0 %v453
    %622 = vmatpush1.bf16.msra.mxu0 %v452
    %623 = vmatprep.subr.bf16.mxu0 %v461
    %624 = vmatpush1.bf16.msra.mxu0 %v460
    %625 = vmatprep.subr.bf16.mxu0 %v469
    %626 = vmatpush1.bf16.msra.mxu0 %v468
    %627 = vmatprep.subr.bf16.mxu0 0
    %628 = vmatpush1.bf16.msra.mxu0 0
    %629 = vmatprep.subr.bf16.mxu0 0
    %630 = vmatpush1.bf16.msra.mxu0 0
    %631 = vmatprep.subr.bf16.mxu0 0
    %632 = vmatpush1.bf16.msra.mxu0 0
    %633 = vmatprep.subr.bf16.mxu0 0
    %634 = vmatpush1.bf16.msra.mxu0 0
    %635 = vmatprep.subr.bf16.mxu0 0
    %636 = vmatpush1.bf16.msra.mxu0 0
    %637 = vmatprep.subr.bf16.mxu0 0
    %638 = vmatpush1.bf16.msra.mxu0 0
    %639 = vmatprep.subr.bf16.mxu0 0
    %640 = vmatpush1.bf16.msra.mxu0 0
    %641 = vmatprep.subr.bf16.mxu0 0
    %642 = vmatpush1.bf16.msra.mxu0 0
    %643 = vmatprep.mubr.bf16.mxu0 0
    %644 = vmatmul.mubr.bf16.gmra.mrb[0].mxu0 %v210
    %v645 = vpop.f32.mrb[0].mxu0
    %v646 = vadd.f32 %v165, %v645
    %v647 = vpop.f32.mrb[0].mxu0
    %v648 = vadd.f32 %v169, %v647
    %v649 = vpop.f32.mrb[0].mxu0
    %v650 = vadd.f32 %v165, %v649
    %v651 = vpop.f32.mrb[0].mxu0
    %v652 = vadd.f32 %v169, %v651
    %653 = vmatprep.mubr.bf16.mxu0 0
    %654 = vmatmul.mubr.bf16.gmra.mrb[0].mxu0 %v211
    %v655 = vpop.f32.mrb[0].mxu0
    %v656 = vadd.f32 %v165, %v655
    %v657 = vpop.f32.mrb[0].mxu0
    %v658 = vadd.f32 %v169, %v657
    %v659 = vpop.f32.mrb[0].mxu0
    %v660 = vadd.f32 %v165, %v659
    %v661 = vpop.f32.mrb[0].mxu0
    %v662 = vadd.f32 %v169, %v661
    %663 = vmatprep.mubr.bf16.mxu0 0
    %664 = vmatmul.mubr.bf16.gmra.mrb[0].mxu0 %v212
    %v665 = vpop.f32.mrb[0].mxu0
    %v666 = vadd.f32 %v165, %v665
    %v667 = vpop.f32.mrb[0].mxu0
    %v668 = vadd.f32 %v169, %v667
    %v669 = vpop.f32.mrb[0].mxu0
    %v670 = vadd.f32 %v165, %v669
    %v671 = vpop.f32.mrb[0].mxu0
    %v672 = vadd.f32 %v169, %v671
    %673 = vmatprep.mubr.bf16.mxu0 0
    %674 = vmatmul.mubr.bf16.gmra.mrb[0].mxu0 %v213
    %v675 = vpop.f32.mrb[0].mxu0
    %v676 = vadd.f32 %v165, %v675
    %v677 = vpop.f32.mrb[0].mxu0
    %v678 = vadd.f32 %v169, %v677
    %v679 = vpop.f32.mrb[0].mxu0
    %v680 = vadd.f32 %v165, %v679
    %v681 = vpop.f32.mrb[0].mxu0
    %v682 = vadd.f32 %v169, %v681
    %683 = vdwg.mxu0
    %684 = vmatprep.subr.bf16.mxu0 %v415
    %685 = vmatpush1.bf16.msra.mxu0 %v414
    %686 = vmatprep.subr.bf16.mxu0 %v423
    %687 = vmatpush1.bf16.msra.mxu0 %v422
    %688 = vmatprep.subr.bf16.mxu0 %v431
    %689 = vmatpush1.bf16.msra.mxu0 %v430
    %690 = vmatprep.subr.bf16.mxu0 %v439
    %691 = vmatpush1.bf16.msra.mxu0 %v438
    %692 = vmatprep.subr.bf16.mxu0 %v447
    %693 = vmatpush1.bf16.msra.mxu0 %v446
    %694 = vmatprep.subr.bf16.mxu0 %v455
    %695 = vmatpush1.bf16.msra.mxu0 %v454
    %696 = vmatprep.subr.bf16.mxu0 %v463
    %697 = vmatpush1.bf16.msra.mxu0 %v462
    %698 = vmatprep.subr.bf16.mxu0 %v471
    %699 = vmatpush1.bf16.msra.mxu0 %v470
    %700 = vmatprep.subr.bf16.mxu0 0
    %701 = vmatpush1.bf16.msra.mxu0 0
    %702 = vmatprep.subr.bf16.mxu0 0
    %703 = vmatpush1.bf16.msra.mxu0 0
    %704 = vmatprep.subr.bf16.mxu0 0
    %705 = vmatpush1.bf16.msra.mxu0 0
    %706 = vmatprep.subr.bf16.mxu0 0
    %707 = vmatpush1.bf16.msra.mxu0 0
    %708 = vmatprep.subr.bf16.mxu0 0
    %709 = vmatpush1.bf16.msra.mxu0 0
    %710 = vmatprep.subr.bf16.mxu0 0
    %711 = vmatpush1.bf16.msra.mxu0 0
    %712 = vmatprep.subr.bf16.mxu0 0
    %713 = vmatpush1.bf16.msra.mxu0 0
    %714 = vmatprep.subr.bf16.mxu0 0
    %715 = vmatpush1.bf16.msra.mxu0 0
    %716 = vmatprep.mubr.bf16.mxu0 0
    %717 = vmatmul.mubr.bf16.gmra.mrb[0].mxu0 %v210
    %v718 = vpop.f32.mrb[0].mxu0
    %v719 = vadd.f32 %v173, %v718
    %v720 = vpop.f32.mrb[0].mxu0
    %v721 = vadd.f32 %v177, %v720
    %v722 = vpop.f32.mrb[0].mxu0
    %v723 = vadd.f32 %v173, %v722
    %v724 = vpop.f32.mrb[0].mxu0
    %v725 = vadd.f32 %v177, %v724
    %726 = vmatprep.mubr.bf16.mxu0 0
    %727 = vmatmul.mubr.bf16.gmra.mrb[0].mxu0 %v211
    %v728 = vpop.f32.mrb[0].mxu0
    %v729 = vadd.f32 %v173, %v728
    %v730 = vpop.f32.mrb[0].mxu0
    %v731 = vadd.f32 %v177, %v730
    %v732 = vpop.f32.mrb[0].mxu0
    %v733 = vadd.f32 %v173, %v732
    %v734 = vpop.f32.mrb[0].mxu0
    %v735 = vadd.f32 %v177, %v734
    %736 = vmatprep.mubr.bf16.mxu0 0
    %737 = vmatmul.mubr.bf16.gmra.mrb[0].mxu0 %v212
    %v738 = vpop.f32.mrb[0].mxu0
    %v739 = vadd.f32 %v173, %v738
    %v740 = vpop.f32.mrb[0].mxu0
    %v741 = vadd.f32 %v177, %v740
    %v742 = vpop.f32.mrb[0].mxu0
    %v743 = vadd.f32 %v173, %v742
    %v744 = vpop.f32.mrb[0].mxu0
    %v745 = vadd.f32 %v177, %v744
    %746 = vmatprep.mubr.bf16.mxu0 0
    %747 = vmatmul.mubr.bf16.gmra.mrb[0].mxu0 %v213
    %v748 = vpop.f32.mrb[0].mxu0
    %v749 = vadd.f32 %v173, %v748
    %v750 = vpop.f32.mrb[0].mxu0
    %v751 = vadd.f32 %v177, %v750
    %v752 = vpop.f32.mrb[0].mxu0
    %v753 = vadd.f32 %v173, %v752
    %v754 = vpop.f32.mrb[0].mxu0
    %v755 = vadd.f32 %v177, %v754
    %756 = vdwg.mxu0
    %757 = vmatprep.subr.bf16.mxu0 %v417
    %758 = vmatpush1.bf16.msra.mxu0 %v416
    %759 = vmatprep.subr.bf16.mxu0 %v425
    %760 = vmatpush1.bf16.msra.mxu0 %v424
    %761 = vmatprep.subr.bf16.mxu0 %v433
    %762 = vmatpush1.bf16.msra.mxu0 %v432
    %763 = vmatprep.subr.bf16.mxu0 %v441
    %764 = vmatpush1.bf16.msra.mxu0 %v440
    %765 = vmatprep.subr.bf16.mxu0 %v449
    %766 = vmatpush1.bf16.msra.mxu0 %v448
    %767 = vmatprep.subr.bf16.mxu0 %v457
    %768 = vmatpush1.bf16.msra.mxu0 %v456
    %769 = vmatprep.subr.bf16.mxu0 %v465
    %770 = vmatpush1.bf16.msra.mxu0 %v464
    %771 = vmatprep.subr.bf16.mxu0 %v473
    %772 = vmatpush1.bf16.msra.mxu0 %v472
    %773 = vmatprep.subr.bf16.mxu0 0
    %774 = vmatpush1.bf16.msra.mxu0 0
    %775 = vmatprep.subr.bf16.mxu0 0
    %776 = vmatpush1.bf16.msra.mxu0 0
    %777 = vmatprep.subr.bf16.mxu0 0
    %778 = vmatpush1.bf16.msra.mxu0 0
    %779 = vmatprep.subr.bf16.mxu0 0
    %780 = vmatpush1.bf16.msra.mxu0 0
    %781 = vmatprep.subr.bf16.mxu0 0
    %782 = vmatpush1.bf16.msra.mxu0 0
    %783 = vmatprep.subr.bf16.mxu0 0
    %784 = vmatpush1.bf16.msra.mxu0 0
    %785 = vmatprep.subr.bf16.mxu0 0
    %786 = vmatpush1.bf16.msra.mxu0 0
    %787 = vmatprep.subr.bf16.mxu0 0
    %788 = vmatpush1.bf16.msra.mxu0 0
    %789 = vmatprep.mubr.bf16.mxu0 0
    %790 = vmatmul.mubr.bf16.gmra.mrb[0].mxu0 %v210
    %v791 = vpop.f32.mrb[0].mxu0
    %v792 = vadd.f32 %v181, %v791
    %v793 = vpop.f32.mrb[0].mxu0
    %v794 = vadd.f32 %v185, %v793
    %v795 = vpop.f32.mrb[0].mxu0
    %v796 = vadd.f32 %v181, %v795
    %v797 = vpop.f32.mrb[0].mxu0
    %v798 = vadd.f32 %v185, %v797
    %799 = vmatprep.mubr.bf16.mxu0 0
    %800 = vmatmul.mubr.bf16.gmra.mrb[0].mxu0 %v211
    %v801 = vpop.f32.mrb[0].mxu0
    %v802 = vadd.f32 %v181, %v801
    %v803 = vpop.f32.mrb[0].mxu0
    %v804 = vadd.f32 %v185, %v803
    %v805 = vpop.f32.mrb[0].mxu0
    %v806 = vadd.f32 %v181, %v805
    %v807 = vpop.f32.mrb[0].mxu0
    %v808 = vadd.f32 %v185, %v807
    %809 = vmatprep.mubr.bf16.mxu0 0
    %810 = vmatmul.mubr.bf16.gmra.mrb[0].mxu0 %v212
    %v811 = vpop.f32.mrb[0].mxu0
    %v812 = vadd.f32 %v181, %v811
    %v813 = vpop.f32.mrb[0].mxu0
    %v814 = vadd.f32 %v185, %v813
    %v815 = vpop.f32.mrb[0].mxu0
    %v816 = vadd.f32 %v181, %v815
    %v817 = vpop.f32.mrb[0].mxu0
    %v818 = vadd.f32 %v185, %v817
    %819 = vmatprep.mubr.bf16.mxu0 0
    %820 = vmatmul.mubr.bf16.gmra.mrb[0].mxu0 %v213
    %v821 = vpop.f32.mrb[0].mxu0
    %v822 = vadd.f32 %v181, %v821
    %v823 = vpop.f32.mrb[0].mxu0
    %v824 = vadd.f32 %v185, %v823
    %v825 = vpop.f32.mrb[0].mxu0
    %v826 = vadd.f32 %v181, %v825
    %v827 = vpop.f32.mrb[0].mxu0
    %v828 = vadd.f32 %v185, %v827
    %829 = vdwg.mxu0
    %830 = vst [vmem:[#allocation2] sm:$0xff] %v573
    %831 = vst [vmem:[#allocation2 + $0x8] sm:$0xff] %v575
    %832 = vst [vmem:[#allocation2 + $0x10] sm:$0xff] %v646
    %833 = vst [vmem:[#allocation2 + $0x18] sm:$0xff] %v648
    %834 = vst [vmem:[#allocation2 + $0x20] sm:$0xff] %v577
    %835 = vst [vmem:[#allocation2 + $0x28] sm:$0xff] %v579
    %836 = vst [vmem:[#allocation2 + $0x30] sm:$0xff] %v650
    %837 = vst [vmem:[#allocation2 + $0x38] sm:$0xff] %v652
    %838 = vst [vmem:[#allocation2 + $0x40] sm:$0xff] %v583
    %839 = vst [vmem:[#allocation2 + $0x48] sm:$0xff] %v585
    %840 = vst [vmem:[#allocation2 + $0x50] sm:$0xff] %v656
    %841 = vst [vmem:[#allocation2 + $0x58] sm:$0xff] %v658
    %842 = vst [vmem:[#allocation2 + $0x60] sm:$0xff] %v587
    %843 = vst [vmem:[#allocation2 + $0x68] sm:$0xff] %v589
    %844 = vst [vmem:[#allocation2 + $0x70] sm:$0xff] %v660
    %845 = vst [vmem:[#allocation2 + $0x78] sm:$0xff] %v662
    %846 = vst [vmem:[#allocation2 + $0x80] sm:$0xff] %v593
    %847 = vst [vmem:[#allocation2 + $0x88] sm:$0xff] %v595
    %848 = vst [vmem:[#allocation2 + $0x90] sm:$0xff] %v666
    %849 = vst [vmem:[#allocation2 + $0x98] sm:$0xff] %v668
    %850 = vst [vmem:[#allocation2 + $0xa0] sm:$0xff] %v597
    %851 = vst [vmem:[#allocation2 + $0xa8] sm:$0xff] %v599
    %852 = vst [vmem:[#allocation2 + $0xb0] sm:$0xff] %v670
    %853 = vst [vmem:[#allocation2 + $0xb8] sm:$0xff] %v672
    %854 = vst [vmem:[#allocation2 + $0xc0] sm:$0xff] %v603
    %855 = vst [vmem:[#allocation2 + $0xc8] sm:$0xff] %v605
    %856 = vst [vmem:[#allocation2 + $0xd0] sm:$0xff] %v676
    %857 = vst [vmem:[#allocation2 + $0xd8] sm:$0xff] %v678
    %858 = vst [vmem:[#allocation2 + $0xe0] sm:$0xff] %v607
    %859 = vst [vmem:[#allocation2 + $0xe8] sm:$0xff] %v609
    %860 = vst [vmem:[#allocation2 + $0xf0] sm:$0xff] %v680
    %861 = vst [vmem:[#allocation2 + $0xf8] sm:$0xff] %v682
    %862 = vst [vmem:[#allocation3] sm:$0xff] %v719
    %863 = vst [vmem:[#allocation3 + $0x8] sm:$0xff] %v721
    %864 = vst [vmem:[#allocation3 + $0x10] sm:$0xff] %v792
    %865 = vst [vmem:[#allocation3 + $0x18] sm:$0xff] %v794
    %866 = vst [vmem:[#allocation3 + $0x20] sm:$0xff] %v723
    %867 = vst [vmem:[#allocation3 + $0x28] sm:$0xff] %v725
    %868 = vst [vmem:[#allocation3 + $0x30] sm:$0xff] %v796
    %869 = vst [vmem:[#allocation3 + $0x38] sm:$0xff] %v798
    %870 = vst [vmem:[#allocation3 + $0x40] sm:$0xff] %v729
    %871 = vst [vmem:[#allocation3 + $0x48] sm:$0xff] %v731
    %872 = vst [vmem:[#allocation3 + $0x50] sm:$0xff] %v802
    %873 = vst [vmem:[#allocation3 + $0x58] sm:$0xff] %v804
    %874 = vst [vmem:[#allocation3 + $0x60] sm:$0xff] %v733
    %875 = vst [vmem:[#allocation3 + $0x68] sm:$0xff] %v735
    %876 = vst [vmem:[#allocation3 + $0x70] sm:$0xff] %v806
    %877 = vst [vmem:[#allocation3 + $0x78] sm:$0xff] %v808
    %878 = vst [vmem:[#allocation3 + $0x80] sm:$0xff] %v739
    %879 = vst [vmem:[#allocation3 + $0x88] sm:$0xff] %v741
    %880 = vst [vmem:[#allocation3 + $0x90] sm:$0xff] %v812
    %881 = vst [vmem:[#allocation3 + $0x98] sm:$0xff] %v814
    %882 = vst [vmem:[#allocation3 + $0xa0] sm:$0xff] %v743
    %883 = vst [vmem:[#allocation3 + $0xa8] sm:$0xff] %v745
    %884 = vst [vmem:[#allocation3 + $0xb0] sm:$0xff] %v816
    %885 = vst [vmem:[#allocation3 + $0xb8] sm:$0xff] %v818
    %886 = vst [vmem:[#allocation3 + $0xc0] sm:$0xff] %v749
    %887 = vst [vmem:[#allocation3 + $0xc8] sm:$0xff] %v751
    %888 = vst [vmem:[#allocation3 + $0xd0] sm:$0xff] %v822
    %889 = vst [vmem:[#allocation3 + $0xd8] sm:$0xff] %v824
    %890 = vst [vmem:[#allocation3 + $0xe0] sm:$0xff] %v753
    %891 = vst [vmem:[#allocation3 + $0xe8] sm:$0xff] %v755
    %892 = vst [vmem:[#allocation3 + $0xf0] sm:$0xff] %v826
    %893 = vst [vmem:[#allocation3 + $0xf8] sm:$0xff] %v828
    %v894 = vld [vmem:[#allocation9] sm:$0xff]
    %v895 = vld [vmem:[#allocation9 + $0x8] sm:$0xff]
    %v896 = vld [vmem:[#allocation9 + $0x10] sm:$0xff]
    %v897 = vld [vmem:[#allocation9 + $0x18] sm:$0xff]
    %v898 = vld [vmem:[#allocation9 + $0x20] sm:$0xff]
    %v899 = vld [vmem:[#allocation9 + $0x28] sm:$0xff]
    %v900 = vld [vmem:[#allocation9 + $0x30] sm:$0xff]
    %v901 = vld [vmem:[#allocation9 + $0x38] sm:$0xff]
    %v902 = vld [vmem:[#allocation9 + $0x40] sm:$0xff]
    %v903 = vld [vmem:[#allocation9 + $0x48] sm:$0xff]
    %v904 = vld [vmem:[#allocation9 + $0x50] sm:$0xff]
    %v905 = vld [vmem:[#allocation9 + $0x58] sm:$0xff]
    %v906 = vld [vmem:[#allocation9 + $0x60] sm:$0xff]
    %v907 = vld [vmem:[#allocation9 + $0x68] sm:$0xff]
    %v908 = vld [vmem:[#allocation9 + $0x70] sm:$0xff]
    %v909 = vld [vmem:[#allocation9 + $0x78] sm:$0xff]
    %v910 = vld [vmem:[#allocation9 + $0x80] sm:$0xff]
    %v911 = vld [vmem:[#allocation9 + $0x88] sm:$0xff]
    %v912 = vld [vmem:[#allocation9 + $0x90] sm:$0xff]
    %v913 = vld [vmem:[#allocation9 + $0x98] sm:$0xff]
    %v914 = vld [vmem:[#allocation9 + $0xa0] sm:$0xff]
    %v915 = vld [vmem:[#allocation9 + $0xa8] sm:$0xff]
    %v916 = vld [vmem:[#allocation9 + $0xb0] sm:$0xff]
    %v917 = vld [vmem:[#allocation9 + $0xb8] sm:$0xff]
    %v918 = vld [vmem:[#allocation9 + $0xc0] sm:$0xff]
    %v919 = vld [vmem:[#allocation9 + $0xc8] sm:$0xff]
    %v920 = vld [vmem:[#allocation9 + $0xd0] sm:$0xff]
    %v921 = vld [vmem:[#allocation9 + $0xd8] sm:$0xff]
    %v922 = vld [vmem:[#allocation9 + $0xe0] sm:$0xff]
    %v923 = vld [vmem:[#allocation9 + $0xe8] sm:$0xff]
    %v924 = vld [vmem:[#allocation9 + $0xf0] sm:$0xff]
    %v925 = vld [vmem:[#allocation9 + $0xf8] sm:$0xff]
    %v926 = vld [vmem:[#allocation10] sm:$0xff]
    %v927 = vld [vmem:[#allocation10 + $0x8] sm:$0xff]
    %v928 = vld [vmem:[#allocation10 + $0x10] sm:$0xff]
    %v929 = vld [vmem:[#allocation10 + $0x18] sm:$0xff]
    %v930 = vld [vmem:[#allocation10 + $0x20] sm:$0xff]
    %v931 = vld [vmem:[#allocation10 + $0x28] sm:$0xff]
    %v932 = vld [vmem:[#allocation10 + $0x30] sm:$0xff]
    %v933 = vld [vmem:[#allocation10 + $0x38] sm:$0xff]
    %v934 = vld [vmem:[#allocation10 + $0x40] sm:$0xff]
    %v935 = vld [vmem:[#allocation10 + $0x48] sm:$0xff]
    %v936 = vld [vmem:[#allocation10 + $0x50] sm:$0xff]
    %v937 = vld [vmem:[#allocation10 + $0x58] sm:$0xff]
    %v938 = vld [vmem:[#allocation10 + $0x60] sm:$0xff]
    %v939 = vld [vmem:[#allocation10 + $0x68] sm:$0xff]
    %v940 = vld [vmem:[#allocation10 + $0x70] sm:$0xff]
    %v941 = vld [vmem:[#allocation10 + $0x78] sm:$0xff]
    %v942 = vld [vmem:[#allocation10 + $0x80] sm:$0xff]
    %v943 = vld [vmem:[#allocation10 + $0x88] sm:$0xff]
    %v944 = vld [vmem:[#allocation10 + $0x90] sm:$0xff]
    %v945 = vld [vmem:[#allocation10 + $0x98] sm:$0xff]
    %v946 = vld [vmem:[#allocation10 + $0xa0] sm:$0xff]
    %v947 = vld [vmem:[#allocation10 + $0xa8] sm:$0xff]
    %v948 = vld [vmem:[#allocation10 + $0xb0] sm:$0xff]
    %v949 = vld [vmem:[#allocation10 + $0xb8] sm:$0xff]
    %v950 = vld [vmem:[#allocation10 + $0xc0] sm:$0xff]
    %v951 = vld [vmem:[#allocation10 + $0xc8] sm:$0xff]
    %v952 = vld [vmem:[#allocation10 + $0xd0] sm:$0xff]
    %v953 = vld [vmem:[#allocation10 + $0xd8] sm:$0xff]
    %v954 = vld [vmem:[#allocation10 + $0xe0] sm:$0xff]
    %v955 = vld [vmem:[#allocation10 + $0xe8] sm:$0xff]
    %v956 = vld [vmem:[#allocation10 + $0xf0] sm:$0xff]
    %v957 = vld [vmem:[#allocation10 + $0xf8] sm:$0xff]
    %s958 = smul.u32 0, 4
    %s959 = smul.addr %s958, 8
    %s960 = scalar_lea.vmem [#allocation2], %s959
    %v961 = vld [vmem:[%s960] sm:$0xff]
    %v962 = vld [vmem:[%s960 + $0x8] sm:$0xff]
    %v963 = vld [vmem:[%s960 + $0x10] sm:$0xff]
    %v964 = vld [vmem:[%s960 + $0x18] sm:$0xff]
    %v997 = vunpack.c.l.b16 %v894
    %v998 = vunpack.c.h.b16 %v894
    %v999 = vunpack.c.l.b16 %v895
    %v1000 = vunpack.c.h.b16 %v895
    %v1001 = vunpack.c.l.b16 %v896
    %v1002 = vunpack.c.h.b16 %v896
    %v1003 = vunpack.c.l.b16 %v897
    %v1004 = vunpack.c.h.b16 %v897
    %v1005 = vunpack.c.l.b16 %v898
    %v1006 = vunpack.c.h.b16 %v898
    %v1007 = vunpack.c.l.b16 %v899
    %v1008 = vunpack.c.h.b16 %v899
    %v1009 = vunpack.c.l.b16 %v900
    %v1010 = vunpack.c.h.b16 %v900
    %v1011 = vunpack.c.l.b16 %v901
    %v1012 = vunpack.c.h.b16 %v901
    %v1013 = vunpack.c.l.b16 %v902
    %v1014 = vunpack.c.h.b16 %v902
    %v1015 = vunpack.c.l.b16 %v903
    %v1016 = vunpack.c.h.b16 %v903
    %v1017 = vunpack.c.l.b16 %v904
    %v1018 = vunpack.c.h.b16 %v904
    %v1019 = vunpack.c.l.b16 %v905
    %v1020 = vunpack.c.h.b16 %v905
    %v1021 = vunpack.c.l.b16 %v906
    %v1022 = vunpack.c.h.b16 %v906
    %v1023 = vunpack.c.l.b16 %v907
    %v1024 = vunpack.c.h.b16 %v907
    %v1025 = vunpack.c.l.b16 %v908
    %v1026 = vunpack.c.h.b16 %v908
    %v1027 = vunpack.c.l.b16 %v909
    %v1028 = vunpack.c.h.b16 %v909
    %v1029 = vunpack.c.l.b16 %v910
    %v1030 = vunpack.c.h.b16 %v910
    %v1031 = vunpack.c.l.b16 %v911
    %v1032 = vunpack.c.h.b16 %v911
    %v1033 = vunpack.c.l.b16 %v912
    %v1034 = vunpack.c.h.b16 %v912
    %v1035 = vunpack.c.l.b16 %v913
    %v1036 = vunpack.c.h.b16 %v913
    %v1037 = vunpack.c.l.b16 %v914
    %v1038 = vunpack.c.h.b16 %v914
    %v1039 = vunpack.c.l.b16 %v915
    %v1040 = vunpack.c.h.b16 %v915
    %v1041 = vunpack.c.l.b16 %v916
    %v1042 = vunpack.c.h.b16 %v916
    %v1043 = vunpack.c.l.b16 %v917
    %v1044 = vunpack.c.h.b16 %v917
    %v1045 = vunpack.c.l.b16 %v918
    %v1046 = vunpack.c.h.b16 %v918
    %v1047 = vunpack.c.l.b16 %v919
    %v1048 = vunpack.c.h.b16 %v919
    %v1049 = vunpack.c.l.b16 %v920
    %v1050 = vunpack.c.h.b16 %v920
    %v1051 = vunpack.c.l.b16 %v921
    %v1052 = vunpack.c.h.b16 %v921
    %v1053 = vunpack.c.l.b16 %v922
    %v1054 = vunpack.c.h.b16 %v922
    %v1055 = vunpack.c.l.b16 %v923
    %v1056 = vunpack.c.h.b16 %v923
    %v1057 = vunpack.c.l.b16 %v924
    %v1058 = vunpack.c.h.b16 %v924
    %v1059 = vunpack.c.l.b16 %v925
    %v1060 = vunpack.c.h.b16 %v925
    %v1061 = vpack.c.b16 %v1001, %v997
    %v1062 = vpack.c.b16 %v1002, %v998
    %v1063 = vpack.c.b16 %v1003, %v999
    %v1064 = vpack.c.b16 %v1004, %v1000
    %v1065 = vpack.c.b16 %v1009, %v1005
    %v1066 = vpack.c.b16 %v1010, %v1006
    %v1067 = vpack.c.b16 %v1011, %v1007
    %v1068 = vpack.c.b16 %v1012, %v1008
    %v1069 = vpack.c.b16 %v1017, %v1013
    %v1070 = vpack.c.b16 %v1018, %v1014
    %v1071 = vpack.c.b16 %v1019, %v1015
    %v1072 = vpack.c.b16 %v1020, %v1016
    %v1073 = vpack.c.b16 %v1025, %v1021
    %v1074 = vpack.c.b16 %v1026, %v1022
    %v1075 = vpack.c.b16 %v1027, %v1023
    %v1076 = vpack.c.b16 %v1028, %v1024
    %v1077 = vpack.c.b16 %v1033, %v1029
    %v1078 = vpack.c.b16 %v1034, %v1030
    %v1079 = vpack.c.b16 %v1035, %v1031
    %v1080 = vpack.c.b16 %v1036, %v1032
    %v1081 = vpack.c.b16 %v1041, %v1037
    %v1082 = vpack.c.b16 %v1042, %v1038
    %v1083 = vpack.c.b16 %v1043, %v1039
    %v1084 = vpack.c.b16 %v1044, %v1040
    %v1085 = vpack.c.b16 %v1049, %v1045
    %v1086 = vpack.c.b16 %v1050, %v1046
    %v1087 = vpack.c.b16 %v1051, %v1047
    %v1088 = vpack.c.b16 %v1052, %v1048
    %v1089 = vpack.c.b16 %v1057, %v1053
    %v1090 = vpack.c.b16 %v1058, %v1054
    %v1091 = vpack.c.b16 %v1059, %v1055
    %v1092 = vpack.c.b16 %v1060, %v1056
    %1125 = vmatprep.subr.bf16.mxu0 %v1062
    %1126 = vmatpush1.bf16.msra.mxu0 %v1061
    %1127 = vmatprep.subr.bf16.mxu0 %v1066
    %1128 = vmatpush1.bf16.msra.mxu0 %v1065
    %1129 = vmatprep.subr.bf16.mxu0 %v1070
    %1130 = vmatpush1.bf16.msra.mxu0 %v1069
    %1131 = vmatprep.subr.bf16.mxu0 %v1074
    %1132 = vmatpush1.bf16.msra.mxu0 %v1073
    %1133 = vmatprep.subr.bf16.mxu0 %v1078
    %1134 = vmatpush1.bf16.msra.mxu0 %v1077
    %1135 = vmatprep.subr.bf16.mxu0 %v1082
    %1136 = vmatpush1.bf16.msra.mxu0 %v1081
    %1137 = vmatprep.subr.bf16.mxu0 %v1086
    %1138 = vmatpush1.bf16.msra.mxu0 %v1085
    %1139 = vmatprep.subr.bf16.mxu0 %v1090
    %1140 = vmatpush1.bf16.msra.mxu0 %v1089
    %1141 = vmatprep.subr.bf16.mxu0 0
    %1142 = vmatpush1.bf16.msra.mxu0 0
    %1143 = vmatprep.subr.bf16.mxu0 0
    %1144 = vmatpush1.bf16.msra.mxu0 0
    %1145 = vmatprep.subr.bf16.mxu0 0
    %1146 = vmatpush1.bf16.msra.mxu0 0
    %1147 = vmatprep.subr.bf16.mxu0 0
    %1148 = vmatpush1.bf16.msra.mxu0 0
    %1149 = vmatprep.subr.bf16.mxu0 0
    %1150 = vmatpush1.bf16.msra.mxu0 0
    %1151 = vmatprep.subr.bf16.mxu0 0
    %1152 = vmatpush1.bf16.msra.mxu0 0
    %1153 = vmatprep.subr.bf16.mxu0 0
    %1154 = vmatpush1.bf16.msra.mxu0 0
    %1155 = vmatprep.subr.bf16.mxu0 0
    %1156 = vmatpush1.bf16.msra.mxu0 0
    %1157 = vmatprep.mubr.bf16.mxu0 0
    %1158 = vmatmul.mubr.bf16.gmra.mrb[0].mxu0 0
    %v1159 = vpop.f32.mrb[0].mxu0
    %v1160 = vadd.f32 0.0, %v1159
    %v1161 = vpop.f32.mrb[0].mxu0
    %v1162 = vadd.f32 0.0, %v1161
    %v1163 = vpop.f32.mrb[0].mxu0
    %v1164 = vpop.f32.mrb[0].mxu0
    %1165 = vdwg.mxu0
    %1166 = vmatprep.subr.bf16.mxu0 %v1064
    %1167 = vmatpush1.bf16.msra.mxu0 %v1063
    %1168 = vmatprep.subr.bf16.mxu0 %v1068
    %1169 = vmatpush1.bf16.msra.mxu0 %v1067
    %1170 = vmatprep.subr.bf16.mxu0 %v1072
    %1171 = vmatpush1.bf16.msra.mxu0 %v1071
    %1172 = vmatprep.subr.bf16.mxu0 %v1076
    %1173 = vmatpush1.bf16.msra.mxu0 %v1075
    %1174 = vmatprep.subr.bf16.mxu0 %v1080
    %1175 = vmatpush1.bf16.msra.mxu0 %v1079
    %1176 = vmatprep.subr.bf16.mxu0 %v1084
    %1177 = vmatpush1.bf16.msra.mxu0 %v1083
    %1178 = vmatprep.subr.bf16.mxu0 %v1088
    %1179 = vmatpush1.bf16.msra.mxu0 %v1087
    %1180 = vmatprep.subr.bf16.mxu0 %v1092
    %1181 = vmatpush1.bf16.msra.mxu0 %v1091
    %1182 = vmatprep.subr.bf16.mxu0 0
    %1183 = vmatpush1.bf16.msra.mxu0 0
    %1184 = vmatprep.subr.bf16.mxu0 0
    %1185 = vmatpush1.bf16.msra.mxu0 0
    %1186 = vmatprep.subr.bf16.mxu0 0
    %1187 = vmatpush1.bf16.msra.mxu0 0
    %1188 = vmatprep.subr.bf16.mxu0 0
    %1189 = vmatpush1.bf16.msra.mxu0 0
    %1190 = vmatprep.subr.bf16.mxu0 0
    %1191 = vmatpush1.bf16.msra.mxu0 0
    %1192 = vmatprep.subr.bf16.mxu0 0
    %1193 = vmatpush1.bf16.msra.mxu0 0
    %1194 = vmatprep.subr.bf16.mxu0 0
    %1195 = vmatpush1.bf16.msra.mxu0 0
    %1196 = vmatprep.subr.bf16.mxu0 0
    %1197 = vmatpush1.bf16.msra.mxu0 0
    %1198 = vmatprep.mubr.bf16.mxu0 0
    %1199 = vmatmul.mubr.bf16.gmra.mrb[0].mxu0 0
    %v1200 = vpop.f32.mrb[0].mxu0
    %v1201 = vadd.f32 0.0, %v1200
    %v1202 = vpop.f32.mrb[0].mxu0
    %v1203 = vadd.f32 0.0, %v1202
    %v1204 = vpop.f32.mrb[0].mxu0
    %v1205 = vpop.f32.mrb[0].mxu0
    %1206 = vdwg.mxu0
    %v1207 = vadd.f32 %v961, %v1160
    %v1208 = vadd.f32 %v962, %v1162
    %v1209 = vadd.f32 %v963, %v1201
    %v1210 = vadd.f32 %v964, %v1203
    %s1211 = smul.u32 7, 4
    %s1212 = smul.addr %s1211, 8
    %s1213 = scalar_lea.vmem [#allocation3], %s1212
    %v1214 = vld [vmem:[%s1213] sm:$0xff]
    %v1215 = vld [vmem:[%s1213 + $0x8] sm:$0xff]
    %v1216 = vld [vmem:[%s1213 + $0x10] sm:$0xff]
    %v1217 = vld [vmem:[%s1213 + $0x18] sm:$0xff]
    %v1250 = vunpack.c.l.b16 %v926
    %v1251 = vunpack.c.h.b16 %v926
    %v1252 = vunpack.c.l.b16 %v927
    %v1253 = vunpack.c.h.b16 %v927
    %v1254 = vunpack.c.l.b16 %v928
    %v1255 = vunpack.c.h.b16 %v928
    %v1256 = vunpack.c.l.b16 %v929
    %v1257 = vunpack.c.h.b16 %v929
    %v1258 = vunpack.c.l.b16 %v930
    %v1259 = vunpack.c.h.b16 %v930
    %v1260 = vunpack.c.l.b16 %v931
    %v1261 = vunpack.c.h.b16 %v931
    %v1262 = vunpack.c.l.b16 %v932
    %v1263 = vunpack.c.h.b16 %v932
    %v1264 = vunpack.c.l.b16 %v933
    %v1265 = vunpack.c.h.b16 %v933
    %v1266 = vunpack.c.l.b16 %v934
    %v1267 = vunpack.c.h.b16 %v934
    %v1268 = vunpack.c.l.b16 %v935
    %v1269 = vunpack.c.h.b16 %v935
    %v1270 = vunpack.c.l.b16 %v936
    %v1271 = vunpack.c.h.b16 %v936
    %v1272 = vunpack.c.l.b16 %v937
    %v1273 = vunpack.c.h.b16 %v937
    %v1274 = vunpack.c.l.b16 %v938
    %v1275 = vunpack.c.h.b16 %v938
    %v1276 = vunpack.c.l.b16 %v939
    %v1277 = vunpack.c.h.b16 %v939
    %v1278 = vunpack.c.l.b16 %v940
    %v1279 = vunpack.c.h.b16 %v940
    %v1280 = vunpack.c.l.b16 %v941
    %v1281 = vunpack.c.h.b16 %v941
    %v1282 = vunpack.c.l.b16 %v942
    %v1283 = vunpack.c.h.b16 %v942
    %v1284 = vunpack.c.l.b16 %v943
    %v1285 = vunpack.c.h.b16 %v943
    %v1286 = vunpack.c.l.b16 %v944
    %v1287 = vunpack.c.h.b16 %v944
    %v1288 = vunpack.c.l.b16 %v945
    %v1289 = vunpack.c.h.b16 %v945
    %v1290 = vunpack.c.l.b16 %v946
    %v1291 = vunpack.c.h.b16 %v946
    %v1292 = vunpack.c.l.b16 %v947
    %v1293 = vunpack.c.h.b16 %v947
    %v1294 = vunpack.c.l.b16 %v948
    %v1295 = vunpack.c.h.b16 %v948
    %v1296 = vunpack.c.l.b16 %v949
    %v1297 = vunpack.c.h.b16 %v949
    %v1298 = vunpack.c.l.b16 %v950
    %v1299 = vunpack.c.h.b16 %v950
    %v1300 = vunpack.c.l.b16 %v951
    %v1301 = vunpack.c.h.b16 %v951
    %v1302 = vunpack.c.l.b16 %v952
    %v1303 = vunpack.c.h.b16 %v952
    %v1304 = vunpack.c.l.b16 %v953
    %v1305 = vunpack.c.h.b16 %v953
    %v1306 = vunpack.c.l.b16 %v954
    %v1307 = vunpack.c.h.b16 %v954
    %v1308 = vunpack.c.l.b16 %v955
    %v1309 = vunpack.c.h.b16 %v955
    %v1310 = vunpack.c.l.b16 %v956
    %v1311 = vunpack.c.h.b16 %v956
    %v1312 = vunpack.c.l.b16 %v957
    %v1313 = vunpack.c.h.b16 %v957
    %v1314 = vpack.c.b16 %v1254, %v1250
    %v1315 = vpack.c.b16 %v1255, %v1251
    %v1316 = vpack.c.b16 %v1256, %v1252
    %v1317 = vpack.c.b16 %v1257, %v1253
    %v1318 = vpack.c.b16 %v1262, %v1258
    %v1319 = vpack.c.b16 %v1263, %v1259
    %v1320 = vpack.c.b16 %v1264, %v1260
    %v1321 = vpack.c.b16 %v1265, %v1261
    %v1322 = vpack.c.b16 %v1270, %v1266
    %v1323 = vpack.c.b16 %v1271, %v1267
    %v1324 = vpack.c.b16 %v1272, %v1268
    %v1325 = vpack.c.b16 %v1273, %v1269
    %v1326 = vpack.c.b16 %v1278, %v1274
    %v1327 = vpack.c.b16 %v1279, %v1275
    %v1328 = vpack.c.b16 %v1280, %v1276
    %v1329 = vpack.c.b16 %v1281, %v1277
    %v1330 = vpack.c.b16 %v1286, %v1282
    %v1331 = vpack.c.b16 %v1287, %v1283
    %v1332 = vpack.c.b16 %v1288, %v1284
    %v1333 = vpack.c.b16 %v1289, %v1285
    %v1334 = vpack.c.b16 %v1294, %v1290
    %v1335 = vpack.c.b16 %v1295, %v1291
    %v1336 = vpack.c.b16 %v1296, %v1292
    %v1337 = vpack.c.b16 %v1297, %v1293
    %v1338 = vpack.c.b16 %v1302, %v1298
    %v1339 = vpack.c.b16 %v1303, %v1299
    %v1340 = vpack.c.b16 %v1304, %v1300
    %v1341 = vpack.c.b16 %v1305, %v1301
    %v1342 = vpack.c.b16 %v1310, %v1306
    %v1343 = vpack.c.b16 %v1311, %v1307
    %v1344 = vpack.c.b16 %v1312, %v1308
    %v1345 = vpack.c.b16 %v1313, %v1309
    %1378 = vmatprep.subr.bf16.mxu0 %v1315
    %1379 = vmatpush1.bf16.msra.mxu0 %v1314
    %1380 = vmatprep.subr.bf16.mxu0 %v1319
    %1381 = vmatpush1.bf16.msra.mxu0 %v1318
    %1382 = vmatprep.subr.bf16.mxu0 %v1323
    %1383 = vmatpush1.bf16.msra.mxu0 %v1322
    %1384 = vmatprep.subr.bf16.mxu0 %v1327
    %1385 = vmatpush1.bf16.msra.mxu0 %v1326
    %1386 = vmatprep.subr.bf16.mxu0 %v1331
    %1387 = vmatpush1.bf16.msra.mxu0 %v1330
    %1388 = vmatprep.subr.bf16.mxu0 %v1335
    %1389 = vmatpush1.bf16.msra.mxu0 %v1334
    %1390 = vmatprep.subr.bf16.mxu0 %v1339
    %1391 = vmatpush1.bf16.msra.mxu0 %v1338
    %1392 = vmatprep.subr.bf16.mxu0 %v1343
    %1393 = vmatpush1.bf16.msra.mxu0 %v1342
    %1394 = vmatprep.subr.bf16.mxu0 0
    %1395 = vmatpush1.bf16.msra.mxu0 0
    %1396 = vmatprep.subr.bf16.mxu0 0
    %1397 = vmatpush1.bf16.msra.mxu0 0
    %1398 = vmatprep.subr.bf16.mxu0 0
    %1399 = vmatpush1.bf16.msra.mxu0 0
    %1400 = vmatprep.subr.bf16.mxu0 0
    %1401 = vmatpush1.bf16.msra.mxu0 0
    %1402 = vmatprep.subr.bf16.mxu0 0
    %1403 = vmatpush1.bf16.msra.mxu0 0
    %1404 = vmatprep.subr.bf16.mxu0 0
    %1405 = vmatpush1.bf16.msra.mxu0 0
    %1406 = vmatprep.subr.bf16.mxu0 0
    %1407 = vmatpush1.bf16.msra.mxu0 0
    %1408 = vmatprep.subr.bf16.mxu0 0
    %1409 = vmatpush1.bf16.msra.mxu0 0
    %1410 = vmatprep.mubr.bf16.mxu0 0
    %1411 = vmatmul.mubr.bf16.gmra.mrb[0].mxu0 0
    %v1412 = vpop.f32.mrb[0].mxu0
    %v1413 = vadd.f32 0.0, %v1412
    %v1414 = vpop.f32.mrb[0].mxu0
    %v1415 = vadd.f32 0.0, %v1414
    %v1416 = vpop.f32.mrb[0].mxu0
    %v1417 = vpop.f32.mrb[0].mxu0
    %1418 = vdwg.mxu0
    %1419 = vmatprep.subr.bf16.mxu0 %v1317
    %1420 = vmatpush1.bf16.msra.mxu0 %v1316
    %1421 = vmatprep.subr.bf16.mxu0 %v1321
    %1422 = vmatpush1.bf16.msra.mxu0 %v1320
    %1423 = vmatprep.subr.bf16.mxu0 %v1325
    %1424 = vmatpush1.bf16.msra.mxu0 %v1324
    %1425 = vmatprep.subr.bf16.mxu0 %v1329
    %1426 = vmatpush1.bf16.msra.mxu0 %v1328
    %1427 = vmatprep.subr.bf16.mxu0 %v1333
    %1428 = vmatpush1.bf16.msra.mxu0 %v1332
    %1429 = vmatprep.subr.bf16.mxu0 %v1337
    %1430 = vmatpush1.bf16.msra.mxu0 %v1336
    %1431 = vmatprep.subr.bf16.mxu0 %v1341
    %1432 = vmatpush1.bf16.msra.mxu0 %v1340
    %1433 = vmatprep.subr.bf16.mxu0 %v1345
    %1434 = vmatpush1.bf16.msra.mxu0 %v1344
    %1435 = vmatprep.subr.bf16.mxu0 0
    %1436 = vmatpush1.bf16.msra.mxu0 0
    %1437 = vmatprep.subr.bf16.mxu0 0
    %1438 = vmatpush1.bf16.msra.mxu0 0
    %1439 = vmatprep.subr.bf16.mxu0 0
    %1440 = vmatpush1.bf16.msra.mxu0 0
    %1441 = vmatprep.subr.bf16.mxu0 0
    %1442 = vmatpush1.bf16.msra.mxu0 0
    %1443 = vmatprep.subr.bf16.mxu0 0
    %1444 = vmatpush1.bf16.msra.mxu0 0
    %1445 = vmatprep.subr.bf16.mxu0 0
    %1446 = vmatpush1.bf16.msra.mxu0 0
    %1447 = vmatprep.subr.bf16.mxu0 0
    %1448 = vmatpush1.bf16.msra.mxu0 0
    %1449 = vmatprep.subr.bf16.mxu0 0
    %1450 = vmatpush1.bf16.msra.mxu0 0
    %1451 = vmatprep.mubr.bf16.mxu0 0
    %1452 = vmatmul.mubr.bf16.gmra.mrb[0].mxu0 0
    %v1453 = vpop.f32.mrb[0].mxu0
    %v1454 = vadd.f32 0.0, %v1453
    %v1455 = vpop.f32.mrb[0].mxu0
    %v1456 = vadd.f32 0.0, %v1455
    %v1457 = vpop.f32.mrb[0].mxu0
    %v1458 = vpop.f32.mrb[0].mxu0
    %1459 = vdwg.mxu0
    %v1460 = vadd.f32 %v1214, %v1413
    %v1461 = vadd.f32 %v1215, %v1415
    %v1462 = vadd.f32 %v1216, %v1454
    %v1463 = vadd.f32 %v1217, %v1456
    %v1464 = vxor.u32 %v1207, 2147483648
    %v1465 = vxor.u32 %v1208, 2147483648
    %v1466 = vxor.u32 %v1209, 2147483648
    %v1467 = vmul.f32 %v1464, 1.442695
    %v1468 = vpow.pop %v1467
    %v1469 = vmul.f32 %v1465, 1.442695
    %v1470 = vpow.pop %v1469
    %v1471 = vmul.f32 %v1466, 1.442695
    %v1472 = vpow.pop %v1471
    %v1473 = vadd.f32 %v1468, 1.0
    %v1474 = vadd.f32 %v1470, 1.0
    %v1475 = vadd.f32 %v1472, 1.0
    %v1476 = vrcp.pop %v1473
    %v1477 = vmul.f32 1.0, %v1476
    %v1478 = vrcp.pop %v1474
    %v1479 = vmul.f32 1.0, %v1478
    %v1480 = vrcp.pop %v1475
    %v1481 = vmul.f32 1.0, %v1480
    %v1482 = vtanh.pop %v1210
    %v1483 = vmul.f32 %v1479, 0.0
    %v1484 = vmul.f32 %v1477, %v1482
    %v1485 = vadd.f32 %v1483, %v1484
    %v1486 = vtanh.pop %v1485
    %v1487 = vmul.f32 %v1481, %v1486
    %v1488 = vxor.u32 %v1460, 2147483648
    %v1489 = vxor.u32 %v1461, 2147483648
    %v1490 = vxor.u32 %v1462, 2147483648
    %v1491 = vmul.f32 %v1488, 1.442695
    %v1492 = vpow.pop %v1491
    %v1493 = vmul.f32 %v1489, 1.442695
    %v1494 = vpow.pop %v1493
    %v1495 = vmul.f32 %v1490, 1.442695
    %v1496 = vpow.pop %v1495
    %v1497 = vadd.f32 %v1492, 1.0
    %v1498 = vadd.f32 %v1494, 1.0
    %v1499 = vadd.f32 %v1496, 1.0
    %v1500 = vrcp.pop %v1497
    %v1501 = vmul.f32 1.0, %v1500
    %v1502 = vrcp.pop %v1498
    %v1503 = vmul.f32 1.0, %v1502
    %v1504 = vrcp.pop %v1499
    %v1505 = vmul.f32 1.0, %v1504
    %v1506 = vtanh.pop %v1463
    %v1507 = vmul.f32 %v1503, 0.0
    %v1508 = vmul.f32 %v1501, %v1506
    %v1509 = vadd.f32 %v1507, %v1508
    %v1510 = vtanh.pop %v1509
    %v1511 = vmul.f32 %v1505, %v1510
    %1512 = vst [vmem:[#allocation12] sm:$0xff] %v1487
    %s1513 = scalar_lea.vmem [#allocation13], 56
    %1514 = vst [vmem:[%s1513] sm:$0xff] %v1511
    %s1515 = smul.u32 1, 4
    %s1516 = smul.addr %s1515, 8
    %s1517 = scalar_lea.vmem [#allocation2], %s1516
    %v1518 = vld [vmem:[%s1517] sm:$0xff]
    %v1519 = vld [vmem:[%s1517 + $0x8] sm:$0xff]
    %v1520 = vld [vmem:[%s1517 + $0x10] sm:$0xff]
    %v1521 = vld [vmem:[%s1517 + $0x18] sm:$0xff]
    %v1522 = vpack.c.bf16 %v1487, %v1487
    %1523 = vmatprep.subr.bf16.mxu0 %v1062
    %1524 = vmatpush1.bf16.msra.mxu0 %v1061
    %1525 = vmatprep.subr.bf16.mxu0 %v1066
    %1526 = vmatpush1.bf16.msra.mxu0 %v1065
    %1527 = vmatprep.subr.bf16.mxu0 %v1070
    %1528 = vmatpush1.bf16.msra.mxu0 %v1069
    %1529 = vmatprep.subr.bf16.mxu0 %v1074
    %1530 = vmatpush1.bf16.msra.mxu0 %v1073
    %1531 = vmatprep.subr.bf16.mxu0 %v1078
    %1532 = vmatpush1.bf16.msra.mxu0 %v1077
    %1533 = vmatprep.subr.bf16.mxu0 %v1082
    %1534 = vmatpush1.bf16.msra.mxu0 %v1081
    %1535 = vmatprep.subr.bf16.mxu0 %v1086
    %1536 = vmatpush1.bf16.msra.mxu0 %v1085
    %1537 = vmatprep.subr.bf16.mxu0 %v1090
    %1538 = vmatpush1.bf16.msra.mxu0 %v1089
    %1539 = vmatprep.subr.bf16.mxu0 0
    %1540 = vmatpush1.bf16.msra.mxu0 0
    %1541 = vmatprep.subr.bf16.mxu0 0
    %1542 = vmatpush1.bf16.msra.mxu0 0
    %1543 = vmatprep.subr.bf16.mxu0 0
    %1544 = vmatpush1.bf16.msra.mxu0 0
    %1545 = vmatprep.subr.bf16.mxu0 0
    %1546 = vmatpush1.bf16.msra.mxu0 0
    %1547 = vmatprep.subr.bf16.mxu0 0
    %1548 = vmatpush1.bf16.msra.mxu0 0
    %1549 = vmatprep.subr.bf16.mxu0 0
    %1550 = vmatpush1.bf16.msra.mxu0 0
    %1551 = vmatprep.subr.bf16.mxu0 0
    %1552 = vmatpush1.bf16.msra.mxu0 0
    %1553 = vmatprep.subr.bf16.mxu0 0
    %1554 = vmatpush1.bf16.msra.mxu0 0
    %1555 = vmatprep.mubr.bf16.mxu0 0
    %1556 = vmatmul.mubr.bf16.gmra.mrb[0].mxu0 %v1522
    %v1557 = vpop.f32.mrb[0].mxu0
    %v1558 = vadd.f32 0.0, %v1557
    %v1559 = vpop.f32.mrb[0].mxu0
    %v1560 = vadd.f32 0.0, %v1559
    %v1561 = vpop.f32.mrb[0].mxu0
    %v1562 = vpop.f32.mrb[0].mxu0
    %1563 = vdwg.mxu0
    %1564 = vmatprep.subr.bf16.mxu0 %v1064
    %1565 = vmatpush1.bf16.msra.mxu0 %v1063
    %1566 = vmatprep.subr.bf16.mxu0 %v1068
    %1567 = vmatpush1.bf16.msra.mxu0 %v1067
    %1568 = vmatprep.subr.bf16.mxu0 %v1072
    %1569 = vmatpush1.bf16.msra.mxu0 %v1071
    %1570 = vmatprep.subr.bf16.mxu0 %v1076
    %1571 = vmatpush1.bf16.msra.mxu0 %v1075
    %1572 = vmatprep.subr.bf16.mxu0 %v1080
    %1573 = vmatpush1.bf16.msra.mxu0 %v1079
    %1574 = vmatprep.subr.bf16.mxu0 %v1084
    %1575 = vmatpush1.bf16.msra.mxu0 %v1083
    %1576 = vmatprep.subr.bf16.mxu0 %v1088
    %1577 = vmatpush1.bf16.msra.mxu0 %v1087
    %1578 = vmatprep.subr.bf16.mxu0 %v1092
    %1579 = vmatpush1.bf16.msra.mxu0 %v1091
    %1580 = vmatprep.subr.bf16.mxu0 0
    %1581 = vmatpush1.bf16.msra.mxu0 0
    %1582 = vmatprep.subr.bf16.mxu0 0
    %1583 = vmatpush1.bf16.msra.mxu0 0
    %1584 = vmatprep.subr.bf16.mxu0 0
    %1585 = vmatpush1.bf16.msra.mxu0 0
    %1586 = vmatprep.subr.bf16.mxu0 0
    %1587 = vmatpush1.bf16.msra.mxu0 0
    %1588 = vmatprep.subr.bf16.mxu0 0
    %1589 = vmatpush1.bf16.msra.mxu0 0
    %1590 = vmatprep.subr.bf16.mxu0 0
    %1591 = vmatpush1.bf16.msra.mxu0 0
    %1592 = vmatprep.subr.bf16.mxu0 0
    %1593 = vmatpush1.bf16.msra.mxu0 0
    %1594 = vmatprep.subr.bf16.mxu0 0
    %1595 = vmatpush1.bf16.msra.mxu0 0
    %1596 = vmatprep.mubr.bf16.mxu0 0
    %1597 = vmatmul.mubr.bf16.gmra.mrb[0].mxu0 %v1522
    %v1598 = vpop.f32.mrb[0].mxu0
    %v1599 = vadd.f32 0.0, %v1598
    %v1600 = vpop.f32.mrb[0].mxu0
    %v1601 = vadd.f32 0.0, %v1600
    %v1602 = vpop.f32.mrb[0].mxu0
    %v1603 = vpop.f32.mrb[0].mxu0
    %1604 = vdwg.mxu0
    %v1605 = vadd.f32 %v1518, %v1558
    %v1606 = vadd.f32 %v1519, %v1560
    %v1607 = vadd.f32 %v1520, %v1599
    %v1608 = vadd.f32 %v1521, %v1601
    %s1609 = smul.u32 6, 4
    %s1610 = smul.addr %s1609, 8
    %s1611 = scalar_lea.vmem [#allocation3], %s1610
    %v1612 = vld [vmem:[%s1611] sm:$0xff]
    %v1613 = vld [vmem:[%s1611 + $0x8] sm:$0xff]
    %v1614 = vld [vmem:[%s1611 + $0x10] sm:$0xff]
    %v1615 = vld [vmem:[%s1611 + $0x18] sm:$0xff]
    %v1616 = vpack.c.bf16 %v1511, %v1511
    %1617 = vmatprep.subr.bf16.mxu0 %v1315
    %1618 = vmatpush1.bf16.msra.mxu0 %v1314
    %1619 = vmatprep.subr.bf16.mxu0 %v1319
    %1620 = vmatpush1.bf16.msra.mxu0 %v1318
    %1621 = vmatprep.subr.bf16.mxu0 %v1323
    %1622 = vmatpush1.bf16.msra.mxu0 %v1322
    %1623 = vmatprep.subr.bf16.mxu0 %v1327
    %1624 = vmatpush1.bf16.msra.mxu0 %v1326
    %1625 = vmatprep.subr.bf16.mxu0 %v1331
    %1626 = vmatpush1.bf16.msra.mxu0 %v1330
    %1627 = vmatprep.subr.bf16.mxu0 %v1335
    %1628 = vmatpush1.bf16.msra.mxu0 %v1334
    %1629 = vmatprep.subr.bf16.mxu0 %v1339
    %1630 = vmatpush1.bf16.msra.mxu0 %v1338
    %1631 = vmatprep.subr.bf16.mxu0 %v1343
    %1632 = vmatpush1.bf16.msra.mxu0 %v1342
    %1633 = vmatprep.subr.bf16.mxu0 0
    %1634 = vmatpush1.bf16.msra.mxu0 0
    %1635 = vmatprep.subr.bf16.mxu0 0
    %1636 = vmatpush1.bf16.msra.mxu0 0
    %1637 = vmatprep.subr.bf16.mxu0 0
    %1638 = vmatpush1.bf16.msra.mxu0 0
    %1639 = vmatprep.subr.bf16.mxu0 0
    %1640 = vmatpush1.bf16.msra.mxu0 0
    %1641 = vmatprep.subr.bf16.mxu0 0
    %1642 = vmatpush1.bf16.msra.mxu0 0
    %1643 = vmatprep.subr.bf16.mxu0 0
    %1644 = vmatpush1.bf16.msra.mxu0 0
    %1645 = vmatprep.subr.bf16.mxu0 0
    %1646 = vmatpush1.bf16.msra.mxu0 0
    %1647 = vmatprep.subr.bf16.mxu0 0
    %1648 = vmatpush1.bf16.msra.mxu0 0
    %1649 = vmatprep.mubr.bf16.mxu0 0
    %1650 = vmatmul.mubr.bf16.gmra.mrb[0].mxu0 %v1616
    %v1651 = vpop.f32.mrb[0].mxu0
    %v1652 = vadd.f32 0.0, %v1651
    %v1653 = vpop.f32.mrb[0].mxu0
    %v1654 = vadd.f32 0.0, %v1653
    %v1655 = vpop.f32.mrb[0].mxu0
    %v1656 = vpop.f32.mrb[0].mxu0
    %1657 = vdwg.mxu0
    %1658 = vmatprep.subr.bf16.mxu0 %v1317
    %1659 = vmatpush1.bf16.msra.mxu0 %v1316
    %1660 = vmatprep.subr.bf16.mxu0 %v1321
    %1661 = vmatpush1.bf16.msra.mxu0 %v1320
    %1662 = vmatprep.subr.bf16.mxu0 %v1325
    %1663 = vmatpush1.bf16.msra.mxu0 %v1324
    %1664 = vmatprep.subr.bf16.mxu0 %v1329
    %1665 = vmatpush1.bf16.msra.mxu0 %v1328
    %1666 = vmatprep.subr.bf16.mxu0 %v1333
    %1667 = vmatpush1.bf16.msra.mxu0 %v1332
    %1668 = vmatprep.subr.bf16.mxu0 %v1337
    %1669 = vmatpush1.bf16.msra.mxu0 %v1336
    %1670 = vmatprep.subr.bf16.mxu0 %v1341
    %1671 = vmatpush1.bf16.msra.mxu0 %v1340
    %1672 = vmatprep.subr.bf16.mxu0 %v1345
    %1673 = vmatpush1.bf16.msra.mxu0 %v1344
    %1674 = vmatprep.subr.bf16.mxu0 0
    %1675 = vmatpush1.bf16.msra.mxu0 0
    %1676 = vmatprep.subr.bf16.mxu0 0
    %1677 = vmatpush1.bf16.msra.mxu0 0
    %1678 = vmatprep.subr.bf16.mxu0 0
    %1679 = vmatpush1.bf16.msra.mxu0 0
    %1680 = vmatprep.subr.bf16.mxu0 0
    %1681 = vmatpush1.bf16.msra.mxu0 0
    %1682 = vmatprep.subr.bf16.mxu0 0
    %1683 = vmatpush1.bf16.msra.mxu0 0
    %1684 = vmatprep.subr.bf16.mxu0 0
    %1685 = vmatpush1.bf16.msra.mxu0 0
    %1686 = vmatprep.subr.bf16.mxu0 0
    %1687 = vmatpush1.bf16.msra.mxu0 0
    %1688 = vmatprep.subr.bf16.mxu0 0
    %1689 = vmatpush1.bf16.msra.mxu0 0
    %1690 = vmatprep.mubr.bf16.mxu0 0
    %1691 = vmatmul.mubr.bf16.gmra.mrb[0].mxu0 %v1616
    %v1692 = vpop.f32.mrb[0].mxu0
    %v1693 = vadd.f32 0.0, %v1692
    %v1694 = vpop.f32.mrb[0].mxu0
    %v1695 = vadd.f32 0.0, %v1694
    %v1696 = vpop.f32.mrb[0].mxu0
    %v1697 = vpop.f32.mrb[0].mxu0
    %1698 = vdwg.mxu0
    %v1699 = vadd.f32 %v1612, %v1652
    %v1700 = vadd.f32 %v1613, %v1654
    %v1701 = vadd.f32 %v1614, %v1693
    %v1702 = vadd.f32 %v1615, %v1695
    %v1703 = vxor.u32 %v1605, 2147483648
    %v1704 = vxor.u32 %v1606, 2147483648
    %v1705 = vxor.u32 %v1607, 2147483648
    %v1706 = vmul.f32 %v1703, 1.442695
    %v1707 = vpow.pop %v1706
    %v1708 = vmul.f32 %v1704, 1.442695
    %v1709 = vpow.pop %v1708
    %v1710 = vmul.f32 %v1705, 1.442695
    %v1711 = vpow.pop %v1710
    %v1712 = vadd.f32 %v1707, 1.0
    %v1713 = vadd.f32 %v1709, 1.0
    %v1714 = vadd.f32 %v1711, 1.0
    %v1715 = vrcp.pop %v1712
    %v1716 = vmul.f32 1.0, %v1715
    %v1717 = vrcp.pop %v1713
    %v1718 = vmul.f32 1.0, %v1717
    %v1719 = vrcp.pop %v1714
    %v1720 = vmul.f32 1.0, %v1719
    %v1721 = vtanh.pop %v1608
    %v1722 = vmul.f32 %v1718, %v1485
    %v1723 = vmul.f32 %v1716, %v1721
    %v1724 = vadd.f32 %v1722, %v1723
    %v1725 = vtanh.pop %v1724
    %v1726 = vmul.f32 %v1720, %v1725
    %v1727 = vxor.u32 %v1699, 2147483648
    %v1728 = vxor.u32 %v1700, 2147483648
    %v1729 = vxor.u32 %v1701, 2147483648
    %v1730 = vmul.f32 %v1727, 1.442695
    %v1731 = vpow.pop %v1730
    %v1732 = vmul.f32 %v1728, 1.442695
    %v1733 = vpow.pop %v1732
    %v1734 = vmul.f32 %v1729, 1.442695
    %v1735 = vpow.pop %v1734
    %v1736 = vadd.f32 %v1731, 1.0
    %v1737 = vadd.f32 %v1733, 1.0
    %v1738 = vadd.f32 %v1735, 1.0
    %v1739 = vrcp.pop %v1736
    %v1740 = vmul.f32 1.0, %v1739
    %v1741 = vrcp.pop %v1737
    %v1742 = vmul.f32 1.0, %v1741
    %v1743 = vrcp.pop %v1738
    %v1744 = vmul.f32 1.0, %v1743
    %v1745 = vtanh.pop %v1702
    %v1746 = vmul.f32 %v1742, %v1509
    %v1747 = vmul.f32 %v1740, %v1745
    %v1748 = vadd.f32 %v1746, %v1747
    %v1749 = vtanh.pop %v1748
    %v1750 = vmul.f32 %v1744, %v1749
    %s1751 = scalar_lea.vmem [#allocation12], 8
    %1752 = vst [vmem:[%s1751] sm:$0xff] %v1726
    %s1753 = scalar_lea.vmem [#allocation13], 48
    %1754 = vst [vmem:[%s1753] sm:$0xff] %v1750
    %s1755 = smul.u32 2, 4
    %s1756 = smul.addr %s1755, 8
    %s1757 = scalar_lea.vmem [#allocation2], %s1756
    %v1758 = vld [vmem:[%s1757] sm:$0xff]
    %v1759 = vld [vmem:[%s1757 + $0x8] sm:$0xff]
    %v1760 = vld [vmem:[%s1757 + $0x10] sm:$0xff]
    %v1761 = vld [vmem:[%s1757 + $0x18] sm:$0xff]
    %v1762 = vpack.c.bf16 %v1726, %v1726
    %1763 = vmatprep.subr.bf16.mxu0 %v1062
    %1764 = vmatpush1.bf16.msra.mxu0 %v1061
    %1765 = vmatprep.subr.bf16.mxu0 %v1066
    %1766 = vmatpush1.bf16.msra.mxu0 %v1065
    %1767 = vmatprep.subr.bf16.mxu0 %v1070
    %1768 = vmatpush1.bf16.msra.mxu0 %v1069
    %1769 = vmatprep.subr.bf16.mxu0 %v1074
    %1770 = vmatpush1.bf16.msra.mxu0 %v1073
    %1771 = vmatprep.subr.bf16.mxu0 %v1078
    %1772 = vmatpush1.bf16.msra.mxu0 %v1077
    %1773 = vmatprep.subr.bf16.mxu0 %v1082
    %1774 = vmatpush1.bf16.msra.mxu0 %v1081
    %1775 = vmatprep.subr.bf16.mxu0 %v1086
    %1776 = vmatpush1.bf16.msra.mxu0 %v1085
    %1777 = vmatprep.subr.bf16.mxu0 %v1090
    %1778 = vmatpush1.bf16.msra.mxu0 %v1089
    %1779 = vmatprep.subr.bf16.mxu0 0
    %1780 = vmatpush1.bf16.msra.mxu0 0
    %1781 = vmatprep.subr.bf16.mxu0 0
    %1782 = vmatpush1.bf16.msra.mxu0 0
    %1783 = vmatprep.subr.bf16.mxu0 0
    %1784 = vmatpush1.bf16.msra.mxu0 0
    %1785 = vmatprep.subr.bf16.mxu0 0
    %1786 = vmatpush1.bf16.msra.mxu0 0
    %1787 = vmatprep.subr.bf16.mxu0 0
    %1788 = vmatpush1.bf16.msra.mxu0 0
    %1789 = vmatprep.subr.bf16.mxu0 0
    %1790 = vmatpush1.bf16.msra.mxu0 0
    %1791 = vmatprep.subr.bf16.mxu0 0
    %1792 = vmatpush1.bf16.msra.mxu0 0
    %1793 = vmatprep.subr.bf16.mxu0 0
    %1794 = vmatpush1.bf16.msra.mxu0 0
    %1795 = vmatprep.mubr.bf16.mxu0 0
    %1796 = vmatmul.mubr.bf16.gmra.mrb[0].mxu0 %v1762
    %v1797 = vpop.f32.mrb[0].mxu0
    %v1798 = vadd.f32 0.0, %v1797
    %v1799 = vpop.f32.mrb[0].mxu0
    %v1800 = vadd.f32 0.0, %v1799
    %v1801 = vpop.f32.mrb[0].mxu0
    %v1802 = vpop.f32.mrb[0].mxu0
    %1803 = vdwg.mxu0
    %1804 = vmatprep.subr.bf16.mxu0 %v1064
    %1805 = vmatpush1.bf16.msra.mxu0 %v1063
    %1806 = vmatprep.subr.bf16.mxu0 %v1068
    %1807 = vmatpush1.bf16.msra.mxu0 %v1067
    %1808 = vmatprep.subr.bf16.mxu0 %v1072
    %1809 = vmatpush1.bf16.msra.mxu0 %v1071
    %1810 = vmatprep.subr.bf16.mxu0 %v1076
    %1811 = vmatpush1.bf16.msra.mxu0 %v1075
    %1812 = vmatprep.subr.bf16.mxu0 %v1080
    %1813 = vmatpush1.bf16.msra.mxu0 %v1079
    %1814 = vmatprep.subr.bf16.mxu0 %v1084
    %1815 = vmatpush1.bf16.msra.mxu0 %v1083
    %1816 = vmatprep.subr.bf16.mxu0 %v1088
    %1817 = vmatpush1.bf16.msra.mxu0 %v1087
    %1818 = vmatprep.subr.bf16.mxu0 %v1092
    %1819 = vmatpush1.bf16.msra.mxu0 %v1091
    %1820 = vmatprep.subr.bf16.mxu0 0
    %1821 = vmatpush1.bf16.msra.mxu0 0
    %1822 = vmatprep.subr.bf16.mxu0 0
    %1823 = vmatpush1.bf16.msra.mxu0 0
    %1824 = vmatprep.subr.bf16.mxu0 0
    %1825 = vmatpush1.bf16.msra.mxu0 0
    %1826 = vmatprep.subr.bf16.mxu0 0
    %1827 = vmatpush1.bf16.msra.mxu0 0
    %1828 = vmatprep.subr.bf16.mxu0 0
    %1829 = vmatpush1.bf16.msra.mxu0 0
    %1830 = vmatprep.subr.bf16.mxu0 0
    %1831 = vmatpush1.bf16.msra.mxu0 0
    %1832 = vmatprep.subr.bf16.mxu0 0
    %1833 = vmatpush1.bf16.msra.mxu0 0
    %1834 = vmatprep.subr.bf16.mxu0 0
    %1835 = vmatpush1.bf16.msra.mxu0 0
    %1836 = vmatprep.mubr.bf16.mxu0 0
    %1837 = vmatmul.mubr.bf16.gmra.mrb[0].mxu0 %v1762
    %v1838 = vpop.f32.mrb[0].mxu0
    %v1839 = vadd.f32 0.0, %v1838
    %v1840 = vpop.f32.mrb[0].mxu0
    %v1841 = vadd.f32 0.0, %v1840
    %v1842 = vpop.f32.mrb[0].mxu0
    %v1843 = vpop.f32.mrb[0].mxu0
    %1844 = vdwg.mxu0
    %v1845 = vadd.f32 %v1758, %v1798
    %v1846 = vadd.f32 %v1759, %v1800
    %v1847 = vadd.f32 %v1760, %v1839
    %v1848 = vadd.f32 %v1761, %v1841
    %s1849 = smul.u32 5, 4
    %s1850 = smul.addr %s1849, 8
    %s1851 = scalar_lea.vmem [#allocation3], %s1850
    %v1852 = vld [vmem:[%s1851] sm:$0xff]
    %v1853 = vld [vmem:[%s1851 + $0x8] sm:$0xff]
    %v1854 = vld [vmem:[%s1851 + $0x10] sm:$0xff]
    %v1855 = vld [vmem:[%s1851 + $0x18] sm:$0xff]
    %v1856 = vpack.c.bf16 %v1750, %v1750
    %1857 = vmatprep.subr.bf16.mxu0 %v1315
    %1858 = vmatpush1.bf16.msra.mxu0 %v1314
    %1859 = vmatprep.subr.bf16.mxu0 %v1319
    %1860 = vmatpush1.bf16.msra.mxu0 %v1318
    %1861 = vmatprep.subr.bf16.mxu0 %v1323
    %1862 = vmatpush1.bf16.msra.mxu0 %v1322
    %1863 = vmatprep.subr.bf16.mxu0 %v1327
    %1864 = vmatpush1.bf16.msra.mxu0 %v1326
    %1865 = vmatprep.subr.bf16.mxu0 %v1331
    %1866 = vmatpush1.bf16.msra.mxu0 %v1330
    %1867 = vmatprep.subr.bf16.mxu0 %v1335
    %1868 = vmatpush1.bf16.msra.mxu0 %v1334
    %1869 = vmatprep.subr.bf16.mxu0 %v1339
    %1870 = vmatpush1.bf16.msra.mxu0 %v1338
    %1871 = vmatprep.subr.bf16.mxu0 %v1343
    %1872 = vmatpush1.bf16.msra.mxu0 %v1342
    %1873 = vmatprep.subr.bf16.mxu0 0
    %1874 = vmatpush1.bf16.msra.mxu0 0
    %1875 = vmatprep.subr.bf16.mxu0 0
    %1876 = vmatpush1.bf16.msra.mxu0 0
    %1877 = vmatprep.subr.bf16.mxu0 0
    %1878 = vmatpush1.bf16.msra.mxu0 0
    %1879 = vmatprep.subr.bf16.mxu0 0
    %1880 = vmatpush1.bf16.msra.mxu0 0
    %1881 = vmatprep.subr.bf16.mxu0 0
    %1882 = vmatpush1.bf16.msra.mxu0 0
    %1883 = vmatprep.subr.bf16.mxu0 0
    %1884 = vmatpush1.bf16.msra.mxu0 0
    %1885 = vmatprep.subr.bf16.mxu0 0
    %1886 = vmatpush1.bf16.msra.mxu0 0
    %1887 = vmatprep.subr.bf16.mxu0 0
    %1888 = vmatpush1.bf16.msra.mxu0 0
    %1889 = vmatprep.mubr.bf16.mxu0 0
    %1890 = vmatmul.mubr.bf16.gmra.mrb[0].mxu0 %v1856
    %v1891 = vpop.f32.mrb[0].mxu0
    %v1892 = vadd.f32 0.0, %v1891
    %v1893 = vpop.f32.mrb[0].mxu0
    %v1894 = vadd.f32 0.0, %v1893
    %v1895 = vpop.f32.mrb[0].mxu0
    %v1896 = vpop.f32.mrb[0].mxu0
    %1897 = vdwg.mxu0
    %1898 = vmatprep.subr.bf16.mxu0 %v1317
    %1899 = vmatpush1.bf16.msra.mxu0 %v1316
    %1900 = vmatprep.subr.bf16.mxu0 %v1321
    %1901 = vmatpush1.bf16.msra.mxu0 %v1320
    %1902 = vmatprep.subr.bf16.mxu0 %v1325
    %1903 = vmatpush1.bf16.msra.mxu0 %v1324
    %1904 = vmatprep.subr.bf16.mxu0 %v1329
    %1905 = vmatpush1.bf16.msra.mxu0 %v1328
    %1906 = vmatprep.subr.bf16.mxu0 %v1333
    %1907 = vmatpush1.bf16.msra.mxu0 %v1332
    %1908 = vmatprep.subr.bf16.mxu0 %v1337
    %1909 = vmatpush1.bf16.msra.mxu0 %v1336
    %1910 = vmatprep.subr.bf16.mxu0 %v1341
    %1911 = vmatpush1.bf16.msra.mxu0 %v1340
    %1912 = vmatprep.subr.bf16.mxu0 %v1345
    %1913 = vmatpush1.bf16.msra.mxu0 %v1344
    %1914 = vmatprep.subr.bf16.mxu0 0
    %1915 = vmatpush1.bf16.msra.mxu0 0
    %1916 = vmatprep.subr.bf16.mxu0 0
    %1917 = vmatpush1.bf16.msra.mxu0 0
    %1918 = vmatprep.subr.bf16.mxu0 0
    %1919 = vmatpush1.bf16.msra.mxu0 0
    %1920 = vmatprep.subr.bf16.mxu0 0
    %1921 = vmatpush1.bf16.msra.mxu0 0
    %1922 = vmatprep.subr.bf16.mxu0 0
    %1923 = vmatpush1.bf16.msra.mxu0 0
    %1924 = vmatprep.subr.bf16.mxu0 0
    %1925 = vmatpush1.bf16.msra.mxu0 0
    %1926 = vmatprep.subr.bf16.mxu0 0
    %1927 = vmatpush1.bf16.msra.mxu0 0
    %1928 = vmatprep.subr.bf16.mxu0 0
    %1929 = vmatpush1.bf16.msra.mxu0 0
    %1930 = vmatprep.mubr.bf16.mxu0 0
    %1931 = vmatmul.mubr.bf16.gmra.mrb[0].mxu0 %v1856
    %v1932 = vpop.f32.mrb[0].mxu0
    %v1933 = vadd.f32 0.0, %v1932
    %v1934 = vpop.f32.mrb[0].mxu0
    %v1935 = vadd.f32 0.0, %v1934
    %v1936 = vpop.f32.mrb[0].mxu0
    %v1937 = vpop.f32.mrb[0].mxu0
    %1938 = vdwg.mxu0
    %v1939 = vadd.f32 %v1852, %v1892
    %v1940 = vadd.f32 %v1853, %v1894
    %v1941 = vadd.f32 %v1854, %v1933
    %v1942 = vadd.f32 %v1855, %v1935
    %v1943 = vxor.u32 %v1845, 2147483648
    %v1944 = vxor.u32 %v1846, 2147483648
    %v1945 = vxor.u32 %v1847, 2147483648
    %v1946 = vmul.f32 %v1943, 1.442695
    %v1947 = vpow.pop %v1946
    %v1948 = vmul.f32 %v1944, 1.442695
    %v1949 = vpow.pop %v1948
    %v1950 = vmul.f32 %v1945, 1.442695
    %v1951 = vpow.pop %v1950
    %v1952 = vadd.f32 %v1947, 1.0
    %v1953 = vadd.f32 %v1949, 1.0
    %v1954 = vadd.f32 %v1951, 1.0
    %v1955 = vrcp.pop %v1952
    %v1956 = vmul.f32 1.0, %v1955
    %v1957 = vrcp.pop %v1953
    %v1958 = vmul.f32 1.0, %v1957
    %v1959 = vrcp.pop %v1954
    %v1960 = vmul.f32 1.0, %v1959
    %v1961 = vtanh.pop %v1848
    %v1962 = vmul.f32 %v1958, %v1724
    %v1963 = vmul.f32 %v1956, %v1961
    %v1964 = vadd.f32 %v1962, %v1963
    %v1965 = vtanh.pop %v1964
    %v1966 = vmul.f32 %v1960, %v1965
    %v1967 = vxor.u32 %v1939, 2147483648
    %v1968 = vxor.u32 %v1940, 2147483648
    %v1969 = vxor.u32 %v1941, 2147483648
    %v1970 = vmul.f32 %v1967, 1.442695
    %v1971 = vpow.pop %v1970
    %v1972 = vmul.f32 %v1968, 1.442695
    %v1973 = vpow.pop %v1972
    %v1974 = vmul.f32 %v1969, 1.442695
    %v1975 = vpow.pop %v1974
    %v1976 = vadd.f32 %v1971, 1.0
    %v1977 = vadd.f32 %v1973, 1.0
    %v1978 = vadd.f32 %v1975, 1.0
    %v1979 = vrcp.pop %v1976
    %v1980 = vmul.f32 1.0, %v1979
    %v1981 = vrcp.pop %v1977
    %v1982 = vmul.f32 1.0, %v1981
    %v1983 = vrcp.pop %v1978
    %v1984 = vmul.f32 1.0, %v1983
    %v1985 = vtanh.pop %v1942
    %v1986 = vmul.f32 %v1982, %v1748
    %v1987 = vmul.f32 %v1980, %v1985
    %v1988 = vadd.f32 %v1986, %v1987
    %v1989 = vtanh.pop %v1988
    %v1990 = vmul.f32 %v1984, %v1989
    %s1991 = scalar_lea.vmem [#allocation12], 16
    %1992 = vst [vmem:[%s1991] sm:$0xff] %v1966
    %s1993 = scalar_lea.vmem [#allocation13], 40
    %1994 = vst [vmem:[%s1993] sm:$0xff] %v1990
    %s1995 = smul.u32 3, 4
    %s1996 = smul.addr %s1995, 8
    %s1997 = scalar_lea.vmem [#allocation2], %s1996
    %v1998 = vld [vmem:[%s1997] sm:$0xff]
    %v1999 = vld [vmem:[%s1997 + $0x8] sm:$0xff]
    %v2000 = vld [vmem:[%s1997 + $0x10] sm:$0xff]
    %v2001 = vld [vmem:[%s1997 + $0x18] sm:$0xff]
    %v2002 = vpack.c.bf16 %v1966, %v1966
    %2003 = vmatprep.subr.bf16.mxu0 %v1062
    %2004 = vmatpush1.bf16.msra.mxu0 %v1061
    %2005 = vmatprep.subr.bf16.mxu0 %v1066
    %2006 = vmatpush1.bf16.msra.mxu0 %v1065
    %2007 = vmatprep.subr.bf16.mxu0 %v1070
    %2008 = vmatpush1.bf16.msra.mxu0 %v1069
    %2009 = vmatprep.subr.bf16.mxu0 %v1074
    %2010 = vmatpush1.bf16.msra.mxu0 %v1073
    %2011 = vmatprep.subr.bf16.mxu0 %v1078
    %2012 = vmatpush1.bf16.msra.mxu0 %v1077
    %2013 = vmatprep.subr.bf16.mxu0 %v1082
    %2014 = vmatpush1.bf16.msra.mxu0 %v1081
    %2015 = vmatprep.subr.bf16.mxu0 %v1086
    %2016 = vmatpush1.bf16.msra.mxu0 %v1085
    %2017 = vmatprep.subr.bf16.mxu0 %v1090
    %2018 = vmatpush1.bf16.msra.mxu0 %v1089
    %2019 = vmatprep.subr.bf16.mxu0 0
    %2020 = vmatpush1.bf16.msra.mxu0 0
    %2021 = vmatprep.subr.bf16.mxu0 0
    %2022 = vmatpush1.bf16.msra.mxu0 0
    %2023 = vmatprep.subr.bf16.mxu0 0
    %2024 = vmatpush1.bf16.msra.mxu0 0
    %2025 = vmatprep.subr.bf16.mxu0 0
    %2026 = vmatpush1.bf16.msra.mxu0 0
    %2027 = vmatprep.subr.bf16.mxu0 0
    %2028 = vmatpush1.bf16.msra.mxu0 0
    %2029 = vmatprep.subr.bf16.mxu0 0
    %2030 = vmatpush1.bf16.msra.mxu0 0
    %2031 = vmatprep.subr.bf16.mxu0 0
    %2032 = vmatpush1.bf16.msra.mxu0 0
    %2033 = vmatprep.subr.bf16.mxu0 0
    %2034 = vmatpush1.bf16.msra.mxu0 0
    %2035 = vmatprep.mubr.bf16.mxu0 0
    %2036 = vmatmul.mubr.bf16.gmra.mrb[0].mxu0 %v2002
    %v2037 = vpop.f32.mrb[0].mxu0
    %v2038 = vadd.f32 0.0, %v2037
    %v2039 = vpop.f32.mrb[0].mxu0
    %v2040 = vadd.f32 0.0, %v2039
    %v2041 = vpop.f32.mrb[0].mxu0
    %v2042 = vpop.f32.mrb[0].mxu0
    %2043 = vdwg.mxu0
    %2044 = vmatprep.subr.bf16.mxu0 %v1064
    %2045 = vmatpush1.bf16.msra.mxu0 %v1063
    %2046 = vmatprep.subr.bf16.mxu0 %v1068
    %2047 = vmatpush1.bf16.msra.mxu0 %v1067
    %2048 = vmatprep.subr.bf16.mxu0 %v1072
    %2049 = vmatpush1.bf16.msra.mxu0 %v1071
    %2050 = vmatprep.subr.bf16.mxu0 %v1076
    %2051 = vmatpush1.bf16.msra.mxu0 %v1075
    %2052 = vmatprep.subr.bf16.mxu0 %v1080
    %2053 = vmatpush1.bf16.msra.mxu0 %v1079
    %2054 = vmatprep.subr.bf16.mxu0 %v1084
    %2055 = vmatpush1.bf16.msra.mxu0 %v1083
    %2056 = vmatprep.subr.bf16.mxu0 %v1088
    %2057 = vmatpush1.bf16.msra.mxu0 %v1087
    %2058 = vmatprep.subr.bf16.mxu0 %v1092
    %2059 = vmatpush1.bf16.msra.mxu0 %v1091
    %2060 = vmatprep.subr.bf16.mxu0 0
    %2061 = vmatpush1.bf16.msra.mxu0 0
    %2062 = vmatprep.subr.bf16.mxu0 0
    %2063 = vmatpush1.bf16.msra.mxu0 0
    %2064 = vmatprep.subr.bf16.mxu0 0
    %2065 = vmatpush1.bf16.msra.mxu0 0
    %2066 = vmatprep.subr.bf16.mxu0 0
    %2067 = vmatpush1.bf16.msra.mxu0 0
    %2068 = vmatprep.subr.bf16.mxu0 0
    %2069 = vmatpush1.bf16.msra.mxu0 0
    %2070 = vmatprep.subr.bf16.mxu0 0
    %2071 = vmatpush1.bf16.msra.mxu0 0
    %2072 = vmatprep.subr.bf16.mxu0 0
    %2073 = vmatpush1.bf16.msra.mxu0 0
    %2074 = vmatprep.subr.bf16.mxu0 0
    %2075 = vmatpush1.bf16.msra.mxu0 0
    %2076 = vmatprep.mubr.bf16.mxu0 0
    %2077 = vmatmul.mubr.bf16.gmra.mrb[0].mxu0 %v2002
    %v2078 = vpop.f32.mrb[0].mxu0
    %v2079 = vadd.f32 0.0, %v2078
    %v2080 = vpop.f32.mrb[0].mxu0
    %v2081 = vadd.f32 0.0, %v2080
    %v2082 = vpop.f32.mrb[0].mxu0
    %v2083 = vpop.f32.mrb[0].mxu0
    %2084 = vdwg.mxu0
    %v2085 = vadd.f32 %v1998, %v2038
    %v2086 = vadd.f32 %v1999, %v2040
    %v2087 = vadd.f32 %v2000, %v2079
    %v2088 = vadd.f32 %v2001, %v2081
    %s2089 = smul.u32 4, 4
    %s2090 = smul.addr %s2089, 8
    %s2091 = scalar_lea.vmem [#allocation3], %s2090
    %v2092 = vld [vmem:[%s2091] sm:$0xff]
    %v2093 = vld [vmem:[%s2091 + $0x8] sm:$0xff]
    %v2094 = vld [vmem:[%s2091 + $0x10] sm:$0xff]
    %v2095 = vld [vmem:[%s2091 + $0x18] sm:$0xff]
    %v2096 = vpack.c.bf16 %v1990, %v1990
    %2097 = vmatprep.subr.bf16.mxu0 %v1315
    %2098 = vmatpush1.bf16.msra.mxu0 %v1314
    %2099 = vmatprep.subr.bf16.mxu0 %v1319
    %2100 = vmatpush1.bf16.msra.mxu0 %v1318
    %2101 = vmatprep.subr.bf16.mxu0 %v1323
    %2102 = vmatpush1.bf16.msra.mxu0 %v1322
    %2103 = vmatprep.subr.bf16.mxu0 %v1327
    %2104 = vmatpush1.bf16.msra.mxu0 %v1326
    %2105 = vmatprep.subr.bf16.mxu0 %v1331
    %2106 = vmatpush1.bf16.msra.mxu0 %v1330
    %2107 = vmatprep.subr.bf16.mxu0 %v1335
    %2108 = vmatpush1.bf16.msra.mxu0 %v1334
    %2109 = vmatprep.subr.bf16.mxu0 %v1339
    %2110 = vmatpush1.bf16.msra.mxu0 %v1338
    %2111 = vmatprep.subr.bf16.mxu0 %v1343
    %2112 = vmatpush1.bf16.msra.mxu0 %v1342
    %2113 = vmatprep.subr.bf16.mxu0 0
    %2114 = vmatpush1.bf16.msra.mxu0 0
    %2115 = vmatprep.subr.bf16.mxu0 0
    %2116 = vmatpush1.bf16.msra.mxu0 0
    %2117 = vmatprep.subr.bf16.mxu0 0
    %2118 = vmatpush1.bf16.msra.mxu0 0
    %2119 = vmatprep.subr.bf16.mxu0 0
    %2120 = vmatpush1.bf16.msra.mxu0 0
    %2121 = vmatprep.subr.bf16.mxu0 0
    %2122 = vmatpush1.bf16.msra.mxu0 0
    %2123 = vmatprep.subr.bf16.mxu0 0
    %2124 = vmatpush1.bf16.msra.mxu0 0
    %2125 = vmatprep.subr.bf16.mxu0 0
    %2126 = vmatpush1.bf16.msra.mxu0 0
    %2127 = vmatprep.subr.bf16.mxu0 0
    %2128 = vmatpush1.bf16.msra.mxu0 0
    %2129 = vmatprep.mubr.bf16.mxu0 0
    %2130 = vmatmul.mubr.bf16.gmra.mrb[0].mxu0 %v2096
    %v2131 = vpop.f32.mrb[0].mxu0
    %v2132 = vadd.f32 0.0, %v2131
    %v2133 = vpop.f32.mrb[0].mxu0
    %v2134 = vadd.f32 0.0, %v2133
    %v2135 = vpop.f32.mrb[0].mxu0
    %v2136 = vpop.f32.mrb[0].mxu0
    %2137 = vdwg.mxu0
    %2138 = vmatprep.subr.bf16.mxu0 %v1317
    %2139 = vmatpush1.bf16.msra.mxu0 %v1316
    %2140 = vmatprep.subr.bf16.mxu0 %v1321
    %2141 = vmatpush1.bf16.msra.mxu0 %v1320
    %2142 = vmatprep.subr.bf16.mxu0 %v1325
    %2143 = vmatpush1.bf16.msra.mxu0 %v1324
    %2144 = vmatprep.subr.bf16.mxu0 %v1329
    %2145 = vmatpush1.bf16.msra.mxu0 %v1328
    %2146 = vmatprep.subr.bf16.mxu0 %v1333
    %2147 = vmatpush1.bf16.msra.mxu0 %v1332
    %2148 = vmatprep.subr.bf16.mxu0 %v1337
    %2149 = vmatpush1.bf16.msra.mxu0 %v1336
    %2150 = vmatprep.subr.bf16.mxu0 %v1341
    %2151 = vmatpush1.bf16.msra.mxu0 %v1340
    %2152 = vmatprep.subr.bf16.mxu0 %v1345
    %2153 = vmatpush1.bf16.msra.mxu0 %v1344
    %2154 = vmatprep.subr.bf16.mxu0 0
    %2155 = vmatpush1.bf16.msra.mxu0 0
    %2156 = vmatprep.subr.bf16.mxu0 0
    %2157 = vmatpush1.bf16.msra.mxu0 0
    %2158 = vmatprep.subr.bf16.mxu0 0
    %2159 = vmatpush1.bf16.msra.mxu0 0
    %2160 = vmatprep.subr.bf16.mxu0 0
    %2161 = vmatpush1.bf16.msra.mxu0 0
    %2162 = vmatprep.subr.bf16.mxu0 0
    %2163 = vmatpush1.bf16.msra.mxu0 0
    %2164 = vmatprep.subr.bf16.mxu0 0
    %2165 = vmatpush1.bf16.msra.mxu0 0
    %2166 = vmatprep.subr.bf16.mxu0 0
    %2167 = vmatpush1.bf16.msra.mxu0 0
    %2168 = vmatprep.subr.bf16.mxu0 0
    %2169 = vmatpush1.bf16.msra.mxu0 0
    %2170 = vmatprep.mubr.bf16.mxu0 0
    %2171 = vmatmul.mubr.bf16.gmra.mrb[0].mxu0 %v2096
    %v2172 = vpop.f32.mrb[0].mxu0
    %v2173 = vadd.f32 0.0, %v2172
    %v2174 = vpop.f32.mrb[0].mxu0
    %v2175 = vadd.f32 0.0, %v2174
    %v2176 = vpop.f32.mrb[0].mxu0
    %v2177 = vpop.f32.mrb[0].mxu0
    %2178 = vdwg.mxu0
    %v2179 = vadd.f32 %v2092, %v2132
    %v2180 = vadd.f32 %v2093, %v2134
    %v2181 = vadd.f32 %v2094, %v2173
    %v2182 = vadd.f32 %v2095, %v2175
    %v2183 = vxor.u32 %v2085, 2147483648
    %v2184 = vxor.u32 %v2086, 2147483648
    %v2185 = vxor.u32 %v2087, 2147483648
    %v2186 = vmul.f32 %v2183, 1.442695
    %v2187 = vpow.pop %v2186
    %v2188 = vmul.f32 %v2184, 1.442695
    %v2189 = vpow.pop %v2188
    %v2190 = vmul.f32 %v2185, 1.442695
    %v2191 = vpow.pop %v2190
    %v2192 = vadd.f32 %v2187, 1.0
    %v2193 = vadd.f32 %v2189, 1.0
    %v2194 = vadd.f32 %v2191, 1.0
    %v2195 = vrcp.pop %v2192
    %v2196 = vmul.f32 1.0, %v2195
    %v2197 = vrcp.pop %v2193
    %v2198 = vmul.f32 1.0, %v2197
    %v2199 = vrcp.pop %v2194
    %v2200 = vmul.f32 1.0, %v2199
    %v2201 = vtanh.pop %v2088
    %v2202 = vmul.f32 %v2198, %v1964
    %v2203 = vmul.f32 %v2196, %v2201
    %v2204 = vadd.f32 %v2202, %v2203
    %v2205 = vtanh.pop %v2204
    %v2206 = vmul.f32 %v2200, %v2205
    %v2207 = vxor.u32 %v2179, 2147483648
    %v2208 = vxor.u32 %v2180, 2147483648
    %v2209 = vxor.u32 %v2181, 2147483648
    %v2210 = vmul.f32 %v2207, 1.442695
    %v2211 = vpow.pop %v2210
    %v2212 = vmul.f32 %v2208, 1.442695
    %v2213 = vpow.pop %v2212
    %v2214 = vmul.f32 %v2209, 1.442695
    %v2215 = vpow.pop %v2214
    %v2216 = vadd.f32 %v2211, 1.0
    %v2217 = vadd.f32 %v2213, 1.0
    %v2218 = vadd.f32 %v2215, 1.0
    %v2219 = vrcp.pop %v2216
    %v2220 = vmul.f32 1.0, %v2219
    %v2221 = vrcp.pop %v2217
    %v2222 = vmul.f32 1.0, %v2221
    %v2223 = vrcp.pop %v2218
    %v2224 = vmul.f32 1.0, %v2223
    %v2225 = vtanh.pop %v2182
    %v2226 = vmul.f32 %v2222, %v1988
    %v2227 = vmul.f32 %v2220, %v2225
    %v2228 = vadd.f32 %v2226, %v2227
    %v2229 = vtanh.pop %v2228
    %v2230 = vmul.f32 %v2224, %v2229
    %s2231 = scalar_lea.vmem [#allocation12], 24
    %2232 = vst [vmem:[%s2231] sm:$0xff] %v2206
    %s2233 = scalar_lea.vmem [#allocation13], 32
    %2234 = vst [vmem:[%s2233] sm:$0xff] %v2230
    %s2235 = smul.addr %s2089, 8
    %s2236 = scalar_lea.vmem [#allocation2], %s2235
    %v2237 = vld [vmem:[%s2236] sm:$0xff]
    %v2238 = vld [vmem:[%s2236 + $0x8] sm:$0xff]
    %v2239 = vld [vmem:[%s2236 + $0x10] sm:$0xff]
    %v2240 = vld [vmem:[%s2236 + $0x18] sm:$0xff]
    %v2241 = vpack.c.bf16 %v2206, %v2206
    %2242 = vmatprep.subr.bf16.mxu0 %v1062
    %2243 = vmatpush1.bf16.msra.mxu0 %v1061
    %2244 = vmatprep.subr.bf16.mxu0 %v1066
    %2245 = vmatpush1.bf16.msra.mxu0 %v1065
    %2246 = vmatprep.subr.bf16.mxu0 %v1070
    %2247 = vmatpush1.bf16.msra.mxu0 %v1069
    %2248 = vmatprep.subr.bf16.mxu0 %v1074
    %2249 = vmatpush1.bf16.msra.mxu0 %v1073
    %2250 = vmatprep.subr.bf16.mxu0 %v1078
    %2251 = vmatpush1.bf16.msra.mxu0 %v1077
    %2252 = vmatprep.subr.bf16.mxu0 %v1082
    %2253 = vmatpush1.bf16.msra.mxu0 %v1081
    %2254 = vmatprep.subr.bf16.mxu0 %v1086
    %2255 = vmatpush1.bf16.msra.mxu0 %v1085
    %2256 = vmatprep.subr.bf16.mxu0 %v1090
    %2257 = vmatpush1.bf16.msra.mxu0 %v1089
    %2258 = vmatprep.subr.bf16.mxu0 0
    %2259 = vmatpush1.bf16.msra.mxu0 0
    %2260 = vmatprep.subr.bf16.mxu0 0
    %2261 = vmatpush1.bf16.msra.mxu0 0
    %2262 = vmatprep.subr.bf16.mxu0 0
    %2263 = vmatpush1.bf16.msra.mxu0 0
    %2264 = vmatprep.subr.bf16.mxu0 0
    %2265 = vmatpush1.bf16.msra.mxu0 0
    %2266 = vmatprep.subr.bf16.mxu0 0
    %2267 = vmatpush1.bf16.msra.mxu0 0
    %2268 = vmatprep.subr.bf16.mxu0 0
    %2269 = vmatpush1.bf16.msra.mxu0 0
    %2270 = vmatprep.subr.bf16.mxu0 0
    %2271 = vmatpush1.bf16.msra.mxu0 0
    %2272 = vmatprep.subr.bf16.mxu0 0
    %2273 = vmatpush1.bf16.msra.mxu0 0
    %2274 = vmatprep.mubr.bf16.mxu0 0
    %2275 = vmatmul.mubr.bf16.gmra.mrb[0].mxu0 %v2241
    %v2276 = vpop.f32.mrb[0].mxu0
    %v2277 = vadd.f32 0.0, %v2276
    %v2278 = vpop.f32.mrb[0].mxu0
    %v2279 = vadd.f32 0.0, %v2278
    %v2280 = vpop.f32.mrb[0].mxu0
    %v2281 = vpop.f32.mrb[0].mxu0
    %2282 = vdwg.mxu0
    %2283 = vmatprep.subr.bf16.mxu0 %v1064
    %2284 = vmatpush1.bf16.msra.mxu0 %v1063
    %2285 = vmatprep.subr.bf16.mxu0 %v1068
    %2286 = vmatpush1.bf16.msra.mxu0 %v1067
    %2287 = vmatprep.subr.bf16.mxu0 %v1072
    %2288 = vmatpush1.bf16.msra.mxu0 %v1071
    %2289 = vmatprep.subr.bf16.mxu0 %v1076
    %2290 = vmatpush1.bf16.msra.mxu0 %v1075
    %2291 = vmatprep.subr.bf16.mxu0 %v1080
    %2292 = vmatpush1.bf16.msra.mxu0 %v1079
    %2293 = vmatprep.subr.bf16.mxu0 %v1084
    %2294 = vmatpush1.bf16.msra.mxu0 %v1083
    %2295 = vmatprep.subr.bf16.mxu0 %v1088
    %2296 = vmatpush1.bf16.msra.mxu0 %v1087
    %2297 = vmatprep.subr.bf16.mxu0 %v1092
    %2298 = vmatpush1.bf16.msra.mxu0 %v1091
    %2299 = vmatprep.subr.bf16.mxu0 0
    %2300 = vmatpush1.bf16.msra.mxu0 0
    %2301 = vmatprep.subr.bf16.mxu0 0
    %2302 = vmatpush1.bf16.msra.mxu0 0
    %2303 = vmatprep.subr.bf16.mxu0 0
    %2304 = vmatpush1.bf16.msra.mxu0 0
    %2305 = vmatprep.subr.bf16.mxu0 0
    %2306 = vmatpush1.bf16.msra.mxu0 0
    %2307 = vmatprep.subr.bf16.mxu0 0
    %2308 = vmatpush1.bf16.msra.mxu0 0
    %2309 = vmatprep.subr.bf16.mxu0 0
    %2310 = vmatpush1.bf16.msra.mxu0 0
    %2311 = vmatprep.subr.bf16.mxu0 0
    %2312 = vmatpush1.bf16.msra.mxu0 0
    %2313 = vmatprep.subr.bf16.mxu0 0
    %2314 = vmatpush1.bf16.msra.mxu0 0
    %2315 = vmatprep.mubr.bf16.mxu0 0
    %2316 = vmatmul.mubr.bf16.gmra.mrb[0].mxu0 %v2241
    %v2317 = vpop.f32.mrb[0].mxu0
    %v2318 = vadd.f32 0.0, %v2317
    %v2319 = vpop.f32.mrb[0].mxu0
    %v2320 = vadd.f32 0.0, %v2319
    %v2321 = vpop.f32.mrb[0].mxu0
    %v2322 = vpop.f32.mrb[0].mxu0
    %2323 = vdwg.mxu0
    %v2324 = vadd.f32 %v2237, %v2277
    %v2325 = vadd.f32 %v2238, %v2279
    %v2326 = vadd.f32 %v2239, %v2318
    %v2327 = vadd.f32 %v2240, %v2320
    %s2328 = smul.addr %s1995, 8
    %s2329 = scalar_lea.vmem [#allocation3], %s2328
    %v2330 = vld [vmem:[%s2329] sm:$0xff]
    %v2331 = vld [vmem:[%s2329 + $0x8] sm:$0xff]
    %v2332 = vld [vmem:[%s2329 + $0x10] sm:$0xff]
    %v2333 = vld [vmem:[%s2329 + $0x18] sm:$0xff]
    %v2334 = vpack.c.bf16 %v2230, %v2230
    %2335 = vmatprep.subr.bf16.mxu0 %v1315
    %2336 = vmatpush1.bf16.msra.mxu0 %v1314
    %2337 = vmatprep.subr.bf16.mxu0 %v1319
    %2338 = vmatpush1.bf16.msra.mxu0 %v1318
    %2339 = vmatprep.subr.bf16.mxu0 %v1323
    %2340 = vmatpush1.bf16.msra.mxu0 %v1322
    %2341 = vmatprep.subr.bf16.mxu0 %v1327
    %2342 = vmatpush1.bf16.msra.mxu0 %v1326
    %2343 = vmatprep.subr.bf16.mxu0 %v1331
    %2344 = vmatpush1.bf16.msra.mxu0 %v1330
    %2345 = vmatprep.subr.bf16.mxu0 %v1335
    %2346 = vmatpush1.bf16.msra.mxu0 %v1334
    %2347 = vmatprep.subr.bf16.mxu0 %v1339
    %2348 = vmatpush1.bf16.msra.mxu0 %v1338
    %2349 = vmatprep.subr.bf16.mxu0 %v1343
    %2350 = vmatpush1.bf16.msra.mxu0 %v1342
    %2351 = vmatprep.subr.bf16.mxu0 0
    %2352 = vmatpush1.bf16.msra.mxu0 0
    %2353 = vmatprep.subr.bf16.mxu0 0
    %2354 = vmatpush1.bf16.msra.mxu0 0
    %2355 = vmatprep.subr.bf16.mxu0 0
    %2356 = vmatpush1.bf16.msra.mxu0 0
    %2357 = vmatprep.subr.bf16.mxu0 0
    %2358 = vmatpush1.bf16.msra.mxu0 0
    %2359 = vmatprep.subr.bf16.mxu0 0
    %2360 = vmatpush1.bf16.msra.mxu0 0
    %2361 = vmatprep.subr.bf16.mxu0 0
    %2362 = vmatpush1.bf16.msra.mxu0 0
    %2363 = vmatprep.subr.bf16.mxu0 0
    %2364 = vmatpush1.bf16.msra.mxu0 0
    %2365 = vmatprep.subr.bf16.mxu0 0
    %2366 = vmatpush1.bf16.msra.mxu0 0
    %2367 = vmatprep.mubr.bf16.mxu0 0
    %2368 = vmatmul.mubr.bf16.gmra.mrb[0].mxu0 %v2334
    %v2369 = vpop.f32.mrb[0].mxu0
    %v2370 = vadd.f32 0.0, %v2369
    %v2371 = vpop.f32.mrb[0].mxu0
    %v2372 = vadd.f32 0.0, %v2371
    %v2373 = vpop.f32.mrb[0].mxu0
    %v2374 = vpop.f32.mrb[0].mxu0
    %2375 = vdwg.mxu0
    %2376 = vmatprep.subr.bf16.mxu0 %v1317
    %2377 = vmatpush1.bf16.msra.mxu0 %v1316
    %2378 = vmatprep.subr.bf16.mxu0 %v1321
    %2379 = vmatpush1.bf16.msra.mxu0 %v1320
    %2380 = vmatprep.subr.bf16.mxu0 %v1325
    %2381 = vmatpush1.bf16.msra.mxu0 %v1324
    %2382 = vmatprep.subr.bf16.mxu0 %v1329
    %2383 = vmatpush1.bf16.msra.mxu0 %v1328
    %2384 = vmatprep.subr.bf16.mxu0 %v1333
    %2385 = vmatpush1.bf16.msra.mxu0 %v1332
    %2386 = vmatprep.subr.bf16.mxu0 %v1337
    %2387 = vmatpush1.bf16.msra.mxu0 %v1336
    %2388 = vmatprep.subr.bf16.mxu0 %v1341
    %2389 = vmatpush1.bf16.msra.mxu0 %v1340
    %2390 = vmatprep.subr.bf16.mxu0 %v1345
    %2391 = vmatpush1.bf16.msra.mxu0 %v1344
    %2392 = vmatprep.subr.bf16.mxu0 0
    %2393 = vmatpush1.bf16.msra.mxu0 0
    %2394 = vmatprep.subr.bf16.mxu0 0
    %2395 = vmatpush1.bf16.msra.mxu0 0
    %2396 = vmatprep.subr.bf16.mxu0 0
    %2397 = vmatpush1.bf16.msra.mxu0 0
    %2398 = vmatprep.subr.bf16.mxu0 0
    %2399 = vmatpush1.bf16.msra.mxu0 0
    %2400 = vmatprep.subr.bf16.mxu0 0
    %2401 = vmatpush1.bf16.msra.mxu0 0
    %2402 = vmatprep.subr.bf16.mxu0 0
    %2403 = vmatpush1.bf16.msra.mxu0 0
    %2404 = vmatprep.subr.bf16.mxu0 0
    %2405 = vmatpush1.bf16.msra.mxu0 0
    %2406 = vmatprep.subr.bf16.mxu0 0
    %2407 = vmatpush1.bf16.msra.mxu0 0
    %2408 = vmatprep.mubr.bf16.mxu0 0
    %2409 = vmatmul.mubr.bf16.gmra.mrb[0].mxu0 %v2334
    %v2410 = vpop.f32.mrb[0].mxu0
    %v2411 = vadd.f32 0.0, %v2410
    %v2412 = vpop.f32.mrb[0].mxu0
    %v2413 = vadd.f32 0.0, %v2412
    %v2414 = vpop.f32.mrb[0].mxu0
    %v2415 = vpop.f32.mrb[0].mxu0
    %2416 = vdwg.mxu0
    %v2417 = vadd.f32 %v2330, %v2370
    %v2418 = vadd.f32 %v2331, %v2372
    %v2419 = vadd.f32 %v2332, %v2411
    %v2420 = vadd.f32 %v2333, %v2413
    %v2421 = vxor.u32 %v2324, 2147483648
    %v2422 = vxor.u32 %v2325, 2147483648
    %v2423 = vxor.u32 %v2326, 2147483648
    %v2424 = vmul.f32 %v2421, 1.442695
    %v2425 = vpow.pop %v2424
    %v2426 = vmul.f32 %v2422, 1.442695
    %v2427 = vpow.pop %v2426
    %v2428 = vmul.f32 %v2423, 1.442695
    %v2429 = vpow.pop %v2428
    %v2430 = vadd.f32 %v2425, 1.0
    %v2431 = vadd.f32 %v2427, 1.0
    %v2432 = vadd.f32 %v2429, 1.0
    %v2433 = vrcp.pop %v2430
    %v2434 = vmul.f32 1.0, %v2433
    %v2435 = vrcp.pop %v2431
    %v2436 = vmul.f32 1.0, %v2435
    %v2437 = vrcp.pop %v2432
    %v2438 = vmul.f32 1.0, %v2437
    %v2439 = vtanh.pop %v2327
    %v2440 = vmul.f32 %v2436, %v2204
    %v2441 = vmul.f32 %v2434, %v2439
    %v2442 = vadd.f32 %v2440, %v2441
    %v2443 = vtanh.pop %v2442
    %v2444 = vmul.f32 %v2438, %v2443
    %v2445 = vxor.u32 %v2417, 2147483648
    %v2446 = vxor.u32 %v2418, 2147483648
    %v2447 = vxor.u32 %v2419, 2147483648
    %v2448 = vmul.f32 %v2445, 1.442695
    %v2449 = vpow.pop %v2448
    %v2450 = vmul.f32 %v2446, 1.442695
    %v2451 = vpow.pop %v2450
    %v2452 = vmul.f32 %v2447, 1.442695
    %v2453 = vpow.pop %v2452
    %v2454 = vadd.f32 %v2449, 1.0
    %v2455 = vadd.f32 %v2451, 1.0
    %v2456 = vadd.f32 %v2453, 1.0
    %v2457 = vrcp.pop %v2454
    %v2458 = vmul.f32 1.0, %v2457
    %v2459 = vrcp.pop %v2455
    %v2460 = vmul.f32 1.0, %v2459
    %v2461 = vrcp.pop %v2456
    %v2462 = vmul.f32 1.0, %v2461
    %v2463 = vtanh.pop %v2420
    %v2464 = vmul.f32 %v2460, %v2228
    %v2465 = vmul.f32 %v2458, %v2463
    %v2466 = vadd.f32 %v2464, %v2465
    %v2467 = vtanh.pop %v2466
    %v2468 = vmul.f32 %v2462, %v2467
    %s2469 = scalar_lea.vmem [#allocation12], 32
    %2470 = vst [vmem:[%s2469] sm:$0xff] %v2444
    %s2471 = scalar_lea.vmem [#allocation13], 24
    %2472 = vst [vmem:[%s2471] sm:$0xff] %v2468
    %s2473 = smul.addr %s1849, 8
    %s2474 = scalar_lea.vmem [#allocation2], %s2473
    %v2475 = vld [vmem:[%s2474] sm:$0xff]
    %v2476 = vld [vmem:[%s2474 + $0x8] sm:$0xff]
    %v2477 = vld [vmem:[%s2474 + $0x10] sm:$0xff]
    %v2478 = vld [vmem:[%s2474 + $0x18] sm:$0xff]
    %v2479 = vpack.c.bf16 %v2444, %v2444
    %2480 = vmatprep.subr.bf16.mxu0 %v1062
    %2481 = vmatpush1.bf16.msra.mxu0 %v1061
    %2482 = vmatprep.subr.bf16.mxu0 %v1066
    %2483 = vmatpush1.bf16.msra.mxu0 %v1065
    %2484 = vmatprep.subr.bf16.mxu0 %v1070
    %2485 = vmatpush1.bf16.msra.mxu0 %v1069
    %2486 = vmatprep.subr.bf16.mxu0 %v1074
    %2487 = vmatpush1.bf16.msra.mxu0 %v1073
    %2488 = vmatprep.subr.bf16.mxu0 %v1078
    %2489 = vmatpush1.bf16.msra.mxu0 %v1077
    %2490 = vmatprep.subr.bf16.mxu0 %v1082
    %2491 = vmatpush1.bf16.msra.mxu0 %v1081
    %2492 = vmatprep.subr.bf16.mxu0 %v1086
    %2493 = vmatpush1.bf16.msra.mxu0 %v1085
    %2494 = vmatprep.subr.bf16.mxu0 %v1090
    %2495 = vmatpush1.bf16.msra.mxu0 %v1089
    %2496 = vmatprep.subr.bf16.mxu0 0
    %2497 = vmatpush1.bf16.msra.mxu0 0
    %2498 = vmatprep.subr.bf16.mxu0 0
    %2499 = vmatpush1.bf16.msra.mxu0 0
    %2500 = vmatprep.subr.bf16.mxu0 0
    %2501 = vmatpush1.bf16.msra.mxu0 0
    %2502 = vmatprep.subr.bf16.mxu0 0
    %2503 = vmatpush1.bf16.msra.mxu0 0
    %2504 = vmatprep.subr.bf16.mxu0 0
    %2505 = vmatpush1.bf16.msra.mxu0 0
    %2506 = vmatprep.subr.bf16.mxu0 0
    %2507 = vmatpush1.bf16.msra.mxu0 0
    %2508 = vmatprep.subr.bf16.mxu0 0
    %2509 = vmatpush1.bf16.msra.mxu0 0
    %2510 = vmatprep.subr.bf16.mxu0 0
    %2511 = vmatpush1.bf16.msra.mxu0 0
    %2512 = vmatprep.mubr.bf16.mxu0 0
    %2513 = vmatmul.mubr.bf16.gmra.mrb[0].mxu0 %v2479
    %v2514 = vpop.f32.mrb[0].mxu0
    %v2515 = vadd.f32 0.0, %v2514
    %v2516 = vpop.f32.mrb[0].mxu0
    %v2517 = vadd.f32 0.0, %v2516
    %v2518 = vpop.f32.mrb[0].mxu0
    %v2519 = vpop.f32.mrb[0].mxu0
    %2520 = vdwg.mxu0
    %2521 = vmatprep.subr.bf16.mxu0 %v1064
    %2522 = vmatpush1.bf16.msra.mxu0 %v1063
    %2523 = vmatprep.subr.bf16.mxu0 %v1068
    %2524 = vmatpush1.bf16.msra.mxu0 %v1067
    %2525 = vmatprep.subr.bf16.mxu0 %v1072
    %2526 = vmatpush1.bf16.msra.mxu0 %v1071
    %2527 = vmatprep.subr.bf16.mxu0 %v1076
    %2528 = vmatpush1.bf16.msra.mxu0 %v1075
    %2529 = vmatprep.subr.bf16.mxu0 %v1080
    %2530 = vmatpush1.bf16.msra.mxu0 %v1079
    %2531 = vmatprep.subr.bf16.mxu0 %v1084
    %2532 = vmatpush1.bf16.msra.mxu0 %v1083
    %2533 = vmatprep.subr.bf16.mxu0 %v1088
    %2534 = vmatpush1.bf16.msra.mxu0 %v1087
    %2535 = vmatprep.subr.bf16.mxu0 %v1092
    %2536 = vmatpush1.bf16.msra.mxu0 %v1091
    %2537 = vmatprep.subr.bf16.mxu0 0
    %2538 = vmatpush1.bf16.msra.mxu0 0
    %2539 = vmatprep.subr.bf16.mxu0 0
    %2540 = vmatpush1.bf16.msra.mxu0 0
    %2541 = vmatprep.subr.bf16.mxu0 0
    %2542 = vmatpush1.bf16.msra.mxu0 0
    %2543 = vmatprep.subr.bf16.mxu0 0
    %2544 = vmatpush1.bf16.msra.mxu0 0
    %2545 = vmatprep.subr.bf16.mxu0 0
    %2546 = vmatpush1.bf16.msra.mxu0 0
    %2547 = vmatprep.subr.bf16.mxu0 0
    %2548 = vmatpush1.bf16.msra.mxu0 0
    %2549 = vmatprep.subr.bf16.mxu0 0
    %2550 = vmatpush1.bf16.msra.mxu0 0
    %2551 = vmatprep.subr.bf16.mxu0 0
    %2552 = vmatpush1.bf16.msra.mxu0 0
    %2553 = vmatprep.mubr.bf16.mxu0 0
    %2554 = vmatmul.mubr.bf16.gmra.mrb[0].mxu0 %v2479
    %v2555 = vpop.f32.mrb[0].mxu0
    %v2556 = vadd.f32 0.0, %v2555
    %v2557 = vpop.f32.mrb[0].mxu0
    %v2558 = vadd.f32 0.0, %v2557
    %v2559 = vpop.f32.mrb[0].mxu0
    %v2560 = vpop.f32.mrb[0].mxu0
    %2561 = vdwg.mxu0
    %v2562 = vadd.f32 %v2475, %v2515
    %v2563 = vadd.f32 %v2476, %v2517
    %v2564 = vadd.f32 %v2477, %v2556
    %v2565 = vadd.f32 %v2478, %v2558
    %s2566 = smul.addr %s1755, 8
    %s2567 = scalar_lea.vmem [#allocation3], %s2566
    %v2568 = vld [vmem:[%s2567] sm:$0xff]
    %v2569 = vld [vmem:[%s2567 + $0x8] sm:$0xff]
    %v2570 = vld [vmem:[%s2567 + $0x10] sm:$0xff]
    %v2571 = vld [vmem:[%s2567 + $0x18] sm:$0xff]
    %v2572 = vpack.c.bf16 %v2468, %v2468
    %2573 = vmatprep.subr.bf16.mxu0 %v1315
    %2574 = vmatpush1.bf16.msra.mxu0 %v1314
    %2575 = vmatprep.subr.bf16.mxu0 %v1319
    %2576 = vmatpush1.bf16.msra.mxu0 %v1318
    %2577 = vmatprep.subr.bf16.mxu0 %v1323
    %2578 = vmatpush1.bf16.msra.mxu0 %v1322
    %2579 = vmatprep.subr.bf16.mxu0 %v1327
    %2580 = vmatpush1.bf16.msra.mxu0 %v1326
    %2581 = vmatprep.subr.bf16.mxu0 %v1331
    %2582 = vmatpush1.bf16.msra.mxu0 %v1330
    %2583 = vmatprep.subr.bf16.mxu0 %v1335
    %2584 = vmatpush1.bf16.msra.mxu0 %v1334
    %2585 = vmatprep.subr.bf16.mxu0 %v1339
    %2586 = vmatpush1.bf16.msra.mxu0 %v1338
    %2587 = vmatprep.subr.bf16.mxu0 %v1343
    %2588 = vmatpush1.bf16.msra.mxu0 %v1342
    %2589 = vmatprep.subr.bf16.mxu0 0
    %2590 = vmatpush1.bf16.msra.mxu0 0
    %2591 = vmatprep.subr.bf16.mxu0 0
    %2592 = vmatpush1.bf16.msra.mxu0 0
    %2593 = vmatprep.subr.bf16.mxu0 0
    %2594 = vmatpush1.bf16.msra.mxu0 0
    %2595 = vmatprep.subr.bf16.mxu0 0
    %2596 = vmatpush1.bf16.msra.mxu0 0
    %2597 = vmatprep.subr.bf16.mxu0 0
    %2598 = vmatpush1.bf16.msra.mxu0 0
    %2599 = vmatprep.subr.bf16.mxu0 0
    %2600 = vmatpush1.bf16.msra.mxu0 0
    %2601 = vmatprep.subr.bf16.mxu0 0
    %2602 = vmatpush1.bf16.msra.mxu0 0
    %2603 = vmatprep.subr.bf16.mxu0 0
    %2604 = vmatpush1.bf16.msra.mxu0 0
    %2605 = vmatprep.mubr.bf16.mxu0 0
    %2606 = vmatmul.mubr.bf16.gmra.mrb[0].mxu0 %v2572
    %v2607 = vpop.f32.mrb[0].mxu0
    %v2608 = vadd.f32 0.0, %v2607
    %v2609 = vpop.f32.mrb[0].mxu0
    %v2610 = vadd.f32 0.0, %v2609
    %v2611 = vpop.f32.mrb[0].mxu0
    %v2612 = vpop.f32.mrb[0].mxu0
    %2613 = vdwg.mxu0
    %2614 = vmatprep.subr.bf16.mxu0 %v1317
    %2615 = vmatpush1.bf16.msra.mxu0 %v1316
    %2616 = vmatprep.subr.bf16.mxu0 %v1321
    %2617 = vmatpush1.bf16.msra.mxu0 %v1320
    %2618 = vmatprep.subr.bf16.mxu0 %v1325
    %2619 = vmatpush1.bf16.msra.mxu0 %v1324
    %2620 = vmatprep.subr.bf16.mxu0 %v1329
    %2621 = vmatpush1.bf16.msra.mxu0 %v1328
    %2622 = vmatprep.subr.bf16.mxu0 %v1333
    %2623 = vmatpush1.bf16.msra.mxu0 %v1332
    %2624 = vmatprep.subr.bf16.mxu0 %v1337
    %2625 = vmatpush1.bf16.msra.mxu0 %v1336
    %2626 = vmatprep.subr.bf16.mxu0 %v1341
    %2627 = vmatpush1.bf16.msra.mxu0 %v1340
    %2628 = vmatprep.subr.bf16.mxu0 %v1345
    %2629 = vmatpush1.bf16.msra.mxu0 %v1344
    %2630 = vmatprep.subr.bf16.mxu0 0
    %2631 = vmatpush1.bf16.msra.mxu0 0
    %2632 = vmatprep.subr.bf16.mxu0 0
    %2633 = vmatpush1.bf16.msra.mxu0 0
    %2634 = vmatprep.subr.bf16.mxu0 0
    %2635 = vmatpush1.bf16.msra.mxu0 0
    %2636 = vmatprep.subr.bf16.mxu0 0
    %2637 = vmatpush1.bf16.msra.mxu0 0
    %2638 = vmatprep.subr.bf16.mxu0 0
    %2639 = vmatpush1.bf16.msra.mxu0 0
    %2640 = vmatprep.subr.bf16.mxu0 0
    %2641 = vmatpush1.bf16.msra.mxu0 0
    %2642 = vmatprep.subr.bf16.mxu0 0
    %2643 = vmatpush1.bf16.msra.mxu0 0
    %2644 = vmatprep.subr.bf16.mxu0 0
    %2645 = vmatpush1.bf16.msra.mxu0 0
    %2646 = vmatprep.mubr.bf16.mxu0 0
    %2647 = vmatmul.mubr.bf16.gmra.mrb[0].mxu0 %v2572
    %v2648 = vpop.f32.mrb[0].mxu0
    %v2649 = vadd.f32 0.0, %v2648
    %v2650 = vpop.f32.mrb[0].mxu0
    %v2651 = vadd.f32 0.0, %v2650
    %v2652 = vpop.f32.mrb[0].mxu0
    %v2653 = vpop.f32.mrb[0].mxu0
    %2654 = vdwg.mxu0
    %v2655 = vadd.f32 %v2568, %v2608
    %v2656 = vadd.f32 %v2569, %v2610
    %v2657 = vadd.f32 %v2570, %v2649
    %v2658 = vadd.f32 %v2571, %v2651
    %v2659 = vxor.u32 %v2562, 2147483648
    %v2660 = vxor.u32 %v2563, 2147483648
    %v2661 = vxor.u32 %v2564, 2147483648
    %v2662 = vmul.f32 %v2659, 1.442695
    %v2663 = vpow.pop %v2662
    %v2664 = vmul.f32 %v2660, 1.442695
    %v2665 = vpow.pop %v2664
    %v2666 = vmul.f32 %v2661, 1.442695
    %v2667 = vpow.pop %v2666
    %v2668 = vadd.f32 %v2663, 1.0
    %v2669 = vadd.f32 %v2665, 1.0
    %v2670 = vadd.f32 %v2667, 1.0
    %v2671 = vrcp.pop %v2668
    %v2672 = vmul.f32 1.0, %v2671
    %v2673 = vrcp.pop %v2669
    %v2674 = vmul.f32 1.0, %v2673
    %v2675 = vrcp.pop %v2670
    %v2676 = vmul.f32 1.0, %v2675
    %v2677 = vtanh.pop %v2565
    %v2678 = vmul.f32 %v2674, %v2442
    %v2679 = vmul.f32 %v2672, %v2677
    %v2680 = vadd.f32 %v2678, %v2679
    %v2681 = vtanh.pop %v2680
    %v2682 = vmul.f32 %v2676, %v2681
    %v2683 = vxor.u32 %v2655, 2147483648
    %v2684 = vxor.u32 %v2656, 2147483648
    %v2685 = vxor.u32 %v2657, 2147483648
    %v2686 = vmul.f32 %v2683, 1.442695
    %v2687 = vpow.pop %v2686
    %v2688 = vmul.f32 %v2684, 1.442695
    %v2689 = vpow.pop %v2688
    %v2690 = vmul.f32 %v2685, 1.442695
    %v2691 = vpow.pop %v2690
    %v2692 = vadd.f32 %v2687, 1.0
    %v2693 = vadd.f32 %v2689, 1.0
    %v2694 = vadd.f32 %v2691, 1.0
    %v2695 = vrcp.pop %v2692
    %v2696 = vmul.f32 1.0, %v2695
    %v2697 = vrcp.pop %v2693
    %v2698 = vmul.f32 1.0, %v2697
    %v2699 = vrcp.pop %v2694
    %v2700 = vmul.f32 1.0, %v2699
    %v2701 = vtanh.pop %v2658
    %v2702 = vmul.f32 %v2698, %v2466
    %v2703 = vmul.f32 %v2696, %v2701
    %v2704 = vadd.f32 %v2702, %v2703
    %v2705 = vtanh.pop %v2704
    %v2706 = vmul.f32 %v2700, %v2705
    %s2707 = scalar_lea.vmem [#allocation12], 40
    %2708 = vst [vmem:[%s2707] sm:$0xff] %v2682
    %s2709 = scalar_lea.vmem [#allocation13], 16
    %2710 = vst [vmem:[%s2709] sm:$0xff] %v2706
    %s2711 = smul.addr %s1609, 8
    %s2712 = scalar_lea.vmem [#allocation2], %s2711
    %v2713 = vld [vmem:[%s2712] sm:$0xff]
    %v2714 = vld [vmem:[%s2712 + $0x8] sm:$0xff]
    %v2715 = vld [vmem:[%s2712 + $0x10] sm:$0xff]
    %v2716 = vld [vmem:[%s2712 + $0x18] sm:$0xff]
    %v2717 = vpack.c.bf16 %v2682, %v2682
    %2718 = vmatprep.subr.bf16.mxu0 %v1062
    %2719 = vmatpush1.bf16.msra.mxu0 %v1061
    %2720 = vmatprep.subr.bf16.mxu0 %v1066
    %2721 = vmatpush1.bf16.msra.mxu0 %v1065
    %2722 = vmatprep.subr.bf16.mxu0 %v1070
    %2723 = vmatpush1.bf16.msra.mxu0 %v1069
    %2724 = vmatprep.subr.bf16.mxu0 %v1074
    %2725 = vmatpush1.bf16.msra.mxu0 %v1073
    %2726 = vmatprep.subr.bf16.mxu0 %v1078
    %2727 = vmatpush1.bf16.msra.mxu0 %v1077
    %2728 = vmatprep.subr.bf16.mxu0 %v1082
    %2729 = vmatpush1.bf16.msra.mxu0 %v1081
    %2730 = vmatprep.subr.bf16.mxu0 %v1086
    %2731 = vmatpush1.bf16.msra.mxu0 %v1085
    %2732 = vmatprep.subr.bf16.mxu0 %v1090
    %2733 = vmatpush1.bf16.msra.mxu0 %v1089
    %2734 = vmatprep.subr.bf16.mxu0 0
    %2735 = vmatpush1.bf16.msra.mxu0 0
    %2736 = vmatprep.subr.bf16.mxu0 0
    %2737 = vmatpush1.bf16.msra.mxu0 0
    %2738 = vmatprep.subr.bf16.mxu0 0
    %2739 = vmatpush1.bf16.msra.mxu0 0
    %2740 = vmatprep.subr.bf16.mxu0 0
    %2741 = vmatpush1.bf16.msra.mxu0 0
    %2742 = vmatprep.subr.bf16.mxu0 0
    %2743 = vmatpush1.bf16.msra.mxu0 0
    %2744 = vmatprep.subr.bf16.mxu0 0
    %2745 = vmatpush1.bf16.msra.mxu0 0
    %2746 = vmatprep.subr.bf16.mxu0 0
    %2747 = vmatpush1.bf16.msra.mxu0 0
    %2748 = vmatprep.subr.bf16.mxu0 0
    %2749 = vmatpush1.bf16.msra.mxu0 0
    %2750 = vmatprep.mubr.bf16.mxu0 0
    %2751 = vmatmul.mubr.bf16.gmra.mrb[0].mxu0 %v2717
    %v2752 = vpop.f32.mrb[0].mxu0
    %v2753 = vadd.f32 0.0, %v2752
    %v2754 = vpop.f32.mrb[0].mxu0
    %v2755 = vadd.f32 0.0, %v2754
    %v2756 = vpop.f32.mrb[0].mxu0
    %v2757 = vpop.f32.mrb[0].mxu0
    %2758 = vdwg.mxu0
    %2759 = vmatprep.subr.bf16.mxu0 %v1064
    %2760 = vmatpush1.bf16.msra.mxu0 %v1063
    %2761 = vmatprep.subr.bf16.mxu0 %v1068
    %2762 = vmatpush1.bf16.msra.mxu0 %v1067
    %2763 = vmatprep.subr.bf16.mxu0 %v1072
    %2764 = vmatpush1.bf16.msra.mxu0 %v1071
    %2765 = vmatprep.subr.bf16.mxu0 %v1076
    %2766 = vmatpush1.bf16.msra.mxu0 %v1075
    %2767 = vmatprep.subr.bf16.mxu0 %v1080
    %2768 = vmatpush1.bf16.msra.mxu0 %v1079
    %2769 = vmatprep.subr.bf16.mxu0 %v1084
    %2770 = vmatpush1.bf16.msra.mxu0 %v1083
    %2771 = vmatprep.subr.bf16.mxu0 %v1088
    %2772 = vmatpush1.bf16.msra.mxu0 %v1087
    %2773 = vmatprep.subr.bf16.mxu0 %v1092
    %2774 = vmatpush1.bf16.msra.mxu0 %v1091
    %2775 = vmatprep.subr.bf16.mxu0 0
    %2776 = vmatpush1.bf16.msra.mxu0 0
    %2777 = vmatprep.subr.bf16.mxu0 0
    %2778 = vmatpush1.bf16.msra.mxu0 0
    %2779 = vmatprep.subr.bf16.mxu0 0
    %2780 = vmatpush1.bf16.msra.mxu0 0
    %2781 = vmatprep.subr.bf16.mxu0 0
    %2782 = vmatpush1.bf16.msra.mxu0 0
    %2783 = vmatprep.subr.bf16.mxu0 0
    %2784 = vmatpush1.bf16.msra.mxu0 0
    %2785 = vmatprep.subr.bf16.mxu0 0
    %2786 = vmatpush1.bf16.msra.mxu0 0
    %2787 = vmatprep.subr.bf16.mxu0 0
    %2788 = vmatpush1.bf16.msra.mxu0 0
    %2789 = vmatprep.subr.bf16.mxu0 0
    %2790 = vmatpush1.bf16.msra.mxu0 0
    %2791 = vmatprep.mubr.bf16.mxu0 0
    %2792 = vmatmul.mubr.bf16.gmra.mrb[0].mxu0 %v2717
    %v2793 = vpop.f32.mrb[0].mxu0
    %v2794 = vadd.f32 0.0, %v2793
    %v2795 = vpop.f32.mrb[0].mxu0
    %v2796 = vadd.f32 0.0, %v2795
    %v2797 = vpop.f32.mrb[0].mxu0
    %v2798 = vpop.f32.mrb[0].mxu0
    %2799 = vdwg.mxu0
    %v2800 = vadd.f32 %v2713, %v2753
    %v2801 = vadd.f32 %v2714, %v2755
    %v2802 = vadd.f32 %v2715, %v2794
    %v2803 = vadd.f32 %v2716, %v2796
    %s2804 = smul.addr %s1515, 8
    %s2805 = scalar_lea.vmem [#allocation3], %s2804
    %v2806 = vld [vmem:[%s2805] sm:$0xff]
    %v2807 = vld [vmem:[%s2805 + $0x8] sm:$0xff]
    %v2808 = vld [vmem:[%s2805 + $0x10] sm:$0xff]
    %v2809 = vld [vmem:[%s2805 + $0x18] sm:$0xff]
    %v2810 = vpack.c.bf16 %v2706, %v2706
    %2811 = vmatprep.subr.bf16.mxu0 %v1315
    %2812 = vmatpush1.bf16.msra.mxu0 %v1314
    %2813 = vmatprep.subr.bf16.mxu0 %v1319
    %2814 = vmatpush1.bf16.msra.mxu0 %v1318
    %2815 = vmatprep.subr.bf16.mxu0 %v1323
    %2816 = vmatpush1.bf16.msra.mxu0 %v1322
    %2817 = vmatprep.subr.bf16.mxu0 %v1327
    %2818 = vmatpush1.bf16.msra.mxu0 %v1326
    %2819 = vmatprep.subr.bf16.mxu0 %v1331
    %2820 = vmatpush1.bf16.msra.mxu0 %v1330
    %2821 = vmatprep.subr.bf16.mxu0 %v1335
    %2822 = vmatpush1.bf16.msra.mxu0 %v1334
    %2823 = vmatprep.subr.bf16.mxu0 %v1339
    %2824 = vmatpush1.bf16.msra.mxu0 %v1338
    %2825 = vmatprep.subr.bf16.mxu0 %v1343
    %2826 = vmatpush1.bf16.msra.mxu0 %v1342
    %2827 = vmatprep.subr.bf16.mxu0 0
    %2828 = vmatpush1.bf16.msra.mxu0 0
    %2829 = vmatprep.subr.bf16.mxu0 0
    %2830 = vmatpush1.bf16.msra.mxu0 0
    %2831 = vmatprep.subr.bf16.mxu0 0
    %2832 = vmatpush1.bf16.msra.mxu0 0
    %2833 = vmatprep.subr.bf16.mxu0 0
    %2834 = vmatpush1.bf16.msra.mxu0 0
    %2835 = vmatprep.subr.bf16.mxu0 0
    %2836 = vmatpush1.bf16.msra.mxu0 0
    %2837 = vmatprep.subr.bf16.mxu0 0
    %2838 = vmatpush1.bf16.msra.mxu0 0
    %2839 = vmatprep.subr.bf16.mxu0 0
    %2840 = vmatpush1.bf16.msra.mxu0 0
    %2841 = vmatprep.subr.bf16.mxu0 0
    %2842 = vmatpush1.bf16.msra.mxu0 0
    %2843 = vmatprep.mubr.bf16.mxu0 0
    %2844 = vmatmul.mubr.bf16.gmra.mrb[0].mxu0 %v2810
    %v2845 = vpop.f32.mrb[0].mxu0
    %v2846 = vadd.f32 0.0, %v2845
    %v2847 = vpop.f32.mrb[0].mxu0
    %v2848 = vadd.f32 0.0, %v2847
    %v2849 = vpop.f32.mrb[0].mxu0
    %v2850 = vpop.f32.mrb[0].mxu0
    %2851 = vdwg.mxu0
    %2852 = vmatprep.subr.bf16.mxu0 %v1317
    %2853 = vmatpush1.bf16.msra.mxu0 %v1316
    %2854 = vmatprep.subr.bf16.mxu0 %v1321
    %2855 = vmatpush1.bf16.msra.mxu0 %v1320
    %2856 = vmatprep.subr.bf16.mxu0 %v1325
    %2857 = vmatpush1.bf16.msra.mxu0 %v1324
    %2858 = vmatprep.subr.bf16.mxu0 %v1329
    %2859 = vmatpush1.bf16.msra.mxu0 %v1328
    %2860 = vmatprep.subr.bf16.mxu0 %v1333
    %2861 = vmatpush1.bf16.msra.mxu0 %v1332
    %2862 = vmatprep.subr.bf16.mxu0 %v1337
    %2863 = vmatpush1.bf16.msra.mxu0 %v1336
    %2864 = vmatprep.subr.bf16.mxu0 %v1341
    %2865 = vmatpush1.bf16.msra.mxu0 %v1340
    %2866 = vmatprep.subr.bf16.mxu0 %v1345
    %2867 = vmatpush1.bf16.msra.mxu0 %v1344
    %2868 = vmatprep.subr.bf16.mxu0 0
    %2869 = vmatpush1.bf16.msra.mxu0 0
    %2870 = vmatprep.subr.bf16.mxu0 0
    %2871 = vmatpush1.bf16.msra.mxu0 0
    %2872 = vmatprep.subr.bf16.mxu0 0
    %2873 = vmatpush1.bf16.msra.mxu0 0
    %2874 = vmatprep.subr.bf16.mxu0 0
    %2875 = vmatpush1.bf16.msra.mxu0 0
    %2876 = vmatprep.subr.bf16.mxu0 0
    %2877 = vmatpush1.bf16.msra.mxu0 0
    %2878 = vmatprep.subr.bf16.mxu0 0
    %2879 = vmatpush1.bf16.msra.mxu0 0
    %2880 = vmatprep.subr.bf16.mxu0 0
    %2881 = vmatpush1.bf16.msra.mxu0 0
    %2882 = vmatprep.subr.bf16.mxu0 0
    %2883 = vmatpush1.bf16.msra.mxu0 0
    %2884 = vmatprep.mubr.bf16.mxu0 0
    %2885 = vmatmul.mubr.bf16.gmra.mrb[0].mxu0 %v2810
    %v2886 = vpop.f32.mrb[0].mxu0
    %v2887 = vadd.f32 0.0, %v2886
    %v2888 = vpop.f32.mrb[0].mxu0
    %v2889 = vadd.f32 0.0, %v2888
    %v2890 = vpop.f32.mrb[0].mxu0
    %v2891 = vpop.f32.mrb[0].mxu0
    %2892 = vdwg.mxu0
    %v2893 = vadd.f32 %v2806, %v2846
    %v2894 = vadd.f32 %v2807, %v2848
    %v2895 = vadd.f32 %v2808, %v2887
    %v2896 = vadd.f32 %v2809, %v2889
    %v2897 = vxor.u32 %v2800, 2147483648
    %v2898 = vxor.u32 %v2801, 2147483648
    %v2899 = vxor.u32 %v2802, 2147483648
    %v2900 = vmul.f32 %v2897, 1.442695
    %v2901 = vpow.pop %v2900
    %v2902 = vmul.f32 %v2898, 1.442695
    %v2903 = vpow.pop %v2902
    %v2904 = vmul.f32 %v2899, 1.442695
    %v2905 = vpow.pop %v2904
    %v2906 = vadd.f32 %v2901, 1.0
    %v2907 = vadd.f32 %v2903, 1.0
    %v2908 = vadd.f32 %v2905, 1.0
    %v2909 = vrcp.pop %v2906
    %v2910 = vmul.f32 1.0, %v2909
    %v2911 = vrcp.pop %v2907
    %v2912 = vmul.f32 1.0, %v2911
    %v2913 = vrcp.pop %v2908
    %v2914 = vmul.f32 1.0, %v2913
    %v2915 = vtanh.pop %v2803
    %v2916 = vmul.f32 %v2912, %v2680
    %v2917 = vmul.f32 %v2910, %v2915
    %v2918 = vadd.f32 %v2916, %v2917
    %v2919 = vtanh.pop %v2918
    %v2920 = vmul.f32 %v2914, %v2919
    %v2921 = vxor.u32 %v2893, 2147483648
    %v2922 = vxor.u32 %v2894, 2147483648
    %v2923 = vxor.u32 %v2895, 2147483648
    %v2924 = vmul.f32 %v2921, 1.442695
    %v2925 = vpow.pop %v2924
    %v2926 = vmul.f32 %v2922, 1.442695
    %v2927 = vpow.pop %v2926
    %v2928 = vmul.f32 %v2923, 1.442695
    %v2929 = vpow.pop %v2928
    %v2930 = vadd.f32 %v2925, 1.0
    %v2931 = vadd.f32 %v2927, 1.0
    %v2932 = vadd.f32 %v2929, 1.0
    %v2933 = vrcp.pop %v2930
    %v2934 = vmul.f32 1.0, %v2933
    %v2935 = vrcp.pop %v2931
    %v2936 = vmul.f32 1.0, %v2935
    %v2937 = vrcp.pop %v2932
    %v2938 = vmul.f32 1.0, %v2937
    %v2939 = vtanh.pop %v2896
    %v2940 = vmul.f32 %v2936, %v2704
    %v2941 = vmul.f32 %v2934, %v2939
    %v2942 = vadd.f32 %v2940, %v2941
    %v2943 = vtanh.pop %v2942
    %v2944 = vmul.f32 %v2938, %v2943
    %s2945 = scalar_lea.vmem [#allocation12], 48
    %2946 = vst [vmem:[%s2945] sm:$0xff] %v2920
    %s2947 = scalar_lea.vmem [#allocation13], 8
    %2948 = vst [vmem:[%s2947] sm:$0xff] %v2944
    %s2949 = smul.addr %s1211, 8
    %s2950 = scalar_lea.vmem [#allocation2], %s2949
    %v2951 = vld [vmem:[%s2950] sm:$0xff]
    %v2952 = vld [vmem:[%s2950 + $0x8] sm:$0xff]
    %v2953 = vld [vmem:[%s2950 + $0x10] sm:$0xff]
    %v2954 = vld [vmem:[%s2950 + $0x18] sm:$0xff]
    %v2955 = vpack.c.bf16 %v2920, %v2920
    %2956 = vmatprep.subr.bf16.mxu0 %v1062
    %2957 = vmatpush1.bf16.msra.mxu0 %v1061
    %2958 = vmatprep.subr.bf16.mxu0 %v1066
    %2959 = vmatpush1.bf16.msra.mxu0 %v1065
    %2960 = vmatprep.subr.bf16.mxu0 %v1070
    %2961 = vmatpush1.bf16.msra.mxu0 %v1069
    %2962 = vmatprep.subr.bf16.mxu0 %v1074
    %2963 = vmatpush1.bf16.msra.mxu0 %v1073
    %2964 = vmatprep.subr.bf16.mxu0 %v1078
    %2965 = vmatpush1.bf16.msra.mxu0 %v1077
    %2966 = vmatprep.subr.bf16.mxu0 %v1082
    %2967 = vmatpush1.bf16.msra.mxu0 %v1081
    %2968 = vmatprep.subr.bf16.mxu0 %v1086
    %2969 = vmatpush1.bf16.msra.mxu0 %v1085
    %2970 = vmatprep.subr.bf16.mxu0 %v1090
    %2971 = vmatpush1.bf16.msra.mxu0 %v1089
    %2972 = vmatprep.subr.bf16.mxu0 0
    %2973 = vmatpush1.bf16.msra.mxu0 0
    %2974 = vmatprep.subr.bf16.mxu0 0
    %2975 = vmatpush1.bf16.msra.mxu0 0
    %2976 = vmatprep.subr.bf16.mxu0 0
    %2977 = vmatpush1.bf16.msra.mxu0 0
    %2978 = vmatprep.subr.bf16.mxu0 0
    %2979 = vmatpush1.bf16.msra.mxu0 0
    %2980 = vmatprep.subr.bf16.mxu0 0
    %2981 = vmatpush1.bf16.msra.mxu0 0
    %2982 = vmatprep.subr.bf16.mxu0 0
    %2983 = vmatpush1.bf16.msra.mxu0 0
    %2984 = vmatprep.subr.bf16.mxu0 0
    %2985 = vmatpush1.bf16.msra.mxu0 0
    %2986 = vmatprep.subr.bf16.mxu0 0
    %2987 = vmatpush1.bf16.msra.mxu0 0
    %2988 = vmatprep.mubr.bf16.mxu0 0
    %2989 = vmatmul.mubr.bf16.gmra.mrb[0].mxu0 %v2955
    %v2990 = vpop.f32.mrb[0].mxu0
    %v2991 = vadd.f32 0.0, %v2990
    %v2992 = vpop.f32.mrb[0].mxu0
    %v2993 = vadd.f32 0.0, %v2992
    %v2994 = vpop.f32.mrb[0].mxu0
    %v2995 = vpop.f32.mrb[0].mxu0
    %2996 = vdwg.mxu0
    %2997 = vmatprep.subr.bf16.mxu0 %v1064
    %2998 = vmatpush1.bf16.msra.mxu0 %v1063
    %2999 = vmatprep.subr.bf16.mxu0 %v1068
    %3000 = vmatpush1.bf16.msra.mxu0 %v1067
    %3001 = vmatprep.subr.bf16.mxu0 %v1072
    %3002 = vmatpush1.bf16.msra.mxu0 %v1071
    %3003 = vmatprep.subr.bf16.mxu0 %v1076
    %3004 = vmatpush1.bf16.msra.mxu0 %v1075
    %3005 = vmatprep.subr.bf16.mxu0 %v1080
    %3006 = vmatpush1.bf16.msra.mxu0 %v1079
    %3007 = vmatprep.subr.bf16.mxu0 %v1084
    %3008 = vmatpush1.bf16.msra.mxu0 %v1083
    %3009 = vmatprep.subr.bf16.mxu0 %v1088
    %3010 = vmatpush1.bf16.msra.mxu0 %v1087
    %3011 = vmatprep.subr.bf16.mxu0 %v1092
    %3012 = vmatpush1.bf16.msra.mxu0 %v1091
    %3013 = vmatprep.subr.bf16.mxu0 0
    %3014 = vmatpush1.bf16.msra.mxu0 0
    %3015 = vmatprep.subr.bf16.mxu0 0
    %3016 = vmatpush1.bf16.msra.mxu0 0
    %3017 = vmatprep.subr.bf16.mxu0 0
    %3018 = vmatpush1.bf16.msra.mxu0 0
    %3019 = vmatprep.subr.bf16.mxu0 0
    %3020 = vmatpush1.bf16.msra.mxu0 0
    %3021 = vmatprep.subr.bf16.mxu0 0
    %3022 = vmatpush1.bf16.msra.mxu0 0
    %3023 = vmatprep.subr.bf16.mxu0 0
    %3024 = vmatpush1.bf16.msra.mxu0 0
    %3025 = vmatprep.subr.bf16.mxu0 0
    %3026 = vmatpush1.bf16.msra.mxu0 0
    %3027 = vmatprep.subr.bf16.mxu0 0
    %3028 = vmatpush1.bf16.msra.mxu0 0
    %3029 = vmatprep.mubr.bf16.mxu0 0
    %3030 = vmatmul.mubr.bf16.gmra.mrb[0].mxu0 %v2955
    %v3031 = vpop.f32.mrb[0].mxu0
    %v3032 = vadd.f32 0.0, %v3031
    %v3033 = vpop.f32.mrb[0].mxu0
    %v3034 = vadd.f32 0.0, %v3033
    %v3035 = vpop.f32.mrb[0].mxu0
    %v3036 = vpop.f32.mrb[0].mxu0
    %3037 = vdwg.mxu0
    %v3038 = vadd.f32 %v2951, %v2991
    %v3039 = vadd.f32 %v2952, %v2993
    %v3040 = vadd.f32 %v2953, %v3032
    %v3041 = vadd.f32 %v2954, %v3034
    %s3042 = smul.addr %s958, 8
    %s3043 = scalar_lea.vmem [#allocation3], %s3042
    %v3044 = vld [vmem:[%s3043] sm:$0xff]
    %v3045 = vld [vmem:[%s3043 + $0x8] sm:$0xff]
    %v3046 = vld [vmem:[%s3043 + $0x10] sm:$0xff]
    %v3047 = vld [vmem:[%s3043 + $0x18] sm:$0xff]
    %v3048 = vpack.c.bf16 %v2944, %v2944
    %3049 = vmatprep.subr.bf16.mxu0 %v1315
    %3050 = vmatpush1.bf16.msra.mxu0 %v1314
    %3051 = vmatprep.subr.bf16.mxu0 %v1319
    %3052 = vmatpush1.bf16.msra.mxu0 %v1318
    %3053 = vmatprep.subr.bf16.mxu0 %v1323
    %3054 = vmatpush1.bf16.msra.mxu0 %v1322
    %3055 = vmatprep.subr.bf16.mxu0 %v1327
    %3056 = vmatpush1.bf16.msra.mxu0 %v1326
    %3057 = vmatprep.subr.bf16.mxu0 %v1331
    %3058 = vmatpush1.bf16.msra.mxu0 %v1330
    %3059 = vmatprep.subr.bf16.mxu0 %v1335
    %3060 = vmatpush1.bf16.msra.mxu0 %v1334
    %3061 = vmatprep.subr.bf16.mxu0 %v1339
    %3062 = vmatpush1.bf16.msra.mxu0 %v1338
    %3063 = vmatprep.subr.bf16.mxu0 %v1343
    %3064 = vmatpush1.bf16.msra.mxu0 %v1342
    %3065 = vmatprep.subr.bf16.mxu0 0
    %3066 = vmatpush1.bf16.msra.mxu0 0
    %3067 = vmatprep.subr.bf16.mxu0 0
    %3068 = vmatpush1.bf16.msra.mxu0 0
    %3069 = vmatprep.subr.bf16.mxu0 0
    %3070 = vmatpush1.bf16.msra.mxu0 0
    %3071 = vmatprep.subr.bf16.mxu0 0
    %3072 = vmatpush1.bf16.msra.mxu0 0
    %3073 = vmatprep.subr.bf16.mxu0 0
    %3074 = vmatpush1.bf16.msra.mxu0 0
    %3075 = vmatprep.subr.bf16.mxu0 0
    %3076 = vmatpush1.bf16.msra.mxu0 0
    %3077 = vmatprep.subr.bf16.mxu0 0
    %3078 = vmatpush1.bf16.msra.mxu0 0
    %3079 = vmatprep.subr.bf16.mxu0 0
    %3080 = vmatpush1.bf16.msra.mxu0 0
    %3081 = vmatprep.mubr.bf16.mxu0 0
    %3082 = vmatmul.mubr.bf16.gmra.mrb[0].mxu0 %v3048
    %v3083 = vpop.f32.mrb[0].mxu0
    %v3084 = vadd.f32 0.0, %v3083
    %v3085 = vpop.f32.mrb[0].mxu0
    %v3086 = vadd.f32 0.0, %v3085
    %v3087 = vpop.f32.mrb[0].mxu0
    %v3088 = vpop.f32.mrb[0].mxu0
    %3089 = vdwg.mxu0
    %3090 = vmatprep.subr.bf16.mxu0 %v1317
    %3091 = vmatpush1.bf16.msra.mxu0 %v1316
    %3092 = vmatprep.subr.bf16.mxu0 %v1321
    %3093 = vmatpush1.bf16.msra.mxu0 %v1320
    %3094 = vmatprep.subr.bf16.mxu0 %v1325
    %3095 = vmatpush1.bf16.msra.mxu0 %v1324
    %3096 = vmatprep.subr.bf16.mxu0 %v1329
    %3097 = vmatpush1.bf16.msra.mxu0 %v1328
    %3098 = vmatprep.subr.bf16.mxu0 %v1333
    %3099 = vmatpush1.bf16.msra.mxu0 %v1332
    %3100 = vmatprep.subr.bf16.mxu0 %v1337
    %3101 = vmatpush1.bf16.msra.mxu0 %v1336
    %3102 = vmatprep.subr.bf16.mxu0 %v1341
    %3103 = vmatpush1.bf16.msra.mxu0 %v1340
    %3104 = vmatprep.subr.bf16.mxu0 %v1345
    %3105 = vmatpush1.bf16.msra.mxu0 %v1344
    %3106 = vmatprep.subr.bf16.mxu0 0
    %3107 = vmatpush1.bf16.msra.mxu0 0
    %3108 = vmatprep.subr.bf16.mxu0 0
    %3109 = vmatpush1.bf16.msra.mxu0 0
    %3110 = vmatprep.subr.bf16.mxu0 0
    %3111 = vmatpush1.bf16.msra.mxu0 0
    %3112 = vmatprep.subr.bf16.mxu0 0
    %3113 = vmatpush1.bf16.msra.mxu0 0
    %3114 = vmatprep.subr.bf16.mxu0 0
    %3115 = vmatpush1.bf16.msra.mxu0 0
    %3116 = vmatprep.subr.bf16.mxu0 0
    %3117 = vmatpush1.bf16.msra.mxu0 0
    %3118 = vmatprep.subr.bf16.mxu0 0
    %3119 = vmatpush1.bf16.msra.mxu0 0
    %3120 = vmatprep.subr.bf16.mxu0 0
    %3121 = vmatpush1.bf16.msra.mxu0 0
    %3122 = vmatprep.mubr.bf16.mxu0 0
    %3123 = vmatmul.mubr.bf16.gmra.mrb[0].mxu0 %v3048
    %v3124 = vpop.f32.mrb[0].mxu0
    %v3125 = vadd.f32 0.0, %v3124
    %v3126 = vpop.f32.mrb[0].mxu0
    %v3127 = vadd.f32 0.0, %v3126
    %v3128 = vpop.f32.mrb[0].mxu0
    %v3129 = vpop.f32.mrb[0].mxu0
    %3130 = vdwg.mxu0
    %v3131 = vadd.f32 %v3044, %v3084
    %v3132 = vadd.f32 %v3045, %v3086
    %v3133 = vadd.f32 %v3046, %v3125
    %v3134 = vadd.f32 %v3047, %v3127
    %v3135 = vxor.u32 %v3038, 2147483648
    %v3136 = vxor.u32 %v3039, 2147483648
    %v3137 = vxor.u32 %v3040, 2147483648
    %v3138 = vmul.f32 %v3135, 1.442695
    %v3139 = vpow.pop %v3138
    %v3140 = vmul.f32 %v3136, 1.442695
    %v3141 = vpow.pop %v3140
    %v3142 = vmul.f32 %v3137, 1.442695
    %v3143 = vpow.pop %v3142
    %v3144 = vadd.f32 %v3139, 1.0
    %v3145 = vadd.f32 %v3141, 1.0
    %v3146 = vadd.f32 %v3143, 1.0
    %v3147 = vrcp.pop %v3144
    %v3148 = vmul.f32 1.0, %v3147
    %v3149 = vrcp.pop %v3145
    %v3150 = vmul.f32 1.0, %v3149
    %v3151 = vrcp.pop %v3146
    %v3152 = vmul.f32 1.0, %v3151
    %v3153 = vtanh.pop %v3041
    %v3154 = vmul.f32 %v3150, %v2918
    %v3155 = vmul.f32 %v3148, %v3153
    %v3156 = vadd.f32 %v3154, %v3155
    %v3157 = vtanh.pop %v3156
    %v3158 = vmul.f32 %v3152, %v3157
    %v3159 = vxor.u32 %v3131, 2147483648
    %v3160 = vxor.u32 %v3132, 2147483648
    %v3161 = vxor.u32 %v3133, 2147483648
    %v3162 = vmul.f32 %v3159, 1.442695
    %v3163 = vpow.pop %v3162
    %v3164 = vmul.f32 %v3160, 1.442695
    %v3165 = vpow.pop %v3164
    %v3166 = vmul.f32 %v3161, 1.442695
    %v3167 = vpow.pop %v3166
    %v3168 = vadd.f32 %v3163, 1.0
    %v3169 = vadd.f32 %v3165, 1.0
    %v3170 = vadd.f32 %v3167, 1.0
    %v3171 = vrcp.pop %v3168
    %v3172 = vmul.f32 1.0, %v3171
    %v3173 = vrcp.pop %v3169
    %v3174 = vmul.f32 1.0, %v3173
    %v3175 = vrcp.pop %v3170
    %v3176 = vmul.f32 1.0, %v3175
    %v3177 = vtanh.pop %v3134
    %v3178 = vmul.f32 %v3174, %v2942
    %v3179 = vmul.f32 %v3172, %v3177
    %v3180 = vadd.f32 %v3178, %v3179
    %v3181 = vtanh.pop %v3180
    %v3182 = vmul.f32 %v3176, %v3181
    %s3183 = scalar_lea.vmem [#allocation12], 56
    %3184 = vst [vmem:[%s3183] sm:$0xff] %v3158
    %3185 = vst [vmem:[#allocation13] sm:$0xff] %v3182
    // Predicated region
    $region38: #{tpu_custom_call.1} parent=1 // pred_check
      _
    $region39: #{tpu_custom_call.1} parent=1 // pred_check_branch
      %3187 = sbr.rel (0) target = $region41
    $region40: #{tpu_custom_call.1} parent=1 // pred_region
      %s3189 = ssub.s32 1024, 1024
      %3190 = vsyncadd [#allocation6], %s3189
      %s3191 = sshll.u32 [#allocation12], 4
      %s3192 = int_to_ptr.vmem [resolvable:$true] %s3191
      %3197 = dma.vmem_to_hbm [thread:$0]  %s3192, 1024, %s5, [#allocation6], 128, 128, 8
    $region41: #{tpu_custom_call.1} parent=1 // pred_fallthru
      _
    // Predicated region
    $region42: #{tpu_custom_call.1} parent=1 // pred_check
      _
    $region43: #{tpu_custom_call.1} parent=1 // pred_check_branch
      %3199 = sbr.rel (0) target = $region45
    $region44: #{tpu_custom_call.1} parent=1 // pred_region
      %s3201 = ssub.s32 1024, 1024
      %3202 = vsyncadd [#allocation14], %s3201
      %s3203 = sshll.u32 [#allocation13], 4
      %s3204 = int_to_ptr.vmem [resolvable:$true] %s3203
      %3209 = dma.vmem_to_hbm [thread:$0]  %s3204, 1024, %s6, [#allocation14], 128, 128, 8
    $region45: #{tpu_custom_call.1} parent=1 // pred_fallthru
      _
    // Predicated region
    $region46: #{tpu_custom_call.1} parent=1 // pred_check
      _
    $region47: #{tpu_custom_call.1} parent=1 // pred_check_branch
      %3211 = sbr.rel (0) target = $region49
    $region48: #{tpu_custom_call.1} parent=1 // pred_region
      %3212 = dma.done [#allocation6], 1024
    $region49: #{tpu_custom_call.1} parent=1 // pred_fallthru
      _
    // Predicated region
    $region50: #{tpu_custom_call.1} parent=1 // pred_check
      _
    $region51: #{tpu_custom_call.1} parent=1 // pred_check_branch
      %3214 = sbr.rel (0) target = $region53
    $region52: #{tpu_custom_call.1} parent=1 // pred_region
      %3215 = dma.done [#allocation14], 1024
    $region53: #{tpu_custom_call.1} parent=1 // pred_fallthru
      _
    %3216 = vsyncpa [#allocation5], 1
    %3217 = vsyncpa [#allocation8], 1
    %3218 = vsyncpa [#allocation11], 1
    %3219 = vsyncpa [#allocation6], 1
    %3220 = vsyncpa [#allocation14], 1

</llo_original>
